<compile_context>
chip_gen: v7x
topology: tpu7x:2x2x1
jax: 0.10.0
libtpu: 0.0.40
codegen_flags: <defaults>
</compile_context>

<pallas_src>
import functools
import math

import jax
import jax.numpy as jnp
from jax import lax
from jax.experimental import pallas as pl
from jax.experimental.pallas import tpu as pltpu

EPS = 1e-5
COMPUTE_DTYPE = jnp.bfloat16            # MXU input / xu / y1 storage dtype (f32 accumulation)
VMEM_LIMIT_BYTES = 48 * 1024 * 1024     # above 16/32 MiB scoped defaults, below v7x 64 MiB physical


# ---------------------------------------------------------------------------
# Small helpers (wrapper side)
# ---------------------------------------------------------------------------
def _round_up(v, m):
    return (v + m - 1) // m * m


def _pad_dim(a, axis, multiple):
    pad = (-a.shape[axis]) % multiple
    if pad == 0:
        return a
    widths = [(0, 0)] * a.ndim
    widths[axis] = (0, pad)
    return jnp.pad(a, widths)


def _border_masks(Ho, Wo):
    """(4, 1, S) 0/1 planes: [dy=-1 valid, dy=+1 valid, dx=-1 valid, dx=+1 valid]."""
    S = Ho * Wo
    yy = jnp.arange(S, dtype=jnp.int32) // Wo
    xx = jnp.arange(S, dtype=jnp.int32) % Wo
    planes = jnp.stack([yy >= 1, yy <= Ho - 2, xx >= 1, xx <= Wo - 2], axis=0)
    return planes.astype(jnp.float32).reshape(4, 1, S)


def _prep_conv_w(w_hwio):
    """(3,3,Ci,Co) HWIO -> (9, Co, Ci_padded) bf16, tap index t = ky*3 + kx."""
    kh, kw, ci, co = w_hwio.shape
    w = jnp.transpose(w_hwio, (0, 1, 3, 2)).reshape(kh * kw, co, ci)
    return _pad_dim(w, 2, 8).astype(COMPUTE_DTYPE)


# ---------------------------------------------------------------------------
# Kernel helpers
# ---------------------------------------------------------------------------
def _tap_mask(mask_ref, dy, dx):
    """(1, S) validity mask for tap (dy, dx); None for the center tap."""
    my = mask_ref[0] if dy == -1 else (mask_ref[1] if dy == 1 else None)
    mx = mask_ref[2] if dx == -1 else (mask_ref[3] if dx == 1 else None)
    if my is None:
        return mx
    if mx is None:
        return my
    return my * mx          # corners only: cheap (1, S) * (1, S)


def _conv3x3_accum(xn, mask_ref, w, Wo):
    """Zero-padded 3x3 conv on flattened (C, S) activations via 9 accumulating MXU dots.

    xn:  (C, S) f32 post-BN/ReLU activations (S = Ho*Wo on the lane axis).
    w:   (9, Cout, C) bf16 weights, tap t = (dy+1)*3 + (dx+1).
    Each tap is an XLU roll + border mask, cast to bf16 just before its dot; accumulation
    across taps stays f32.  No (9*C, S) im2col temp is ever materialized.
    """
    _, S = xn.shape
    acc = None
    t = 0
    for dy in (-1, 0, 1):
        for dx in (-1, 0, 1):
            if (dy, dx) == (0, 0):
                tap = xn
            else:
                d = dy * Wo + dx
                tap = pltpu.roll(xn, shift=(-d) % S, axis=1)   # tap[s] = xn[s + d]
                tap = tap * _tap_mask(mask_ref, dy, dx)        # zero the padded-halo taps
            part = jnp.dot(w[t], tap.astype(w.dtype),
                           preferred_element_type=jnp.float32)  # (Cout, S)
            acc = part if acc is None else acc + part
            t += 1
    return acc


# ---------------------------------------------------------------------------
# Kernels
# ---------------------------------------------------------------------------
def conv1_kernel(xu_ref, mask_ref, scale_ref, shift_ref, w_ref, b_ref,
                 y_ref, sum_ref, sumsq_ref, *, Wo):
    xu = xu_ref[0].astype(jnp.float32)                               # (Cin_p, S)
    # BN1 + ReLU (per-channel pointwise commutes with nearest upsample -> applied post-upsample)
    xn = jnp.maximum(xu * scale_ref[...] + shift_ref[...], 0.0)
    y = _conv3x3_accum(xn, mask_ref, w_ref[...], Wo) + b_ref[...]    # (Cout, S) f32
    # BN2 batch-statistics partials (f32, pre-cast) -- avoids an extra HBM pass over y1.
    sum_ref[0] = jnp.sum(y, axis=1, keepdims=True)
    sumsq_ref[0] = jnp.sum(y * y, axis=1, keepdims=True)
    y_ref[0] = y.astype(y_ref.dtype)                                 # bf16 store (lane-dense)


def conv2_kernel(*refs, Wo, identity_bypass):
    if identity_bypass:
        (y_ref, xu_ref, mask_ref, scale_ref, shift_ref, w_ref, b_ref, out_ref) = refs
        wb_ref = bb_ref = None
    else:
        (y_ref, xu_ref, mask_ref, scale_ref, shift_ref, w_ref, b_ref,
         wb_ref, bb_ref, out_ref) = refs

    y = y_ref[0].astype(jnp.float32)                                 # (Cm_p, S)
    yn = jnp.maximum(y * scale_ref[...] + shift_ref[...], 0.0)       # BN2 + ReLU
    acc = _conv3x3_accum(yn, mask_ref, w_ref[...], Wo) + b_ref[...]  # (Cout, S) f32

    xu = xu_ref[0]                                                   # (Cin_p, S) bf16 upsampled x
    if identity_bypass:
        acc = acc + xu[: acc.shape[0], :].astype(jnp.float32)        # plain upsample bypass
    else:
        acc = acc + jnp.dot(wb_ref[...], xu,
                            preferred_element_type=jnp.float32) + bb_ref[...]
    out_ref[0] = acc.astype(out_ref.dtype)


# ---------------------------------------------------------------------------
# pallas_call wrappers
# ---------------------------------------------------------------------------
def _conv1_call(xu, masks, scale, shift, w, b, Wo):
    N, Cin_p, S = xu.shape
    _, Cout, _ = w.shape
    return pl.pallas_call(
        functools.partial(conv1_kernel, Wo=Wo),
        out_shape=(
            jax.ShapeDtypeStruct((N, Cout, S), COMPUTE_DTYPE),       # y1 (bf16, halves HBM)
            jax.ShapeDtypeStruct((N, Cout, 1), jnp.float32),         # per-image sum(y1)
            jax.ShapeDtypeStruct((N, Cout, 1), jnp.float32),         # per-image sum(y1^2)
        ),
        grid=(N,),
        in_specs=[
            pl.BlockSpec((1, Cin_p, S), lambda n: (n, 0, 0)),
            pl.BlockSpec((4, 1, S), lambda n: (0, 0, 0)),
            pl.BlockSpec((Cin_p, 1), lambda n: (0, 0)),
            pl.BlockSpec((Cin_p, 1), lambda n: (0, 0)),
            pl.BlockSpec((9, Cout, Cin_p), lambda n: (0, 0, 0)),
            pl.BlockSpec((Cout, 1), lambda n: (0, 0)),
        ],
        out_specs=[
            pl.BlockSpec((1, Cout, S), lambda n: (n, 0, 0)),
            pl.BlockSpec((1, Cout, 1), lambda n: (n, 0, 0)),
            pl.BlockSpec((1, Cout, 1), lambda n: (n, 0, 0)),
        ],
        compiler_params=pltpu.CompilerParams(
            dimension_semantics=("parallel",),
            vmem_limit_bytes=VMEM_LIMIT_BYTES),
    )(xu, masks, scale, shift, w, b)


def _conv2_call(y1, xu, masks, scale, shift, w, b, wb, bb, Wo, identity_bypass):
    N, Cm_p, S = y1.shape
    _, Cout, _ = w.shape
    Cin_p = xu.shape[1]
    in_specs = [
        pl.BlockSpec((1, Cm_p, S), lambda n: (n, 0, 0)),
        pl.BlockSpec((1, Cin_p, S), lambda n: (n, 0, 0)),
        pl.BlockSpec((4, 1, S), lambda n: (0, 0, 0)),
        pl.BlockSpec((Cm_p, 1), lambda n: (0, 0)),
        pl.BlockSpec((Cm_p, 1), lambda n: (0, 0)),
        pl.BlockSpec((9, Cout, Cm_p), lambda n: (0, 0, 0)),
        pl.BlockSpec((Cout, 1), lambda n: (0, 0)),
    ]
    args = [y1, xu, masks, scale, shift, w, b]
    if not identity_bypass:                       # don't DMA unused wb/bb for identity bypass
        in_specs += [pl.BlockSpec((Cout, Cin_p), lambda n: (0, 0)),
                     pl.BlockSpec((Cout, 1), lambda n: (0, 0))]
        args += [wb, bb]
    return pl.pallas_call(
        functools.partial(conv2_kernel, Wo=Wo, identity_bypass=identity_bypass),
        out_shape=jax.ShapeDtypeStruct((N, Cout, S), jnp.float32),
        grid=(N,),
        in_specs=in_specs,
        out_specs=pl.BlockSpec((1, Cout, S), lambda n: (n, 0, 0)),
        compiler_params=pltpu.CompilerParams(
            dimension_semantics=("parallel",),
            vmem_limit_bytes=VMEM_LIMIT_BYTES),
    )(*args)


# ---------------------------------------------------------------------------
# Full module forward (input/output are NCHW, like the PyTorch module)
# ---------------------------------------------------------------------------
def res_block_generator(x_nchw, p):
    x = x_nchw.astype(jnp.float32)                  # (N, Cin, H, W) channels-major already
    N, Cin, H, W = x.shape
    Cout = p["w1"].shape[-1]
    identity_bypass = (Cin == Cout)
    Ho, Wo = 2 * H, 2 * W
    S = Ho * Wo
    Cm_p = _round_up(Cout, 8)

    # --- BatchNorm1: training-mode batch stats over the ORIGINAL x (nearest upsample keeps them)
    mean1 = jnp.mean(x, axis=(0, 2, 3))
    var1 = jnp.var(x, axis=(0, 2, 3))
    scale1 = p["gamma1"] / jnp.sqrt(var1 + EPS)
    shift1 = p["beta1"] - mean1 * scale1

    # 2x nearest upsample of the RAW x (BN/ReLU commute with it), flattened, channel-padded,
    # stored once in bf16 and shared by conv1 and the bypass.
    xu = jnp.repeat(jnp.repeat(x, 2, axis=2), 2, axis=3).reshape(N, Cin, S)
    xu = _pad_dim(xu, 1, 8).astype(COMPUTE_DTYPE)   # (N, Cin_p, S)

    masks = _border_masks(Ho, Wo)                   # (4, 1, S) f32 border-validity planes

    y1, s1, sq1 = _conv1_call(
        xu, masks,
        _pad_dim(scale1.reshape(Cin, 1), 0, 8),
        _pad_dim(shift1.reshape(Cin, 1), 0, 8),
        _prep_conv_w(p["w1"]),                      # (9, Cout, Cin_p) bf16
        p["b1"].reshape(Cout, 1).astype(jnp.float32),
        Wo)

    # --- BatchNorm2: stats reduced from conv1's f32 in-kernel partials (no extra pass over y1)
    cnt = float(N * S)
    mean2 = jnp.sum(s1, axis=(0, 2)) / cnt
    var2 = jnp.sum(sq1, axis=(0, 2)) / cnt - mean2 * mean2
    scale2 = p["gamma2"] / jnp.sqrt(var2 + EPS)
    shift2 = p["beta2"] - mean2 * scale2

    y1p = _pad_dim(y1, 1, 8)                        # (N, Cm_p, S) bf16 (no-op when Cout % 8 == 0)
    wb = bb = None
    if not identity_bypass:
        wb = _pad_dim(p["wb"], 1, 8).astype(COMPUTE_DTYPE)       # (Cout, Cin_p)
        bb = p["bb"].reshape(Cout, 1).astype(jnp.float32)

    out = _conv2_call(
        y1p, xu, masks,
        _pad_dim(scale2.reshape(Cout, 1), 0, 8),
        _pad_dim(shift2.reshape(Cout, 1), 0, 8),
        _prep_conv_w(p["w2"]),                      # (9, Cout, Cm_p) bf16
        p["b2"].reshape(Cout, 1).astype(jnp.float32),
        wb, bb, Wo, identity_bypass)
    return out.reshape(N, Cout, Ho, Wo)             # NCHW, f32


# ---------------------------------------------------------------------------
# Parameters & pure-JAX reference
# ---------------------------------------------------------------------------
def make_params(key, in_channels, out_channels):
    k1, k2, k3, k4, k5, k6 = jax.random.split(key, 6)

    def xavier(k, shape, fan_in, fan_out):
        bound = math.sqrt(6.0 / (fan_in + fan_out))
        return jax.random.uniform(k, shape, jnp.float32, -bound, bound)

    def unif(k, shape, bound):
        return jax.random.uniform(k, shape, jnp.float32, -bound, bound)

    p = {
        "w1": xavier(k1, (3, 3, in_channels, out_channels), in_channels * 9, out_channels * 9),
        "b1": unif(k2, (out_channels,), 1.0 / math.sqrt(in_channels * 9)),
        "w2": xavier(k3, (3, 3, out_channels, out_channels), out_channels * 9, out_channels * 9),
        "b2": unif(k4, (out_channels,), 1.0 / math.sqrt(out_channels * 9)),
        "gamma1": jnp.ones((in_channels,), jnp.float32),
        "beta1": jnp.zeros((in_channels,), jnp.float32),
        "gamma2": jnp.ones((out_channels,), jnp.float32),
        "beta2": jnp.zeros((out_channels,), jnp.float32),
    }
    if in_channels == out_channels:
        p["wb"] = jnp.eye(in_channels, dtype=jnp.float32)   # unused (identity bypass)
        p["bb"] = jnp.zeros((out_channels,), jnp.float32)
    else:
        p["wb"] = unif(k5, (out_channels, in_channels), 1.0 / math.sqrt(in_channels))
        p["bb"] = unif(k6, (out_channels,), 1.0 / math.sqrt(in_channels))
    return p


def reference(x_nchw, p, compute_dtype=jnp.float32):
    """XLA reference.  compute_dtype=f32 -> exact module semantics;
    compute_dtype=bf16 -> same rounding points as the kernel (tight structural check)."""
    f32 = jnp.float32
    x = jnp.transpose(x_nchw, (0, 2, 3, 1)).astype(f32)      # NHWC
    in_ch, out_ch = p["w1"].shape[2], p["w1"].shape[3]

    def up(v):
        return jnp.repeat(jnp.repeat(v, 2, axis=1), 2, axis=2)

    def conv(v, w, b):
        return lax.conv_general_dilated(
            v.astype(compute_dtype), w.astype(compute_dtype), (1, 1), "SAME",
            dimension_numbers=("NHWC", "HWIO", "NHWC"),
            preferred_element_type=f32) + b

    m1 = jnp.mean(x, axis=(0, 1, 2)); v1 = jnp.var(x, axis=(0, 1, 2))
    s1 = p["gamma1"] / jnp.sqrt(v1 + EPS); t1 = p["beta1"] - m1 * s1

    xu = up(x).astype(compute_dtype)                          # xu storage rounding
    h = jnp.maximum(xu.astype(f32) * s1 + t1, 0.0)
    y1 = conv(h, p["w1"], p["b1"])                            # f32

    m2 = jnp.mean(y1, axis=(0, 1, 2)); v2 = jnp.var(y1, axis=(0, 1, 2))
    s2 = p["gamma2"] / jnp.sqrt(v2 + EPS); t2 = p["beta2"] - m2 * s2

    y1s = y1.astype(compute_dtype)                            # y1 storage rounding
    h2 = jnp.maximum(y1s.astype(f32) * s2 + t2, 0.0)
    y2 = conv(h2, p["w2"], p["b2"])

    if in_ch == out_ch:
        byp = xu.astype(f32)
    else:
        byp = jnp.einsum("nhwi,oi->nhwo", xu.astype(compute_dtype),
                         p["wb"].astype(compute_dtype),
                         preferred_element_type=f32) + p["bb"]
    return jnp.transpose(y2 + byp, (0, 3, 1, 2))


if __name__ == "__main__":
    N, Cin, Cout, H, W = 2, 4, 8, 16, 16
    key = jax.random.PRNGKey(0)
    kx, kp = jax.random.split(key)
    x = jax.random.normal(kx, (N, Cin, H, W), jnp.float32)    # NCHW like the PyTorch module
    params = make_params(kp, Cin, Cout)

    out = jax.block_until_ready(res_block_generator(x, params))
    assert out.shape == (N, Cout, 2 * H, 2 * W), out.shape

    # Tight structural check vs a reference with identical bf16 rounding points.
    ref_bf = jax.block_until_ready(reference(x, params, COMPUTE_DTYPE))
    err_tight = float(jnp.max(jnp.abs(out - ref_bf)))
    assert jnp.allclose(out, ref_bf, rtol=5e-3, atol=5e-3), err_tight

    # Loose semantic check vs the pure-f32 module reference (bf16 matmul/storage rounding only).
    ref_f32 = jax.block_until_ready(reference(x, params, jnp.float32))
    err_f32 = float(jnp.max(jnp.abs(out - ref_f32)))
    assert jnp.allclose(out, ref_f32, rtol=1e-1, atol=1e-1), err_f32

    print("KERNEL_OK")
</pallas_src>

<mosaic_0001>
module attributes {stable_mosaic.version = 11 : i64} {
  func.func @conv1_kernel(%arg0: i32, %arg1: memref<1x8x1024xbf16, #tpu.memory_space<vmem>>, %arg2: memref<4x1x1024xf32, #tpu.memory_space<vmem>>, %arg3: memref<8x1xf32, #tpu.memory_space<vmem>>, %arg4: memref<8x1xf32, #tpu.memory_space<vmem>>, %arg5: memref<9x8x8xbf16, #tpu.memory_space<vmem>>, %arg6: memref<8x1xf32, #tpu.memory_space<vmem>>, %arg7: memref<1x8x1024xbf16, #tpu.memory_space<vmem>>, %arg8: memref<1x8x1xf32, #tpu.memory_space<vmem>>, %arg9: memref<1x8x1xf32, #tpu.memory_space<vmem>>) attributes {dimension_semantics = [#tpu.dimension_semantics<parallel>], iteration_bounds = array<i64: 2>, scalar_prefetch = 0 : i64, scratch_operands = 0 : i64, tpu.core_type = #tpu.core_type<tc>, window_params = [{transform_indices = @transform_0, window_bounds = array<i64: 1, 8, 1024>}, {pipeline_mode = #tpu.pipeline_mode<synchronous>, transform_indices = @transform_1, window_bounds = array<i64: 4, 1, 1024>}, {pipeline_mode = #tpu.pipeline_mode<synchronous>, transform_indices = @transform_2, window_bounds = array<i64: 8, 1>}, {pipeline_mode = #tpu.pipeline_mode<synchronous>, transform_indices = @transform_3, window_bounds = array<i64: 8, 1>}, {pipeline_mode = #tpu.pipeline_mode<synchronous>, transform_indices = @transform_4, window_bounds = array<i64: 9, 8, 8>}, {pipeline_mode = #tpu.pipeline_mode<synchronous>, transform_indices = @transform_5, window_bounds = array<i64: 8, 1>}, {transform_indices = @transform_6, window_bounds = array<i64: 1, 8, 1024>}, {transform_indices = @transform_7, window_bounds = array<i64: 1, 8, 1>}, {transform_indices = @transform_8, window_bounds = array<i64: 1, 8, 1>}]} {
    %c0 = arith.constant 0 : index
    %c0_0 = arith.constant 0 : index
    %c0_1 = arith.constant 0 : index
    %0 = vector.load %arg1[%c0, %c0_0, %c0_1] : memref<1x8x1024xbf16, #tpu.memory_space<vmem>>, vector<1x8x1024xbf16>
    %1 = vector.shape_cast %0 : vector<1x8x1024xbf16> to vector<8x1024xbf16>
    %2 = arith.extf %1 : vector<8x1024xbf16> to vector<8x1024xf32>
    %c0_2 = arith.constant 0 : index
    %c0_3 = arith.constant 0 : index
    %3 = vector.load %arg3[%c0_2, %c0_3] : memref<8x1xf32, #tpu.memory_space<vmem>>, vector<8x1xf32>
    %4 = vector.broadcast %3 : vector<8x1xf32> to vector<8x1024xf32>
    %5 = arith.mulf %2, %4 : vector<8x1024xf32>
    %c0_4 = arith.constant 0 : index
    %c0_5 = arith.constant 0 : index
    %6 = vector.load %arg4[%c0_4, %c0_5] : memref<8x1xf32, #tpu.memory_space<vmem>>, vector<8x1xf32>
    %7 = vector.broadcast %6 : vector<8x1xf32> to vector<8x1024xf32>
    %8 = arith.addf %5, %7 : vector<8x1024xf32>
    %cst = arith.constant 0.000000e+00 : f32
    %9 = vector.broadcast %cst : f32 to vector<8x1024xf32>
    %10 = arith.maximumf %8, %9 : vector<8x1024xf32>
    %c0_6 = arith.constant 0 : index
    %c0_7 = arith.constant 0 : index
    %c0_8 = arith.constant 0 : index
    %11 = vector.load %arg5[%c0_6, %c0_7, %c0_8] : memref<9x8x8xbf16, #tpu.memory_space<vmem>>, vector<9x8x8xbf16>
    %c33_i32 = arith.constant 33 : i32
    %12 = tpu.dynamic_rotate %10 by %c33_i32 dim 1 : vector<8x1024xf32>, i32 -> vector<8x1024xf32>
    %c0_9 = arith.constant 0 : index
    %c0_10 = arith.constant 0 : index
    %c0_11 = arith.constant 0 : index
    %13 = vector.load %arg2[%c0_9, %c0_10, %c0_11] : memref<4x1x1024xf32, #tpu.memory_space<vmem>>, vector<1x1x1024xf32>
    %14 = vector.shape_cast %13 : vector<1x1x1024xf32> to vector<1x1024xf32>
    %c2 = arith.constant 2 : index
    %c0_12 = arith.constant 0 : index
    %c0_13 = arith.constant 0 : index
    %15 = vector.load %arg2[%c2, %c0_12, %c0_13] : memref<4x1x1024xf32, #tpu.memory_space<vmem>>, vector<1x1x1024xf32>
    %16 = vector.shape_cast %15 : vector<1x1x1024xf32> to vector<1x1024xf32>
    %17 = arith.mulf %14, %16 : vector<1x1024xf32>
    %18 = vector.broadcast %17 : vector<1x1024xf32> to vector<8x1024xf32>
    %19 = arith.mulf %12, %18 : vector<8x1024xf32>
    %20 = vector.extract_strided_slice %11 {offsets = [0, 0, 0], sizes = [1, 8, 8], strides = [1, 1, 1]} : vector<9x8x8xbf16> to vector<1x8x8xbf16>
    %21 = vector.shape_cast %20 : vector<1x8x8xbf16> to vector<8x8xbf16>
    %22 = arith.truncf %19 : vector<8x1024xf32> to vector<8x1024xbf16>
    %cst_14 = arith.constant dense<0.000000e+00> : vector<8x1024xf32>
    %23 = tpu.matmul %21, %22, %cst_14 {dimension_numbers = #tpu.dot_dimension_numbers<[1], [0], [0], [1], [0, 0, 1, 1], [], []>} : vector<8x8xbf16>, vector<8x1024xbf16>, vector<8x1024xf32> -> vector<8x1024xf32>
    %c32_i32 = arith.constant 32 : i32
    %24 = tpu.dynamic_rotate %10 by %c32_i32 dim 1 : vector<8x1024xf32>, i32 -> vector<8x1024xf32>
    %c0_15 = arith.constant 0 : index
    %c0_16 = arith.constant 0 : index
    %c0_17 = arith.constant 0 : index
    %25 = vector.load %arg2[%c0_15, %c0_16, %c0_17] : memref<4x1x1024xf32, #tpu.memory_space<vmem>>, vector<1x1x1024xf32>
    %26 = vector.shape_cast %25 : vector<1x1x1024xf32> to vector<1x1024xf32>
    %27 = vector.broadcast %26 : vector<1x1024xf32> to vector<8x1024xf32>
    %28 = arith.mulf %24, %27 : vector<8x1024xf32>
    %29 = vector.extract_strided_slice %11 {offsets = [1, 0, 0], sizes = [1, 8, 8], strides = [1, 1, 1]} : vector<9x8x8xbf16> to vector<1x8x8xbf16>
    %30 = vector.shape_cast %29 : vector<1x8x8xbf16> to vector<8x8xbf16>
    %31 = arith.truncf %28 : vector<8x1024xf32> to vector<8x1024xbf16>
    %cst_18 = arith.constant dense<0.000000e+00> : vector<8x1024xf32>
    %32 = tpu.matmul %30, %31, %cst_18 {dimension_numbers = #tpu.dot_dimension_numbers<[1], [0], [0], [1], [0, 0, 1, 1], [], []>} : vector<8x8xbf16>, vector<8x1024xbf16>, vector<8x1024xf32> -> vector<8x1024xf32>
    %33 = arith.addf %23, %32 : vector<8x1024xf32>
    %c31_i32 = arith.constant 31 : i32
    %34 = tpu.dynamic_rotate %10 by %c31_i32 dim 1 : vector<8x1024xf32>, i32 -> vector<8x1024xf32>
    %c0_19 = arith.constant 0 : index
    %c0_20 = arith.constant 0 : index
    %c0_21 = arith.constant 0 : index
    %35 = vector.load %arg2[%c0_19, %c0_20, %c0_21] : memref<4x1x1024xf32, #tpu.memory_space<vmem>>, vector<1x1x1024xf32>
    %36 = vector.shape_cast %35 : vector<1x1x1024xf32> to vector<1x1024xf32>
    %c3 = arith.constant 3 : index
    %c0_22 = arith.constant 0 : index
    %c0_23 = arith.constant 0 : index
    %37 = vector.load %arg2[%c3, %c0_22, %c0_23] : memref<4x1x1024xf32, #tpu.memory_space<vmem>>, vector<1x1x1024xf32>
    %38 = vector.shape_cast %37 : vector<1x1x1024xf32> to vector<1x1024xf32>
    %39 = arith.mulf %36, %38 : vector<1x1024xf32>
    %40 = vector.broadcast %39 : vector<1x1024xf32> to vector<8x1024xf32>
    %41 = arith.mulf %34, %40 : vector<8x1024xf32>
    %42 = vector.extract_strided_slice %11 {offsets = [2, 0, 0], sizes = [1, 8, 8], strides = [1, 1, 1]} : vector<9x8x8xbf16> to vector<1x8x8xbf16>
    %43 = vector.shape_cast %42 : vector<1x8x8xbf16> to vector<8x8xbf16>
    %44 = arith.truncf %41 : vector<8x1024xf32> to vector<8x1024xbf16>
    %cst_24 = arith.constant dense<0.000000e+00> : vector<8x1024xf32>
    %45 = tpu.matmul %43, %44, %cst_24 {dimension_numbers = #tpu.dot_dimension_numbers<[1], [0], [0], [1], [0, 0, 1, 1], [], []>} : vector<8x8xbf16>, vector<8x1024xbf16>, vector<8x1024xf32> -> vector<8x1024xf32>
    %46 = arith.addf %33, %45 : vector<8x1024xf32>
    %c1_i32 = arith.constant 1 : i32
    %47 = tpu.dynamic_rotate %10 by %c1_i32 dim 1 : vector<8x1024xf32>, i32 -> vector<8x1024xf32>
    %c2_25 = arith.constant 2 : index
    %c0_26 = arith.constant 0 : index
    %c0_27 = arith.constant 0 : index
    %48 = vector.load %arg2[%c2_25, %c0_26, %c0_27] : memref<4x1x1024xf32, #tpu.memory_space<vmem>>, vector<1x1x1024xf32>
    %49 = vector.shape_cast %48 : vector<1x1x1024xf32> to vector<1x1024xf32>
    %50 = vector.broadcast %49 : vector<1x1024xf32> to vector<8x1024xf32>
    %51 = arith.mulf %47, %50 : vector<8x1024xf32>
    %52 = vector.extract_strided_slice %11 {offsets = [3, 0, 0], sizes = [1, 8, 8], strides = [1, 1, 1]} : vector<9x8x8xbf16> to vector<1x8x8xbf16>
    %53 = vector.shape_cast %52 : vector<1x8x8xbf16> to vector<8x8xbf16>
    %54 = arith.truncf %51 : vector<8x1024xf32> to vector<8x1024xbf16>
    %cst_28 = arith.constant dense<0.000000e+00> : vector<8x1024xf32>
    %55 = tpu.matmul %53, %54, %cst_28 {dimension_numbers = #tpu.dot_dimension_numbers<[1], [0], [0], [1], [0, 0, 1, 1], [], []>} : vector<8x8xbf16>, vector<8x1024xbf16>, vector<8x1024xf32> -> vector<8x1024xf32>
    %56 = arith.addf %46, %55 : vector<8x1024xf32>
    %57 = vector.extract_strided_slice %11 {offsets = [4, 0, 0], sizes = [1, 8, 8], strides = [1, 1, 1]} : vector<9x8x8xbf16> to vector<1x8x8xbf16>
    %58 = vector.shape_cast %57 : vector<1x8x8xbf16> to vector<8x8xbf16>
    %59 = arith.truncf %10 : vector<8x1024xf32> to vector<8x1024xbf16>
    %cst_29 = arith.constant dense<0.000000e+00> : vector<8x1024xf32>
    %60 = tpu.matmul %58, %59, %cst_29 {dimension_numbers = #tpu.dot_dimension_numbers<[1], [0], [0], [1], [0, 0, 1, 1], [], []>} : vector<8x8xbf16>, vector<8x1024xbf16>, vector<8x1024xf32> -> vector<8x1024xf32>
    %61 = arith.addf %56, %60 : vector<8x1024xf32>
    %c1023_i32 = arith.constant 1023 : i32
    %62 = tpu.dynamic_rotate %10 by %c1023_i32 dim 1 : vector<8x1024xf32>, i32 -> vector<8x1024xf32>
    %c3_30 = arith.constant 3 : index
    %c0_31 = arith.constant 0 : index
    %c0_32 = arith.constant 0 : index
    %63 = vector.load %arg2[%c3_30, %c0_31, %c0_32] : memref<4x1x1024xf32, #tpu.memory_space<vmem>>, vector<1x1x1024xf32>
    %64 = vector.shape_cast %63 : vector<1x1x1024xf32> to vector<1x1024xf32>
    %65 = vector.broadcast %64 : vector<1x1024xf32> to vector<8x1024xf32>
    %66 = arith.mulf %62, %65 : vector<8x1024xf32>
    %67 = vector.extract_strided_slice %11 {offsets = [5, 0, 0], sizes = [1, 8, 8], strides = [1, 1, 1]} : vector<9x8x8xbf16> to vector<1x8x8xbf16>
    %68 = vector.shape_cast %67 : vector<1x8x8xbf16> to vector<8x8xbf16>
    %69 = arith.truncf %66 : vector<8x1024xf32> to vector<8x1024xbf16>
    %cst_33 = arith.constant dense<0.000000e+00> : vector<8x1024xf32>
    %70 = tpu.matmul %68, %69, %cst_33 {dimension_numbers = #tpu.dot_dimension_numbers<[1], [0], [0], [1], [0, 0, 1, 1], [], []>} : vector<8x8xbf16>, vector<8x1024xbf16>, vector<8x1024xf32> -> vector<8x1024xf32>
    %71 = arith.addf %61, %70 : vector<8x1024xf32>
    %c993_i32 = arith.constant 993 : i32
    %72 = tpu.dynamic_rotate %10 by %c993_i32 dim 1 : vector<8x1024xf32>, i32 -> vector<8x1024xf32>
    %c1 = arith.constant 1 : index
    %c0_34 = arith.constant 0 : index
    %c0_35 = arith.constant 0 : index
    %73 = vector.load %arg2[%c1, %c0_34, %c0_35] : memref<4x1x1024xf32, #tpu.memory_space<vmem>>, vector<1x1x1024xf32>
    %74 = vector.shape_cast %73 : vector<1x1x1024xf32> to vector<1x1024xf32>
    %c2_36 = arith.constant 2 : index
    %c0_37 = arith.constant 0 : index
    %c0_38 = arith.constant 0 : index
    %75 = vector.load %arg2[%c2_36, %c0_37, %c0_38] : memref<4x1x1024xf32, #tpu.memory_space<vmem>>, vector<1x1x1024xf32>
    %76 = vector.shape_cast %75 : vector<1x1x1024xf32> to vector<1x1024xf32>
    %77 = arith.mulf %74, %76 : vector<1x1024xf32>
    %78 = vector.broadcast %77 : vector<1x1024xf32> to vector<8x1024xf32>
    %79 = arith.mulf %72, %78 : vector<8x1024xf32>
    %80 = vector.extract_strided_slice %11 {offsets = [6, 0, 0], sizes = [1, 8, 8], strides = [1, 1, 1]} : vector<9x8x8xbf16> to vector<1x8x8xbf16>
    %81 = vector.shape_cast %80 : vector<1x8x8xbf16> to vector<8x8xbf16>
    %82 = arith.truncf %79 : vector<8x1024xf32> to vector<8x1024xbf16>
    %cst_39 = arith.constant dense<0.000000e+00> : vector<8x1024xf32>
    %83 = tpu.matmul %81, %82, %cst_39 {dimension_numbers = #tpu.dot_dimension_numbers<[1], [0], [0], [1], [0, 0, 1, 1], [], []>} : vector<8x8xbf16>, vector<8x1024xbf16>, vector<8x1024xf32> -> vector<8x1024xf32>
    %84 = arith.addf %71, %83 : vector<8x1024xf32>
    %c992_i32 = arith.constant 992 : i32
    %85 = tpu.dynamic_rotate %10 by %c992_i32 dim 1 : vector<8x1024xf32>, i32 -> vector<8x1024xf32>
    %c1_40 = arith.constant 1 : index
    %c0_41 = arith.constant 0 : index
    %c0_42 = arith.constant 0 : index
    %86 = vector.load %arg2[%c1_40, %c0_41, %c0_42] : memref<4x1x1024xf32, #tpu.memory_space<vmem>>, vector<1x1x1024xf32>
    %87 = vector.shape_cast %86 : vector<1x1x1024xf32> to vector<1x1024xf32>
    %88 = vector.broadcast %87 : vector<1x1024xf32> to vector<8x1024xf32>
    %89 = arith.mulf %85, %88 : vector<8x1024xf32>
    %90 = vector.extract_strided_slice %11 {offsets = [7, 0, 0], sizes = [1, 8, 8], strides = [1, 1, 1]} : vector<9x8x8xbf16> to vector<1x8x8xbf16>
    %91 = vector.shape_cast %90 : vector<1x8x8xbf16> to vector<8x8xbf16>
    %92 = arith.truncf %89 : vector<8x1024xf32> to vector<8x1024xbf16>
    %cst_43 = arith.constant dense<0.000000e+00> : vector<8x1024xf32>
    %93 = tpu.matmul %91, %92, %cst_43 {dimension_numbers = #tpu.dot_dimension_numbers<[1], [0], [0], [1], [0, 0, 1, 1], [], []>} : vector<8x8xbf16>, vector<8x1024xbf16>, vector<8x1024xf32> -> vector<8x1024xf32>
    %94 = arith.addf %84, %93 : vector<8x1024xf32>
    %c991_i32 = arith.constant 991 : i32
    %95 = tpu.dynamic_rotate %10 by %c991_i32 dim 1 : vector<8x1024xf32>, i32 -> vector<8x1024xf32>
    %c1_44 = arith.constant 1 : index
    %c0_45 = arith.constant 0 : index
    %c0_46 = arith.constant 0 : index
    %96 = vector.load %arg2[%c1_44, %c0_45, %c0_46] : memref<4x1x1024xf32, #tpu.memory_space<vmem>>, vector<1x1x1024xf32>
    %97 = vector.shape_cast %96 : vector<1x1x1024xf32> to vector<1x1024xf32>
    %c3_47 = arith.constant 3 : index
    %c0_48 = arith.constant 0 : index
    %c0_49 = arith.constant 0 : index
    %98 = vector.load %arg2[%c3_47, %c0_48, %c0_49] : memref<4x1x1024xf32, #tpu.memory_space<vmem>>, vector<1x1x1024xf32>
    %99 = vector.shape_cast %98 : vector<1x1x1024xf32> to vector<1x1024xf32>
    %100 = arith.mulf %97, %99 : vector<1x1024xf32>
    %101 = vector.broadcast %100 : vector<1x1024xf32> to vector<8x1024xf32>
    %102 = arith.mulf %95, %101 : vector<8x1024xf32>
    %103 = vector.extract_strided_slice %11 {offsets = [8, 0, 0], sizes = [1, 8, 8], strides = [1, 1, 1]} : vector<9x8x8xbf16> to vector<1x8x8xbf16>
    %104 = vector.shape_cast %103 : vector<1x8x8xbf16> to vector<8x8xbf16>
    %105 = arith.truncf %102 : vector<8x1024xf32> to vector<8x1024xbf16>
    %cst_50 = arith.constant dense<0.000000e+00> : vector<8x1024xf32>
    %106 = tpu.matmul %104, %105, %cst_50 {dimension_numbers = #tpu.dot_dimension_numbers<[1], [0], [0], [1], [0, 0, 1, 1], [], []>} : vector<8x8xbf16>, vector<8x1024xbf16>, vector<8x1024xf32> -> vector<8x1024xf32>
    %107 = arith.addf %94, %106 : vector<8x1024xf32>
    %c0_51 = arith.constant 0 : index
    %c0_52 = arith.constant 0 : index
    %108 = vector.load %arg6[%c0_51, %c0_52] : memref<8x1xf32, #tpu.memory_space<vmem>>, vector<8x1xf32>
    %109 = vector.broadcast %108 : vector<8x1xf32> to vector<8x1024xf32>
    %110 = arith.addf %107, %109 : vector<8x1024xf32>
    %cst_53 = arith.constant dense<0.000000e+00> : vector<8xf32>
    %111 = vector.multi_reduction <add>, %110, %cst_53 [1] : vector<8x1024xf32> to vector<8xf32>
    %112 = vector.shape_cast %111 : vector<8xf32> to vector<8x1xf32>
    %c0_54 = arith.constant 0 : index
    %c0_55 = arith.constant 0 : index
    %c0_56 = arith.constant 0 : index
    %113 = vector.load %arg8[%c0_54, %c0_55, %c0_56] : memref<1x8x1xf32, #tpu.memory_space<vmem>>, vector<1x8x1xf32>
    %114 = vector.shape_cast %113 : vector<1x8x1xf32> to vector<8x1xf32>
    %115 = vector.shape_cast %112 : vector<8x1xf32> to vector<1x8x1xf32>
    tpu.vector_store %arg8[%c0_54, %c0_55, %c0_56], %115 {strides = array<i32>} : memref<1x8x1xf32, #tpu.memory_space<vmem>>, vector<1x8x1xf32>,
    %116 = arith.mulf %110, %110 : vector<8x1024xf32>
    %cst_57 = arith.constant dense<0.000000e+00> : vector<8xf32>
    %117 = vector.multi_reduction <add>, %116, %cst_57 [1] : vector<8x1024xf32> to vector<8xf32>
    %118 = vector.shape_cast %117 : vector<8xf32> to vector<8x1xf32>
    %c0_58 = arith.constant 0 : index
    %c0_59 = arith.constant 0 : index
    %c0_60 = arith.constant 0 : index
    %119 = vector.load %arg9[%c0_58, %c0_59, %c0_60] : memref<1x8x1xf32, #tpu.memory_space<vmem>>, vector<1x8x1xf32>
    %120 = vector.shape_cast %119 : vector<1x8x1xf32> to vector<8x1xf32>
    %121 = vector.shape_cast %118 : vector<8x1xf32> to vector<1x8x1xf32>
    tpu.vector_store %arg9[%c0_58, %c0_59, %c0_60], %121 {strides = array<i32>} : memref<1x8x1xf32, #tpu.memory_space<vmem>>, vector<1x8x1xf32>,
    %122 = arith.truncf %110 : vector<8x1024xf32> to vector<8x1024xbf16>
    %c0_61 = arith.constant 0 : index
    %c0_62 = arith.constant 0 : index
    %c0_63 = arith.constant 0 : index
    %123 = vector.load %arg7[%c0_61, %c0_62, %c0_63] : memref<1x8x1024xbf16, #tpu.memory_space<vmem>>, vector<1x8x1024xbf16>
    %124 = vector.shape_cast %123 : vector<1x8x1024xbf16> to vector<8x1024xbf16>
    %125 = vector.shape_cast %122 : vector<8x1024xbf16> to vector<1x8x1024xbf16>
    tpu.vector_store %arg7[%c0_61, %c0_62, %c0_63], %125 {strides = array<i32>} : memref<1x8x1024xbf16, #tpu.memory_space<vmem>>, vector<1x8x1024xbf16>,
    return
  }
  func.func @transform_0(%arg0: i32) -> (i32, i32, i32) {
    %c0_i32 = arith.constant 0 : i32
    %c0_i32_0 = arith.constant 0 : i32
    %c0_i32_1 = arith.constant 0 : i32
    return %arg0, %c0_i32, %c0_i32_0 : i32, i32, i32
  }
  func.func @transform_1(%arg0: i32) -> (i32, i32, i32) {
    %c0_i32 = arith.constant 0 : i32
    %c0_i32_0 = arith.constant 0 : i32
    %c0_i32_1 = arith.constant 0 : i32
    %c0_i32_2 = arith.constant 0 : i32
    return %c0_i32, %c0_i32_0, %c0_i32_1 : i32, i32, i32
  }
  func.func @transform_2(%arg0: i32) -> (i32, i32) {
    %c0_i32 = arith.constant 0 : i32
    %c0_i32_0 = arith.constant 0 : i32
    %c0_i32_1 = arith.constant 0 : i32
    return %c0_i32, %c0_i32_0 : i32, i32
  }
  func.func @transform_3(%arg0: i32) -> (i32, i32) {
    %c0_i32 = arith.constant 0 : i32
    %c0_i32_0 = arith.constant 0 : i32
    %c0_i32_1 = arith.constant 0 : i32
    return %c0_i32, %c0_i32_0 : i32, i32
  }
  func.func @transform_4(%arg0: i32) -> (i32, i32, i32) {
    %c0_i32 = arith.constant 0 : i32
    %c0_i32_0 = arith.constant 0 : i32
    %c0_i32_1 = arith.constant 0 : i32
    %c0_i32_2 = arith.constant 0 : i32
    return %c0_i32, %c0_i32_0, %c0_i32_1 : i32, i32, i32
  }
  func.func @transform_5(%arg0: i32) -> (i32, i32) {
    %c0_i32 = arith.constant 0 : i32
    %c0_i32_0 = arith.constant 0 : i32
    %c0_i32_1 = arith.constant 0 : i32
    return %c0_i32, %c0_i32_0 : i32, i32
  }
  func.func @transform_6(%arg0: i32) -> (i32, i32, i32) {
    %c0_i32 = arith.constant 0 : i32
    %c0_i32_0 = arith.constant 0 : i32
    %c0_i32_1 = arith.constant 0 : i32
    return %arg0, %c0_i32, %c0_i32_0 : i32, i32, i32
  }
  func.func @transform_7(%arg0: i32) -> (i32, i32, i32) {
    %c0_i32 = arith.constant 0 : i32
    %c0_i32_0 = arith.constant 0 : i32
    %c0_i32_1 = arith.constant 0 : i32
    return %arg0, %c0_i32, %c0_i32_0 : i32, i32, i32
  }
  func.func @transform_8(%arg0: i32) -> (i32, i32, i32) {
    %c0_i32 = arith.constant 0 : i32
    %c0_i32_0 = arith.constant 0 : i32
    %c0_i32_1 = arith.constant 0 : i32
    return %arg0, %c0_i32, %c0_i32_0 : i32, i32, i32
  }
}

</mosaic_0001>

<llo_original>
// kernel: tpu_custom_call.1
$region0: #{tpu_custom_call.1}
  #allocation0 [shape = 'u32[]', space=smem, size = 0x4, offset = 0x4, fixed_abs, tag = 'smem constant byte address 0x4 - core index']
  #allocation1 [shape = 'u32[144,128]{1,0:T(1,128)}', space=vmem, size = 0x12000, scoped, tag = 'internal scratch']
  %s0 = inlined_call_operand.vmem [shape: bf16[2,8,1024], index: 0, kind: input, shape index: {}]
  %s1 = inlined_call_operand.vmem [shape: f32[4,1,1024], index: 1, kind: input, shape index: {}]
  %s2 = inlined_call_operand.vmem [shape: f32[8,1], index: 2, kind: input, shape index: {}]
  %s3 = inlined_call_operand.vmem [shape: f32[8,1], index: 3, kind: input, shape index: {}]
  %s4 = inlined_call_operand.vmem [shape: bf16[9,8,8], index: 4, kind: input, shape index: {}]
  %s5 = inlined_call_operand.vmem [shape: f32[8,1], index: 5, kind: input, shape index: {}]
  %s6 = inlined_call_operand.hbm [shape: bf16[2,8,1024], index: 6, kind: output, shape index: {0}]
  %s7 = inlined_call_operand.vmem [shape: f32[2,8,1], index: 7, kind: output, shape index: {1}]
  %s8 = inlined_call_operand.vmem [shape: f32[2,8,1], index: 8, kind: output, shape index: {2}]
  %9 = xla_tuple %s6, %s7, %s8
  %s10 = sld [smem:[#allocation0]]
  $region73: #{tpu_custom_call.1} parent=0
    _
  %s12 = ssub.s32 1, %s10
  %s13 = scalar_select 0, %s12, %s10
  $region1: #{tpu_custom_call.1} parent=0
    #allocation2 [shape = 'u8[32768]{0}', space=vmem, size = 0x8000, scoped, tag = 'output window, operand 0']
    #allocation3 [shape = 's32[2]{0}', space=sflag, size = 0x8, scoped, tag = 'scoped memory for tpu_custom_call.1']
    %14 = vsyncpa [#allocation3], 0
    %s15 = scalar_lea.sflag [#allocation3], 1
    %16 = vsyncpa %s15, 0
    loop: start=0, step=1, limit=4
    $region2: #{tpu_custom_call.1} parent=1 // loop_pre_header
      _
    $region3: #{tpu_custom_call.1} parent=1 // loop_header
      %s18 = sphi 0, %s22
      %p19 = scmp.ge.s32.totalorder %s18, 4
      %s28 = sphi 0, %s30
      %s31 = sphi 0, %s28
      %s32 = sphi 0, %s31
      %s48 = sphi 0, %s32
      %s52 = sphi 0, %s52
      %s54 = sphi 0, %s52
      %s55 = sphi 0, %s54
      %s69 = sphi 0, %s55
      %s73 = sphi 0, %s73
      %s75 = sphi 0, %s73
      %s76 = sphi 0, %s75
      %s90 = sphi 0, %s76
      %s94 = sphi 0, %s94
      %s96 = sphi 0, %s94
      %s97 = sphi 0, %s96
      %s111 = sphi 0, %s97
      %s115 = sphi 0, %s115
      %s117 = sphi 0, %s115
      %s118 = sphi 0, %s117
      %s132 = sphi 0, %s118
      %s136 = sphi 0, %s136
      %s138 = sphi 0, %s136
      %s139 = sphi 0, %s138
      %s153 = sphi 0, %s139
      %s159 = sphi 0, %s161
      %s162 = sphi 0, %s159
      %s163 = sphi 0, %s162
      %s179 = sphi 0, %s163
      %s185 = sphi 0, %s187
      %s188 = sphi 0, %s185
      %s189 = sphi 0, %s188
      %s205 = sphi 0, %s189
      %s211 = sphi 0, %s213
      %s214 = sphi 0, %s211
      %s215 = sphi 0, %s214
      %s231 = sphi 0, %s215
    $region4: #{tpu_custom_call.1} parent=1 // loop_header_branch
      %21 = sbr.rel (%p19) target = $region8
    $region5: #{tpu_custom_call.1} parent=1 // loop_body
      %s23 = ssub.s32 %s18, 1
      %s24 = ssub.s32 %s18, 2
      %s25 = sadd.s32 %s18, 1
      %s26 = ssub.s32 %s18, %s25
      %p27 = scmp.eq.s32.totalorder %s26, 0
      %s29 = sadd.s32 %s28, 1
      %s30 = scalar_select %p27, %s28, %s29
      %p33 = pneg %p27
      %p34 = scmp.eq.s32.totalorder %s18, 1
      %p35 = por %p33, %p34
      %p36 = scmp.ne.s32.totalorder %s28, %s31
      %p37 = scmp.eq.s32.totalorder %s18, 0
      %p38 = por %p36, %p37
      %p39 = scmp.ne.s32.totalorder %s28, %s31
      %p40 = scmp.eq.s32.totalorder %s23, 1
      %p41 = por %p39, %p40
      %p42 = scmp.ne.s32.totalorder %s31, %s32
      %p43 = scmp.eq.s32.totalorder %s23, 0
      %p44 = por %p42, %p43
      %p45 = scmp.ne.s32.totalorder %s31, %s32
      %p46 = scmp.eq.s32.totalorder %s24, 1
      %p47 = por %p45, %p46
      %p49 = scmp.ne.s32.totalorder %s32, %s48
      %p50 = scmp.eq.s32.totalorder %s24, 0
      %p51 = por %p49, %p50
      %s53 = sadd.s32 %s52, 1
      %p56 = scmp.eq.s32.totalorder %s18, 1
      %p57 = scmp.ne.s32.totalorder %s52, %s54
      %p58 = scmp.eq.s32.totalorder %s18, 0
      %p59 = por %p57, %p58
      %p60 = scmp.ne.s32.totalorder %s52, %s54
      %p61 = scmp.eq.s32.totalorder %s23, 1
      %p62 = por %p60, %p61
      %p63 = scmp.ne.s32.totalorder %s54, %s55
      %p64 = scmp.eq.s32.totalorder %s23, 0
      %p65 = por %p63, %p64
      %p66 = scmp.ne.s32.totalorder %s54, %s55
      %p67 = scmp.eq.s32.totalorder %s24, 1
      %p68 = por %p66, %p67
      %p70 = scmp.ne.s32.totalorder %s55, %s69
      %p71 = scmp.eq.s32.totalorder %s24, 0
      %p72 = por %p70, %p71
      %s74 = sadd.s32 %s73, 1
      %p77 = scmp.eq.s32.totalorder %s18, 1
      %p78 = scmp.ne.s32.totalorder %s73, %s75
      %p79 = scmp.eq.s32.totalorder %s18, 0
      %p80 = por %p78, %p79
      %p81 = scmp.ne.s32.totalorder %s73, %s75
      %p82 = scmp.eq.s32.totalorder %s23, 1
      %p83 = por %p81, %p82
      %p84 = scmp.ne.s32.totalorder %s75, %s76
      %p85 = scmp.eq.s32.totalorder %s23, 0
      %p86 = por %p84, %p85
      %p87 = scmp.ne.s32.totalorder %s75, %s76
      %p88 = scmp.eq.s32.totalorder %s24, 1
      %p89 = por %p87, %p88
      %p91 = scmp.ne.s32.totalorder %s76, %s90
      %p92 = scmp.eq.s32.totalorder %s24, 0
      %p93 = por %p91, %p92
      %s95 = sadd.s32 %s94, 1
      %p98 = scmp.eq.s32.totalorder %s18, 1
      %p99 = scmp.ne.s32.totalorder %s94, %s96
      %p100 = scmp.eq.s32.totalorder %s18, 0
      %p101 = por %p99, %p100
      %p102 = scmp.ne.s32.totalorder %s94, %s96
      %p103 = scmp.eq.s32.totalorder %s23, 1
      %p104 = por %p102, %p103
      %p105 = scmp.ne.s32.totalorder %s96, %s97
      %p106 = scmp.eq.s32.totalorder %s23, 0
      %p107 = por %p105, %p106
      %p108 = scmp.ne.s32.totalorder %s96, %s97
      %p109 = scmp.eq.s32.totalorder %s24, 1
      %p110 = por %p108, %p109
      %p112 = scmp.ne.s32.totalorder %s97, %s111
      %p113 = scmp.eq.s32.totalorder %s24, 0
      %p114 = por %p112, %p113
      %s116 = sadd.s32 %s115, 1
      %p119 = scmp.eq.s32.totalorder %s18, 1
      %p120 = scmp.ne.s32.totalorder %s115, %s117
      %p121 = scmp.eq.s32.totalorder %s18, 0
      %p122 = por %p120, %p121
      %p123 = scmp.ne.s32.totalorder %s115, %s117
      %p124 = scmp.eq.s32.totalorder %s23, 1
      %p125 = por %p123, %p124
      %p126 = scmp.ne.s32.totalorder %s117, %s118
      %p127 = scmp.eq.s32.totalorder %s23, 0
      %p128 = por %p126, %p127
      %p129 = scmp.ne.s32.totalorder %s117, %s118
      %p130 = scmp.eq.s32.totalorder %s24, 1
      %p131 = por %p129, %p130
      %p133 = scmp.ne.s32.totalorder %s118, %s132
      %p134 = scmp.eq.s32.totalorder %s24, 0
      %p135 = por %p133, %p134
      %s137 = sadd.s32 %s136, 1
      %p140 = scmp.eq.s32.totalorder %s18, 1
      %p141 = scmp.ne.s32.totalorder %s136, %s138
      %p142 = scmp.eq.s32.totalorder %s18, 0
      %p143 = por %p141, %p142
      %p144 = scmp.ne.s32.totalorder %s136, %s138
      %p145 = scmp.eq.s32.totalorder %s23, 1
      %p146 = por %p144, %p145
      %p147 = scmp.ne.s32.totalorder %s138, %s139
      %p148 = scmp.eq.s32.totalorder %s23, 0
      %p149 = por %p147, %p148
      %p150 = scmp.ne.s32.totalorder %s138, %s139
      %p151 = scmp.eq.s32.totalorder %s24, 1
      %p152 = por %p150, %p151
      %p154 = scmp.ne.s32.totalorder %s139, %s153
      %p155 = scmp.eq.s32.totalorder %s24, 0
      %p156 = por %p154, %p155
      %s157 = ssub.s32 %s18, %s25
      %p158 = scmp.eq.s32.totalorder %s157, 0
      %s160 = sadd.s32 %s159, 1
      %s161 = scalar_select %p158, %s159, %s160
      %p164 = pneg %p158
      %p165 = scmp.eq.s32.totalorder %s18, 1
      %p166 = por %p164, %p165
      %p167 = scmp.ne.s32.totalorder %s159, %s162
      %p168 = scmp.eq.s32.totalorder %s18, 0
      %p169 = por %p167, %p168
      %p170 = scmp.ne.s32.totalorder %s159, %s162
      %p171 = scmp.eq.s32.totalorder %s23, 1
      %p172 = por %p170, %p171
      %p173 = scmp.ne.s32.totalorder %s162, %s163
      %p174 = scmp.eq.s32.totalorder %s23, 0
      %p175 = por %p173, %p174
      %p176 = scmp.ne.s32.totalorder %s162, %s163
      %p177 = scmp.eq.s32.totalorder %s24, 1
      %p178 = por %p176, %p177
      %p180 = scmp.ne.s32.totalorder %s163, %s179
      %p181 = scmp.eq.s32.totalorder %s24, 0
      %p182 = por %p180, %p181
      %s183 = ssub.s32 %s18, %s25
      %p184 = scmp.eq.s32.totalorder %s183, 0
      %s186 = sadd.s32 %s185, 1
      %s187 = scalar_select %p184, %s185, %s186
      %p190 = pneg %p184
      %p191 = scmp.eq.s32.totalorder %s18, 1
      %p192 = por %p190, %p191
      %p193 = scmp.ne.s32.totalorder %s185, %s188
      %p194 = scmp.eq.s32.totalorder %s18, 0
      %p195 = por %p193, %p194
      %p196 = scmp.ne.s32.totalorder %s185, %s188
      %p197 = scmp.eq.s32.totalorder %s23, 1
      %p198 = por %p196, %p197
      %p199 = scmp.ne.s32.totalorder %s188, %s189
      %p200 = scmp.eq.s32.totalorder %s23, 0
      %p201 = por %p199, %p200
      %p202 = scmp.ne.s32.totalorder %s188, %s189
      %p203 = scmp.eq.s32.totalorder %s24, 1
      %p204 = por %p202, %p203
      %p206 = scmp.ne.s32.totalorder %s189, %s205
      %p207 = scmp.eq.s32.totalorder %s24, 0
      %p208 = por %p206, %p207
      %s209 = ssub.s32 %s18, %s25
      %p210 = scmp.eq.s32.totalorder %s209, 0
      %s212 = sadd.s32 %s211, 1
      %s213 = scalar_select %p210, %s211, %s212
      %p216 = pneg %p210
      %p217 = scmp.eq.s32.totalorder %s18, 1
      %p218 = por %p216, %p217
      %p219 = scmp.ne.s32.totalorder %s211, %s214
      %p220 = scmp.eq.s32.totalorder %s18, 0
      %p221 = por %p219, %p220
      %p222 = scmp.ne.s32.totalorder %s211, %s214
      %p223 = scmp.eq.s32.totalorder %s23, 1
      %p224 = por %p222, %p223
      %p225 = scmp.ne.s32.totalorder %s214, %s215
      %p226 = scmp.eq.s32.totalorder %s23, 0
      %p227 = por %p225, %p226
      %p228 = scmp.ne.s32.totalorder %s214, %s215
      %p229 = scmp.eq.s32.totalorder %s24, 1
      %p230 = por %p228, %p229
      %p232 = scmp.ne.s32.totalorder %s215, %s231
      %p233 = scmp.eq.s32.totalorder %s24, 0
      %p234 = por %p232, %p233
      %p235 = scmp.le.s32.totalorder 1, %s18
      %p236 = scmp.lt.s32.totalorder %s18, 3
      %p237 = pnand %p235, %p236
      %p238 = pneg %p237
      // Predicated region
      $region9: #{tpu_custom_call.1} parent=5 // pred_check
        _
      $region10: #{tpu_custom_call.1} parent=5 // pred_check_branch
        %240 = sbr.rel (%p237) target = $region12
      $region11: #{tpu_custom_call.1} parent=5 // pred_region
        %s241 = ssub.s32 %s18, 1
        // Predicated region
        $region13: #{tpu_custom_call.1} parent=11 // pred_check
          %p242 = pneg %p65
        $region14: #{tpu_custom_call.1} parent=11 // pred_check_branch
          %244 = sbr.rel (%p242) target = $region16
        $region15: #{tpu_custom_call.1} parent=11 // pred_region
          _
        $region16: #{tpu_custom_call.1} parent=11 // pred_fallthru
          _
        // Predicated region
        $region17: #{tpu_custom_call.1} parent=11 // pred_check
          %p245 = pneg %p86
        $region18: #{tpu_custom_call.1} parent=11 // pred_check_branch
          %247 = sbr.rel (%p245) target = $region20
        $region19: #{tpu_custom_call.1} parent=11 // pred_region
          _
        $region20: #{tpu_custom_call.1} parent=11 // pred_fallthru
          _
        // Predicated region
        $region21: #{tpu_custom_call.1} parent=11 // pred_check
          %p248 = pneg %p107
        $region22: #{tpu_custom_call.1} parent=11 // pred_check_branch
          %250 = sbr.rel (%p248) target = $region24
        $region23: #{tpu_custom_call.1} parent=11 // pred_region
          _
        $region24: #{tpu_custom_call.1} parent=11 // pred_fallthru
          _
        // Predicated region
        $region25: #{tpu_custom_call.1} parent=11 // pred_check
          %p251 = pneg %p128
        $region26: #{tpu_custom_call.1} parent=11 // pred_check_branch
          %253 = sbr.rel (%p251) target = $region28
        $region27: #{tpu_custom_call.1} parent=11 // pred_region
          _
        $region28: #{tpu_custom_call.1} parent=11 // pred_fallthru
          _
        // Predicated region
        $region29: #{tpu_custom_call.1} parent=11 // pred_check
          %p254 = pneg %p149
        $region30: #{tpu_custom_call.1} parent=11 // pred_check_branch
          %256 = sbr.rel (%p254) target = $region32
        $region31: #{tpu_custom_call.1} parent=11 // pred_region
          _
        $region32: #{tpu_custom_call.1} parent=11 // pred_fallthru
          _
      $region12: #{tpu_custom_call.1} parent=5 // pred_fallthru
        _
      %p257 = scmp.lt.s32.totalorder %s18, 2
      // Predicated region
      $region33: #{tpu_custom_call.1} parent=5 // pred_check
        %p258 = pneg %p257
      $region34: #{tpu_custom_call.1} parent=5 // pred_check_branch
        %260 = sbr.rel (%p258) target = $region36
      $region35: #{tpu_custom_call.1} parent=5 // pred_region
        // Predicated region
        $region37: #{tpu_custom_call.1} parent=35 // pred_check
          %p261 = pneg %p38
        $region38: #{tpu_custom_call.1} parent=35 // pred_check_branch
          %263 = sbr.rel (%p261) target = $region40
        $region39: #{tpu_custom_call.1} parent=35 // pred_region
          %p264 = scmp.lt.s32.totalorder %s18, 1
          %s265 = scalar_select %p264, %s18, 1
          %s266 = smul.addr %s265, 8
          %s267 = smul.addr %s266, 4
          %s268 = scalar_lea.vmem %s0, %s267
        $region40: #{tpu_custom_call.1} parent=35 // pred_fallthru
          _
      $region36: #{tpu_custom_call.1} parent=5 // pred_fallthru
        _
      %p269 = scmp.le.s32.totalorder 1, %s18
      %p270 = scmp.lt.s32.totalorder %s18, 3
      %p271 = pnand %p269, %p270
      %p272 = pneg %p271
      // Predicated region
      $region41: #{tpu_custom_call.1} parent=5 // pred_check
        _
      $region42: #{tpu_custom_call.1} parent=5 // pred_check_branch
        %274 = sbr.rel (%p271) target = $region44
      $region43: #{tpu_custom_call.1} parent=5 // pred_region
        %s275 = ssub.s32 %s18, 1
        %p276 = scmp.lt.s32.totalorder %s23, 1
        %s277 = scalar_select %p276, %s23, 1
        %s278 = smul.addr %s277, 8
        %s279 = smul.addr %s278, 4
        %s280 = scalar_lea.vmem %s0, %s279
        %p281 = pneg %p44
        %p282 = pneg %p41
        %p283 = pneg %p65
        %p284 = pneg %p62
        %p285 = pneg %p86
        %p286 = pneg %p83
        %p287 = pneg %p107
        %p288 = pneg %p104
        %p289 = pneg %p128
        %p290 = pneg %p125
        %p291 = pneg %p149
        %p292 = pneg %p146
        %p293 = pneg %p175
        %p294 = pneg %p172
        %s295 = sand.u32 %s162, 1
        %s296 = scalar_lea.sflag [#allocation3], %s295
        %s297 = sand.u32 %s162, 1
        %s298 = smul.addr %s297, 32
        %s299 = scalar_lea.vmem [#allocation2], %s298
        %p300 = pneg %p201
        %p301 = pneg %p198
        %p302 = scmp.lt.s32.totalorder %s23, 1
        %s303 = scalar_select %p302, %s23, 1
        %s304 = smul.addr %s303, 8
        %s305 = scalar_lea.vmem %s7, %s304
        %p306 = pneg %p227
        %p307 = pneg %p224
        %p308 = scmp.lt.s32.totalorder %s23, 1
        %s309 = scalar_select %p308, %s23, 1
        %s310 = smul.addr %s309, 8
        %s311 = scalar_lea.vmem %s8, %s310
        %p312 = scmp.lt.s32.totalorder %s23, 1
        %s313 = scalar_select %p312, %s23, 1
        %s314 = smul.addr %s313, 8
        %s315 = smul.addr %s314, 4
        %s316 = scalar_lea.vmem %s0, %s315
        %p317 = scmp.lt.s32.totalorder %s23, 1
        %s318 = scalar_select %p317, %s23, 1
        %s319 = smul.addr %s318, 8
        %s320 = scalar_lea.vmem %s7, %s319
        %p321 = scmp.lt.s32.totalorder %s23, 1
        %s322 = scalar_select %p321, %s23, 1
        %s323 = smul.addr %s322, 8
        %s324 = scalar_lea.vmem %s8, %s323
        %v326 = vld [vmem:[%s316] sm:$0xff]
        %v327 = vld [vmem:[%s316 + $0x8] sm:$0xff]
        %v328 = vld [vmem:[%s316 + $0x10] sm:$0xff]
        %v329 = vld [vmem:[%s316 + $0x18] sm:$0xff]
        %v330 = vunpack.c.l.bf16 %v326
        %v331 = vunpack.c.h.bf16 %v326
        %v332 = vunpack.c.l.bf16 %v327
        %v333 = vunpack.c.h.bf16 %v327
        %v334 = vunpack.c.l.bf16 %v328
        %v335 = vunpack.c.h.bf16 %v328
        %v336 = vunpack.c.l.bf16 %v329
        %v337 = vunpack.c.h.bf16 %v329
        %v338 = vld [vmem:[%s2] sm:$0xff]
        %340 = vset.pattern.permute.xlu0 0
        %341 = vperm.xlu0 %340, %v338
        %v342 = vpop.permute.xlu0 %341
        %v344 = vmul.f32 %v330, %v342
        %v345 = vmul.f32 %v331, %v342
        %v346 = vmul.f32 %v332, %v342
        %v347 = vmul.f32 %v333, %v342
        %v348 = vmul.f32 %v334, %v342
        %v349 = vmul.f32 %v335, %v342
        %v350 = vmul.f32 %v336, %v342
        %v351 = vmul.f32 %v337, %v342
        %v352 = vld [vmem:[%s3] sm:$0xff]
        %354 = vset.pattern.permute.xlu0 0
        %355 = vperm.xlu0 %354, %v352
        %v356 = vpop.permute.xlu0 %355
        %v358 = vadd.f32 %v344, %v356
        %v359 = vadd.f32 %v345, %v356
        %v360 = vadd.f32 %v346, %v356
        %v361 = vadd.f32 %v347, %v356
        %v362 = vadd.f32 %v348, %v356
        %v363 = vadd.f32 %v349, %v356
        %v364 = vadd.f32 %v350, %v356
        %v365 = vadd.f32 %v351, %v356
        %v366 = vmax.f32 %v358, 0.0
        %v367 = vmax.f32 %v359, 0.0
        %v368 = vmax.f32 %v360, 0.0
        %v369 = vmax.f32 %v361, 0.0
        %v370 = vmax.f32 %v362, 0.0
        %v371 = vmax.f32 %v363, 0.0
        %v372 = vmax.f32 %v364, 0.0
        %v373 = vmax.f32 %v365, 0.0
        %v374 = vld [vmem:[%s4] sm:$0xf]
        %v375 = vld [vmem:[%s4 + $0x4] sm:$0xf]
        %v376 = vld [vmem:[%s4 + $0x8] sm:$0xf]
        %v377 = vld [vmem:[%s4 + $0xc] sm:$0xf]
        %v378 = vld [vmem:[%s4 + $0x10] sm:$0xf]
        %v379 = vld [vmem:[%s4 + $0x14] sm:$0xf]
        %v380 = vld [vmem:[%s4 + $0x18] sm:$0xf]
        %v381 = vld [vmem:[%s4 + $0x1c] sm:$0xf]
        %v382 = vld [vmem:[%s4 + $0x20] sm:$0xf]
        %383 = vrot.lane.b32.xlu0 %v366, 33
        %v384 = vpop.permute.xlu0 %383
        %385 = vrot.lane.b32.xlu0 %v367, 33
        %v386 = vpop.permute.xlu0 %385
        %387 = vrot.lane.b32.xlu0 %v368, 33
        %v388 = vpop.permute.xlu0 %387
        %389 = vrot.lane.b32.xlu0 %v369, 33
        %v390 = vpop.permute.xlu0 %389
        %391 = vrot.lane.b32.xlu0 %v370, 33
        %v392 = vpop.permute.xlu0 %391
        %393 = vrot.lane.b32.xlu0 %v371, 33
        %v394 = vpop.permute.xlu0 %393
        %395 = vrot.lane.b32.xlu0 %v372, 33
        %v396 = vpop.permute.xlu0 %395
        %397 = vrot.lane.b32.xlu0 %v373, 33
        %v398 = vpop.permute.xlu0 %397
        %v399 = vlaneseq
        %v400 = vand.u32 %v399, 127
        %vm401 = vcmp.lt.s32.totalorder %v400, 33
        %v402 = vsel %vm401, %v396, %v398
        %v403 = vsel %vm401, %v394, %v396
        %v404 = vsel %vm401, %v392, %v394
        %v405 = vsel %vm401, %v390, %v392
        %v406 = vsel %vm401, %v388, %v390
        %v407 = vsel %vm401, %v386, %v388
        %v408 = vsel %vm401, %v384, %v386
        %v409 = vsel %vm401, %v398, %v384
        %v410 = vld [vmem:[%s1] sm:$0xff]
        %s411 = scalar_lea.vmem %s1, 16
        %v412 = vld [vmem:[%s411] sm:$0xff]
        %v413 = vmul.f32 %v410, %v412
        %v415 = vlaneseq
        %v416 = vshrl.u32 %v415, 7
        %v417 = vsub.s32 0, %v416
        %v418 = vrot.slane %v413, %v417
        %v419 = vlaneseq
        %v420 = vshrl.u32 %v419, 7
        %v421 = vsub.s32 1, %v420
        %v422 = vrot.slane %v413, %v421
        %v423 = vlaneseq
        %v424 = vshrl.u32 %v423, 7
        %v425 = vsub.s32 2, %v424
        %v426 = vrot.slane %v413, %v425
        %v427 = vlaneseq
        %v428 = vshrl.u32 %v427, 7
        %v429 = vsub.s32 3, %v428
        %v430 = vrot.slane %v413, %v429
        %v431 = vlaneseq
        %v432 = vshrl.u32 %v431, 7
        %v433 = vsub.s32 4, %v432
        %v434 = vrot.slane %v413, %v433
        %v435 = vlaneseq
        %v436 = vshrl.u32 %v435, 7
        %v437 = vsub.s32 5, %v436
        %v438 = vrot.slane %v413, %v437
        %v439 = vlaneseq
        %v440 = vshrl.u32 %v439, 7
        %v441 = vsub.s32 6, %v440
        %v442 = vrot.slane %v413, %v441
        %v443 = vlaneseq
        %v444 = vshrl.u32 %v443, 7
        %v445 = vsub.s32 7, %v444
        %v446 = vrot.slane %v413, %v445
        %v455 = vmul.f32 %v409, %v418
        %v456 = vmul.f32 %v408, %v422
        %v457 = vmul.f32 %v407, %v426
        %v458 = vmul.f32 %v406, %v430
        %v459 = vmul.f32 %v405, %v434
        %v460 = vmul.f32 %v404, %v438
        %v461 = vmul.f32 %v403, %v442
        %v462 = vmul.f32 %v402, %v446
        %v463 = vpack.c.bf16 %v455, %v455
        %v464 = vpack.c.bf16 %v456, %v456
        %v465 = vpack.c.bf16 %v457, %v457
        %v466 = vpack.c.bf16 %v458, %v458
        %v467 = vpack.c.bf16 %v459, %v459
        %v468 = vpack.c.bf16 %v460, %v460
        %v469 = vpack.c.bf16 %v461, %v461
        %v470 = vpack.c.bf16 %v462, %v462
        %471 = vrot.lane.b32.xlu0 %v366, 32
        %v472 = vpop.permute.xlu0 %471
        %473 = vrot.lane.b32.xlu0 %v367, 32
        %v474 = vpop.permute.xlu0 %473
        %475 = vrot.lane.b32.xlu0 %v368, 32
        %v476 = vpop.permute.xlu0 %475
        %477 = vrot.lane.b32.xlu0 %v369, 32
        %v478 = vpop.permute.xlu0 %477
        %479 = vrot.lane.b32.xlu0 %v370, 32
        %v480 = vpop.permute.xlu0 %479
        %481 = vrot.lane.b32.xlu0 %v371, 32
        %v482 = vpop.permute.xlu0 %481
        %483 = vrot.lane.b32.xlu0 %v372, 32
        %v484 = vpop.permute.xlu0 %483
        %485 = vrot.lane.b32.xlu0 %v373, 32
        %v486 = vpop.permute.xlu0 %485
        %vm487 = vcmp.lt.s32.totalorder %v400, 32
        %v488 = vsel %vm487, %v484, %v486
        %v489 = vsel %vm487, %v482, %v484
        %v490 = vsel %vm487, %v480, %v482
        %v491 = vsel %vm487, %v478, %v480
        %v492 = vsel %vm487, %v476, %v478
        %v493 = vsel %vm487, %v474, %v476
        %v494 = vsel %vm487, %v472, %v474
        %v495 = vsel %vm487, %v486, %v472
        %v497 = vlaneseq
        %v498 = vshrl.u32 %v497, 7
        %v499 = vsub.s32 0, %v498
        %v500 = vrot.slane %v410, %v499
        %v501 = vlaneseq
        %v502 = vshrl.u32 %v501, 7
        %v503 = vsub.s32 1, %v502
        %v504 = vrot.slane %v410, %v503
        %v505 = vlaneseq
        %v506 = vshrl.u32 %v505, 7
        %v507 = vsub.s32 2, %v506
        %v508 = vrot.slane %v410, %v507
        %v509 = vlaneseq
        %v510 = vshrl.u32 %v509, 7
        %v511 = vsub.s32 3, %v510
        %v512 = vrot.slane %v410, %v511
        %v513 = vlaneseq
        %v514 = vshrl.u32 %v513, 7
        %v515 = vsub.s32 4, %v514
        %v516 = vrot.slane %v410, %v515
        %v517 = vlaneseq
        %v518 = vshrl.u32 %v517, 7
        %v519 = vsub.s32 5, %v518
        %v520 = vrot.slane %v410, %v519
        %v521 = vlaneseq
        %v522 = vshrl.u32 %v521, 7
        %v523 = vsub.s32 6, %v522
        %v524 = vrot.slane %v410, %v523
        %v525 = vlaneseq
        %v526 = vshrl.u32 %v525, 7
        %v527 = vsub.s32 7, %v526
        %v528 = vrot.slane %v410, %v527
        %v537 = vmul.f32 %v495, %v500
        %v538 = vmul.f32 %v494, %v504
        %v539 = vmul.f32 %v493, %v508
        %v540 = vmul.f32 %v492, %v512
        %v541 = vmul.f32 %v491, %v516
        %v542 = vmul.f32 %v490, %v520
        %v543 = vmul.f32 %v489, %v524
        %v544 = vmul.f32 %v488, %v528
        %v545 = vpack.c.bf16 %v537, %v537
        %v546 = vpack.c.bf16 %v538, %v538
        %v547 = vpack.c.bf16 %v539, %v539
        %v548 = vpack.c.bf16 %v540, %v540
        %v549 = vpack.c.bf16 %v541, %v541
        %v550 = vpack.c.bf16 %v542, %v542
        %v551 = vpack.c.bf16 %v543, %v543
        %v552 = vpack.c.bf16 %v544, %v544
        %vm553 = vcmask 64512
        %v555 = vsel %vm553, %v375, 0
        %vm557 = vcmask 1043456
        %v559 = vsel %vm557, %v545, 0
        %v562 = vsel %vm557, %v546, 0
        %v565 = vsel %vm557, %v547, 0
        %v568 = vsel %vm557, %v548, 0
        %v571 = vsel %vm557, %v549, 0
        %v574 = vsel %vm557, %v550, 0
        %v577 = vsel %vm557, %v551, 0
        %v580 = vsel %vm557, %v552, 0
        %582 = vmatprep.subr.bf16.mxu0 %v562
        %583 = vmatpush1.bf16.msra.mxu0 %v559
        %584 = vmatprep.subr.bf16.mxu0 0
        %585 = vmatpush1.bf16.msra.mxu0 0
        %586 = vmatprep.subr.bf16.mxu0 0
        %587 = vmatpush1.bf16.msra.mxu0 0
        %588 = vmatprep.subr.bf16.mxu0 0
        %589 = vmatpush1.bf16.msra.mxu0 0
        %590 = vmatprep.subr.bf16.mxu0 0
        %591 = vmatpush1.bf16.msra.mxu0 0
        %592 = vmatprep.subr.bf16.mxu0 0
        %593 = vmatpush1.bf16.msra.mxu0 0
        %594 = vmatprep.subr.bf16.mxu0 0
        %595 = vmatpush1.bf16.msra.mxu0 0
        %596 = vmatprep.subr.bf16.mxu0 0
        %597 = vmatpush1.bf16.msra.mxu0 0
        %598 = vmatprep.subr.bf16.mxu0 0
        %599 = vmatpush1.bf16.msra.mxu0 0
        %600 = vmatprep.subr.bf16.mxu0 0
        %601 = vmatpush1.bf16.msra.mxu0 0
        %602 = vmatprep.subr.bf16.mxu0 0
        %603 = vmatpush1.bf16.msra.mxu0 0
        %604 = vmatprep.subr.bf16.mxu0 0
        %605 = vmatpush1.bf16.msra.mxu0 0
        %606 = vmatprep.subr.bf16.mxu0 0
        %607 = vmatpush1.bf16.msra.mxu0 0
        %608 = vmatprep.subr.bf16.mxu0 0
        %609 = vmatpush1.bf16.msra.mxu0 0
        %610 = vmatprep.subr.bf16.mxu0 0
        %611 = vmatpush1.bf16.msra.mxu0 0
        %612 = vmatprep.subr.bf16.mxu0 0
        %613 = vmatpush1.bf16.msra.mxu0 0
        %614 = vmatprep.mubr.bf16.mxu0 0
        %615 = vmatmul.mubr.bf16.gmra.mrb[0].mxu0 %v555
        %v616 = vpop.f32.mrb[0].mxu0
        %v617 = vadd.f32 0.0, %v616
        %v618 = vpop.f32.mrb[0].mxu0
        %v619 = vadd.f32 0.0, %v618
        %v620 = vpop.f32.mrb[0].mxu0
        %v621 = vpop.f32.mrb[0].mxu0
        %622 = vdwg.mxu0
        %623 = vmatprep.subr.bf16.mxu0 %v568
        %624 = vmatpush1.bf16.msra.mxu0 %v565
        %625 = vmatprep.subr.bf16.mxu0 0
        %626 = vmatpush1.bf16.msra.mxu0 0
        %627 = vmatprep.subr.bf16.mxu0 0
        %628 = vmatpush1.bf16.msra.mxu0 0
        %629 = vmatprep.subr.bf16.mxu0 0
        %630 = vmatpush1.bf16.msra.mxu0 0
        %631 = vmatprep.subr.bf16.mxu0 0
        %632 = vmatpush1.bf16.msra.mxu0 0
        %633 = vmatprep.subr.bf16.mxu0 0
        %634 = vmatpush1.bf16.msra.mxu0 0
        %635 = vmatprep.subr.bf16.mxu0 0
        %636 = vmatpush1.bf16.msra.mxu0 0
        %637 = vmatprep.subr.bf16.mxu0 0
        %638 = vmatpush1.bf16.msra.mxu0 0
        %639 = vmatprep.subr.bf16.mxu0 0
        %640 = vmatpush1.bf16.msra.mxu0 0
        %641 = vmatprep.subr.bf16.mxu0 0
        %642 = vmatpush1.bf16.msra.mxu0 0
        %643 = vmatprep.subr.bf16.mxu0 0
        %644 = vmatpush1.bf16.msra.mxu0 0
        %645 = vmatprep.subr.bf16.mxu0 0
        %646 = vmatpush1.bf16.msra.mxu0 0
        %647 = vmatprep.subr.bf16.mxu0 0
        %648 = vmatpush1.bf16.msra.mxu0 0
        %649 = vmatprep.subr.bf16.mxu0 0
        %650 = vmatpush1.bf16.msra.mxu0 0
        %651 = vmatprep.subr.bf16.mxu0 0
        %652 = vmatpush1.bf16.msra.mxu0 0
        %653 = vmatprep.subr.bf16.mxu0 0
        %654 = vmatpush1.bf16.msra.mxu0 0
        %655 = vmatprep.mubr.bf16.mxu0 0
        %656 = vmatmul.mubr.bf16.gmra.mrb[0].mxu0 %v555
        %v657 = vpop.f32.mrb[0].mxu0
        %v658 = vadd.f32 0.0, %v657
        %v659 = vpop.f32.mrb[0].mxu0
        %v660 = vadd.f32 0.0, %v659
        %v661 = vpop.f32.mrb[0].mxu0
        %v662 = vpop.f32.mrb[0].mxu0
        %663 = vdwg.mxu0
        %664 = vmatprep.subr.bf16.mxu0 %v574
        %665 = vmatpush1.bf16.msra.mxu0 %v571
        %666 = vmatprep.subr.bf16.mxu0 0
        %667 = vmatpush1.bf16.msra.mxu0 0
        %668 = vmatprep.subr.bf16.mxu0 0
        %669 = vmatpush1.bf16.msra.mxu0 0
        %670 = vmatprep.subr.bf16.mxu0 0
        %671 = vmatpush1.bf16.msra.mxu0 0
        %672 = vmatprep.subr.bf16.mxu0 0
        %673 = vmatpush1.bf16.msra.mxu0 0
        %674 = vmatprep.subr.bf16.mxu0 0
        %675 = vmatpush1.bf16.msra.mxu0 0
        %676 = vmatprep.subr.bf16.mxu0 0
        %677 = vmatpush1.bf16.msra.mxu0 0
        %678 = vmatprep.subr.bf16.mxu0 0
        %679 = vmatpush1.bf16.msra.mxu0 0
        %680 = vmatprep.subr.bf16.mxu0 0
        %681 = vmatpush1.bf16.msra.mxu0 0
        %682 = vmatprep.subr.bf16.mxu0 0
        %683 = vmatpush1.bf16.msra.mxu0 0
        %684 = vmatprep.subr.bf16.mxu0 0
        %685 = vmatpush1.bf16.msra.mxu0 0
        %686 = vmatprep.subr.bf16.mxu0 0
        %687 = vmatpush1.bf16.msra.mxu0 0
        %688 = vmatprep.subr.bf16.mxu0 0
        %689 = vmatpush1.bf16.msra.mxu0 0
        %690 = vmatprep.subr.bf16.mxu0 0
        %691 = vmatpush1.bf16.msra.mxu0 0
        %692 = vmatprep.subr.bf16.mxu0 0
        %693 = vmatpush1.bf16.msra.mxu0 0
        %694 = vmatprep.subr.bf16.mxu0 0
        %695 = vmatpush1.bf16.msra.mxu0 0
        %696 = vmatprep.mubr.bf16.mxu0 0
        %697 = vmatmul.mubr.bf16.gmra.mrb[0].mxu0 %v555
        %v698 = vpop.f32.mrb[0].mxu0
        %v699 = vadd.f32 0.0, %v698
        %v700 = vpop.f32.mrb[0].mxu0
        %v701 = vadd.f32 0.0, %v700
        %v702 = vpop.f32.mrb[0].mxu0
        %v703 = vpop.f32.mrb[0].mxu0
        %704 = vdwg.mxu0
        %705 = vmatprep.subr.bf16.mxu0 %v580
        %706 = vmatpush1.bf16.msra.mxu0 %v577
        %707 = vmatprep.subr.bf16.mxu0 0
        %708 = vmatpush1.bf16.msra.mxu0 0
        %709 = vmatprep.subr.bf16.mxu0 0
        %710 = vmatpush1.bf16.msra.mxu0 0
        %711 = vmatprep.subr.bf16.mxu0 0
        %712 = vmatpush1.bf16.msra.mxu0 0
        %713 = vmatprep.subr.bf16.mxu0 0
        %714 = vmatpush1.bf16.msra.mxu0 0
        %715 = vmatprep.subr.bf16.mxu0 0
        %716 = vmatpush1.bf16.msra.mxu0 0
        %717 = vmatprep.subr.bf16.mxu0 0
        %718 = vmatpush1.bf16.msra.mxu0 0
        %719 = vmatprep.subr.bf16.mxu0 0
        %720 = vmatpush1.bf16.msra.mxu0 0
        %721 = vmatprep.subr.bf16.mxu0 0
        %722 = vmatpush1.bf16.msra.mxu0 0
        %723 = vmatprep.subr.bf16.mxu0 0
        %724 = vmatpush1.bf16.msra.mxu0 0
        %725 = vmatprep.subr.bf16.mxu0 0
        %726 = vmatpush1.bf16.msra.mxu0 0
        %727 = vmatprep.subr.bf16.mxu0 0
        %728 = vmatpush1.bf16.msra.mxu0 0
        %729 = vmatprep.subr.bf16.mxu0 0
        %730 = vmatpush1.bf16.msra.mxu0 0
        %731 = vmatprep.subr.bf16.mxu0 0
        %732 = vmatpush1.bf16.msra.mxu0 0
        %733 = vmatprep.subr.bf16.mxu0 0
        %734 = vmatpush1.bf16.msra.mxu0 0
        %735 = vmatprep.subr.bf16.mxu0 0
        %736 = vmatpush1.bf16.msra.mxu0 0
        %737 = vmatprep.mubr.bf16.mxu0 0
        %738 = vmatmul.mubr.bf16.gmra.mrb[0].mxu0 %v555
        %v739 = vpop.f32.mrb[0].mxu0
        %v740 = vadd.f32 0.0, %v739
        %v741 = vpop.f32.mrb[0].mxu0
        %v742 = vadd.f32 0.0, %v741
        %v743 = vpop.f32.mrb[0].mxu0
        %v744 = vpop.f32.mrb[0].mxu0
        %745 = vdwg.mxu0
        %v747 = vsel %vm553, %v374, 0
        %v750 = vsel %vm557, %v463, 0
        %v753 = vsel %vm557, %v464, 0
        %v756 = vsel %vm557, %v465, 0
        %v759 = vsel %vm557, %v466, 0
        %v762 = vsel %vm557, %v467, 0
        %v765 = vsel %vm557, %v468, 0
        %v768 = vsel %vm557, %v469, 0
        %v771 = vsel %vm557, %v470, 0
        %773 = vmatprep.subr.bf16.mxu0 %v753
        %774 = vmatpush1.bf16.msra.mxu0 %v750
        %775 = vmatprep.subr.bf16.mxu0 0
        %776 = vmatpush1.bf16.msra.mxu0 0
        %777 = vmatprep.subr.bf16.mxu0 0
        %778 = vmatpush1.bf16.msra.mxu0 0
        %779 = vmatprep.subr.bf16.mxu0 0
        %780 = vmatpush1.bf16.msra.mxu0 0
        %781 = vmatprep.subr.bf16.mxu0 0
        %782 = vmatpush1.bf16.msra.mxu0 0
        %783 = vmatprep.subr.bf16.mxu0 0
        %784 = vmatpush1.bf16.msra.mxu0 0
        %785 = vmatprep.subr.bf16.mxu0 0
        %786 = vmatpush1.bf16.msra.mxu0 0
        %787 = vmatprep.subr.bf16.mxu0 0
        %788 = vmatpush1.bf16.msra.mxu0 0
        %789 = vmatprep.subr.bf16.mxu0 0
        %790 = vmatpush1.bf16.msra.mxu0 0
        %791 = vmatprep.subr.bf16.mxu0 0
        %792 = vmatpush1.bf16.msra.mxu0 0
        %793 = vmatprep.subr.bf16.mxu0 0
        %794 = vmatpush1.bf16.msra.mxu0 0
        %795 = vmatprep.subr.bf16.mxu0 0
        %796 = vmatpush1.bf16.msra.mxu0 0
        %797 = vmatprep.subr.bf16.mxu0 0
        %798 = vmatpush1.bf16.msra.mxu0 0
        %799 = vmatprep.subr.bf16.mxu0 0
        %800 = vmatpush1.bf16.msra.mxu0 0
        %801 = vmatprep.subr.bf16.mxu0 0
        %802 = vmatpush1.bf16.msra.mxu0 0
        %803 = vmatprep.subr.bf16.mxu0 0
        %804 = vmatpush1.bf16.msra.mxu0 0
        %805 = vmatprep.mubr.bf16.mxu0 0
        %806 = vmatmul.mubr.bf16.gmra.mrb[0].mxu0 %v747
        %v807 = vpop.f32.mrb[0].mxu0
        %v808 = vadd.f32 %v617, %v807
        %v809 = vpop.f32.mrb[0].mxu0
        %v810 = vadd.f32 %v619, %v809
        %v811 = vpop.f32.mrb[0].mxu0
        %v812 = vpop.f32.mrb[0].mxu0
        %813 = vdwg.mxu0
        %814 = vmatprep.subr.bf16.mxu0 %v759
        %815 = vmatpush1.bf16.msra.mxu0 %v756
        %816 = vmatprep.subr.bf16.mxu0 0
        %817 = vmatpush1.bf16.msra.mxu0 0
        %818 = vmatprep.subr.bf16.mxu0 0
        %819 = vmatpush1.bf16.msra.mxu0 0
        %820 = vmatprep.subr.bf16.mxu0 0
        %821 = vmatpush1.bf16.msra.mxu0 0
        %822 = vmatprep.subr.bf16.mxu0 0
        %823 = vmatpush1.bf16.msra.mxu0 0
        %824 = vmatprep.subr.bf16.mxu0 0
        %825 = vmatpush1.bf16.msra.mxu0 0
        %826 = vmatprep.subr.bf16.mxu0 0
        %827 = vmatpush1.bf16.msra.mxu0 0
        %828 = vmatprep.subr.bf16.mxu0 0
        %829 = vmatpush1.bf16.msra.mxu0 0
        %830 = vmatprep.subr.bf16.mxu0 0
        %831 = vmatpush1.bf16.msra.mxu0 0
        %832 = vmatprep.subr.bf16.mxu0 0
        %833 = vmatpush1.bf16.msra.mxu0 0
        %834 = vmatprep.subr.bf16.mxu0 0
        %835 = vmatpush1.bf16.msra.mxu0 0
        %836 = vmatprep.subr.bf16.mxu0 0
        %837 = vmatpush1.bf16.msra.mxu0 0
        %838 = vmatprep.subr.bf16.mxu0 0
        %839 = vmatpush1.bf16.msra.mxu0 0
        %840 = vmatprep.subr.bf16.mxu0 0
        %841 = vmatpush1.bf16.msra.mxu0 0
        %842 = vmatprep.subr.bf16.mxu0 0
        %843 = vmatpush1.bf16.msra.mxu0 0
        %844 = vmatprep.subr.bf16.mxu0 0
        %845 = vmatpush1.bf16.msra.mxu0 0
        %846 = vmatprep.mubr.bf16.mxu0 0
        %847 = vmatmul.mubr.bf16.gmra.mrb[0].mxu0 %v747
        %v848 = vpop.f32.mrb[0].mxu0
        %v849 = vadd.f32 %v658, %v848
        %v850 = vpop.f32.mrb[0].mxu0
        %v851 = vadd.f32 %v660, %v850
        %v852 = vpop.f32.mrb[0].mxu0
        %v853 = vpop.f32.mrb[0].mxu0
        %854 = vdwg.mxu0
        %855 = vmatprep.subr.bf16.mxu0 %v765
        %856 = vmatpush1.bf16.msra.mxu0 %v762
        %857 = vmatprep.subr.bf16.mxu0 0
        %858 = vmatpush1.bf16.msra.mxu0 0
        %859 = vmatprep.subr.bf16.mxu0 0
        %860 = vmatpush1.bf16.msra.mxu0 0
        %861 = vmatprep.subr.bf16.mxu0 0
        %862 = vmatpush1.bf16.msra.mxu0 0
        %863 = vmatprep.subr.bf16.mxu0 0
        %864 = vmatpush1.bf16.msra.mxu0 0
        %865 = vmatprep.subr.bf16.mxu0 0
        %866 = vmatpush1.bf16.msra.mxu0 0
        %867 = vmatprep.subr.bf16.mxu0 0
        %868 = vmatpush1.bf16.msra.mxu0 0
        %869 = vmatprep.subr.bf16.mxu0 0
        %870 = vmatpush1.bf16.msra.mxu0 0
        %871 = vmatprep.subr.bf16.mxu0 0
        %872 = vmatpush1.bf16.msra.mxu0 0
        %873 = vmatprep.subr.bf16.mxu0 0
        %874 = vmatpush1.bf16.msra.mxu0 0
        %875 = vmatprep.subr.bf16.mxu0 0
        %876 = vmatpush1.bf16.msra.mxu0 0
        %877 = vmatprep.subr.bf16.mxu0 0
        %878 = vmatpush1.bf16.msra.mxu0 0
        %879 = vmatprep.subr.bf16.mxu0 0
        %880 = vmatpush1.bf16.msra.mxu0 0
        %881 = vmatprep.subr.bf16.mxu0 0
        %882 = vmatpush1.bf16.msra.mxu0 0
        %883 = vmatprep.subr.bf16.mxu0 0
        %884 = vmatpush1.bf16.msra.mxu0 0
        %885 = vmatprep.subr.bf16.mxu0 0
        %886 = vmatpush1.bf16.msra.mxu0 0
        %887 = vmatprep.mubr.bf16.mxu0 0
        %888 = vmatmul.mubr.bf16.gmra.mrb[0].mxu0 %v747
        %v889 = vpop.f32.mrb[0].mxu0
        %v890 = vadd.f32 %v699, %v889
        %v891 = vpop.f32.mrb[0].mxu0
        %v892 = vadd.f32 %v701, %v891
        %v893 = vpop.f32.mrb[0].mxu0
        %v894 = vpop.f32.mrb[0].mxu0
        %895 = vdwg.mxu0
        %896 = vmatprep.subr.bf16.mxu0 %v771
        %897 = vmatpush1.bf16.msra.mxu0 %v768
        %898 = vmatprep.subr.bf16.mxu0 0
        %899 = vmatpush1.bf16.msra.mxu0 0
        %900 = vmatprep.subr.bf16.mxu0 0
        %901 = vmatpush1.bf16.msra.mxu0 0
        %902 = vmatprep.subr.bf16.mxu0 0
        %903 = vmatpush1.bf16.msra.mxu0 0
        %904 = vmatprep.subr.bf16.mxu0 0
        %905 = vmatpush1.bf16.msra.mxu0 0
        %906 = vmatprep.subr.bf16.mxu0 0
        %907 = vmatpush1.bf16.msra.mxu0 0
        %908 = vmatprep.subr.bf16.mxu0 0
        %909 = vmatpush1.bf16.msra.mxu0 0
        %910 = vmatprep.subr.bf16.mxu0 0
        %911 = vmatpush1.bf16.msra.mxu0 0
        %912 = vmatprep.subr.bf16.mxu0 0
        %913 = vmatpush1.bf16.msra.mxu0 0
        %914 = vmatprep.subr.bf16.mxu0 0
        %915 = vmatpush1.bf16.msra.mxu0 0
        %916 = vmatprep.subr.bf16.mxu0 0
        %917 = vmatpush1.bf16.msra.mxu0 0
        %918 = vmatprep.subr.bf16.mxu0 0
        %919 = vmatpush1.bf16.msra.mxu0 0
        %920 = vmatprep.subr.bf16.mxu0 0
        %921 = vmatpush1.bf16.msra.mxu0 0
        %922 = vmatprep.subr.bf16.mxu0 0
        %923 = vmatpush1.bf16.msra.mxu0 0
        %924 = vmatprep.subr.bf16.mxu0 0
        %925 = vmatpush1.bf16.msra.mxu0 0
        %926 = vmatprep.subr.bf16.mxu0 0
        %927 = vmatpush1.bf16.msra.mxu0 0
        %928 = vmatprep.mubr.bf16.mxu0 0
        %929 = vmatmul.mubr.bf16.gmra.mrb[0].mxu0 %v747
        %v930 = vpop.f32.mrb[0].mxu0
        %v931 = vadd.f32 %v740, %v930
        %v932 = vpop.f32.mrb[0].mxu0
        %v933 = vadd.f32 %v742, %v932
        %v934 = vpop.f32.mrb[0].mxu0
        %v935 = vpop.f32.mrb[0].mxu0
        %936 = vdwg.mxu0
        %937 = vrot.lane.b32.xlu0 %v366, 31
        %v938 = vpop.permute.xlu0 %937
        %939 = vrot.lane.b32.xlu0 %v367, 31
        %v940 = vpop.permute.xlu0 %939
        %941 = vrot.lane.b32.xlu0 %v368, 31
        %v942 = vpop.permute.xlu0 %941
        %943 = vrot.lane.b32.xlu0 %v369, 31
        %v944 = vpop.permute.xlu0 %943
        %945 = vrot.lane.b32.xlu0 %v370, 31
        %v946 = vpop.permute.xlu0 %945
        %947 = vrot.lane.b32.xlu0 %v371, 31
        %v948 = vpop.permute.xlu0 %947
        %949 = vrot.lane.b32.xlu0 %v372, 31
        %v950 = vpop.permute.xlu0 %949
        %951 = vrot.lane.b32.xlu0 %v373, 31
        %v952 = vpop.permute.xlu0 %951
        %vm953 = vcmp.lt.s32.totalorder %v400, 31
        %v954 = vsel %vm953, %v950, %v952
        %v955 = vsel %vm953, %v948, %v950
        %v956 = vsel %vm953, %v946, %v948
        %v957 = vsel %vm953, %v944, %v946
        %v958 = vsel %vm953, %v942, %v944
        %v959 = vsel %vm953, %v940, %v942
        %v960 = vsel %vm953, %v938, %v940
        %v961 = vsel %vm953, %v952, %v938
        %s962 = scalar_lea.vmem %s1, 24
        %v963 = vld [vmem:[%s962] sm:$0xff]
        %v964 = vmul.f32 %v410, %v963
        %v966 = vlaneseq
        %v967 = vshrl.u32 %v966, 7
        %v968 = vsub.s32 0, %v967
        %v969 = vrot.slane %v964, %v968
        %v970 = vlaneseq
        %v971 = vshrl.u32 %v970, 7
        %v972 = vsub.s32 1, %v971
        %v973 = vrot.slane %v964, %v972
        %v974 = vlaneseq
        %v975 = vshrl.u32 %v974, 7
        %v976 = vsub.s32 2, %v975
        %v977 = vrot.slane %v964, %v976
        %v978 = vlaneseq
        %v979 = vshrl.u32 %v978, 7
        %v980 = vsub.s32 3, %v979
        %v981 = vrot.slane %v964, %v980
        %v982 = vlaneseq
        %v983 = vshrl.u32 %v982, 7
        %v984 = vsub.s32 4, %v983
        %v985 = vrot.slane %v964, %v984
        %v986 = vlaneseq
        %v987 = vshrl.u32 %v986, 7
        %v988 = vsub.s32 5, %v987
        %v989 = vrot.slane %v964, %v988
        %v990 = vlaneseq
        %v991 = vshrl.u32 %v990, 7
        %v992 = vsub.s32 6, %v991
        %v993 = vrot.slane %v964, %v992
        %v994 = vlaneseq
        %v995 = vshrl.u32 %v994, 7
        %v996 = vsub.s32 7, %v995
        %v997 = vrot.slane %v964, %v996
        %v1006 = vmul.f32 %v961, %v969
        %v1007 = vmul.f32 %v960, %v973
        %v1008 = vmul.f32 %v959, %v977
        %v1009 = vmul.f32 %v958, %v981
        %v1010 = vmul.f32 %v957, %v985
        %v1011 = vmul.f32 %v956, %v989
        %v1012 = vmul.f32 %v955, %v993
        %v1013 = vmul.f32 %v954, %v997
        %v1014 = vpack.c.bf16 %v1006, %v1006
        %v1015 = vpack.c.bf16 %v1007, %v1007
        %v1016 = vpack.c.bf16 %v1008, %v1008
        %v1017 = vpack.c.bf16 %v1009, %v1009
        %v1018 = vpack.c.bf16 %v1010, %v1010
        %v1019 = vpack.c.bf16 %v1011, %v1011
        %v1020 = vpack.c.bf16 %v1012, %v1012
        %v1021 = vpack.c.bf16 %v1013, %v1013
        %v1023 = vsel %vm553, %v376, 0
        %v1026 = vsel %vm557, %v1014, 0
        %v1029 = vsel %vm557, %v1015, 0
        %v1032 = vsel %vm557, %v1016, 0
        %v1035 = vsel %vm557, %v1017, 0
        %v1038 = vsel %vm557, %v1018, 0
        %v1041 = vsel %vm557, %v1019, 0
        %v1044 = vsel %vm557, %v1020, 0
        %v1047 = vsel %vm557, %v1021, 0
        %1049 = vmatprep.subr.bf16.mxu0 %v1029
        %1050 = vmatpush1.bf16.msra.mxu0 %v1026
        %1051 = vmatprep.subr.bf16.mxu0 0
        %1052 = vmatpush1.bf16.msra.mxu0 0
        %1053 = vmatprep.subr.bf16.mxu0 0
        %1054 = vmatpush1.bf16.msra.mxu0 0
        %1055 = vmatprep.subr.bf16.mxu0 0
        %1056 = vmatpush1.bf16.msra.mxu0 0
        %1057 = vmatprep.subr.bf16.mxu0 0
        %1058 = vmatpush1.bf16.msra.mxu0 0
        %1059 = vmatprep.subr.bf16.mxu0 0
        %1060 = vmatpush1.bf16.msra.mxu0 0
        %1061 = vmatprep.subr.bf16.mxu0 0
        %1062 = vmatpush1.bf16.msra.mxu0 0
        %1063 = vmatprep.subr.bf16.mxu0 0
        %1064 = vmatpush1.bf16.msra.mxu0 0
        %1065 = vmatprep.subr.bf16.mxu0 0
        %1066 = vmatpush1.bf16.msra.mxu0 0
        %1067 = vmatprep.subr.bf16.mxu0 0
        %1068 = vmatpush1.bf16.msra.mxu0 0
        %1069 = vmatprep.subr.bf16.mxu0 0
        %1070 = vmatpush1.bf16.msra.mxu0 0
        %1071 = vmatprep.subr.bf16.mxu0 0
        %1072 = vmatpush1.bf16.msra.mxu0 0
        %1073 = vmatprep.subr.bf16.mxu0 0
        %1074 = vmatpush1.bf16.msra.mxu0 0
        %1075 = vmatprep.subr.bf16.mxu0 0
        %1076 = vmatpush1.bf16.msra.mxu0 0
        %1077 = vmatprep.subr.bf16.mxu0 0
        %1078 = vmatpush1.bf16.msra.mxu0 0
        %1079 = vmatprep.subr.bf16.mxu0 0
        %1080 = vmatpush1.bf16.msra.mxu0 0
        %1081 = vmatprep.mubr.bf16.mxu0 0
        %1082 = vmatmul.mubr.bf16.gmra.mrb[0].mxu0 %v1023
        %v1083 = vpop.f32.mrb[0].mxu0
        %v1084 = vadd.f32 0.0, %v1083
        %v1085 = vpop.f32.mrb[0].mxu0
        %v1086 = vadd.f32 0.0, %v1085
        %v1087 = vpop.f32.mrb[0].mxu0
        %v1088 = vpop.f32.mrb[0].mxu0
        %1089 = vdwg.mxu0
        %1090 = vmatprep.subr.bf16.mxu0 %v1035
        %1091 = vmatpush1.bf16.msra.mxu0 %v1032
        %1092 = vmatprep.subr.bf16.mxu0 0
        %1093 = vmatpush1.bf16.msra.mxu0 0
        %1094 = vmatprep.subr.bf16.mxu0 0
        %1095 = vmatpush1.bf16.msra.mxu0 0
        %1096 = vmatprep.subr.bf16.mxu0 0
        %1097 = vmatpush1.bf16.msra.mxu0 0
        %1098 = vmatprep.subr.bf16.mxu0 0
        %1099 = vmatpush1.bf16.msra.mxu0 0
        %1100 = vmatprep.subr.bf16.mxu0 0
        %1101 = vmatpush1.bf16.msra.mxu0 0
        %1102 = vmatprep.subr.bf16.mxu0 0
        %1103 = vmatpush1.bf16.msra.mxu0 0
        %1104 = vmatprep.subr.bf16.mxu0 0
        %1105 = vmatpush1.bf16.msra.mxu0 0
        %1106 = vmatprep.subr.bf16.mxu0 0
        %1107 = vmatpush1.bf16.msra.mxu0 0
        %1108 = vmatprep.subr.bf16.mxu0 0
        %1109 = vmatpush1.bf16.msra.mxu0 0
        %1110 = vmatprep.subr.bf16.mxu0 0
        %1111 = vmatpush1.bf16.msra.mxu0 0
        %1112 = vmatprep.subr.bf16.mxu0 0
        %1113 = vmatpush1.bf16.msra.mxu0 0
        %1114 = vmatprep.subr.bf16.mxu0 0
        %1115 = vmatpush1.bf16.msra.mxu0 0
        %1116 = vmatprep.subr.bf16.mxu0 0
        %1117 = vmatpush1.bf16.msra.mxu0 0
        %1118 = vmatprep.subr.bf16.mxu0 0
        %1119 = vmatpush1.bf16.msra.mxu0 0
        %1120 = vmatprep.subr.bf16.mxu0 0
        %1121 = vmatpush1.bf16.msra.mxu0 0
        %1122 = vmatprep.mubr.bf16.mxu0 0
        %1123 = vmatmul.mubr.bf16.gmra.mrb[0].mxu0 %v1023
        %v1124 = vpop.f32.mrb[0].mxu0
        %v1125 = vadd.f32 0.0, %v1124
        %v1126 = vpop.f32.mrb[0].mxu0
        %v1127 = vadd.f32 0.0, %v1126
        %v1128 = vpop.f32.mrb[0].mxu0
        %v1129 = vpop.f32.mrb[0].mxu0
        %1130 = vdwg.mxu0
        %1131 = vmatprep.subr.bf16.mxu0 %v1041
        %1132 = vmatpush1.bf16.msra.mxu0 %v1038
        %1133 = vmatprep.subr.bf16.mxu0 0
        %1134 = vmatpush1.bf16.msra.mxu0 0
        %1135 = vmatprep.subr.bf16.mxu0 0
        %1136 = vmatpush1.bf16.msra.mxu0 0
        %1137 = vmatprep.subr.bf16.mxu0 0
        %1138 = vmatpush1.bf16.msra.mxu0 0
        %1139 = vmatprep.subr.bf16.mxu0 0
        %1140 = vmatpush1.bf16.msra.mxu0 0
        %1141 = vmatprep.subr.bf16.mxu0 0
        %1142 = vmatpush1.bf16.msra.mxu0 0
        %1143 = vmatprep.subr.bf16.mxu0 0
        %1144 = vmatpush1.bf16.msra.mxu0 0
        %1145 = vmatprep.subr.bf16.mxu0 0
        %1146 = vmatpush1.bf16.msra.mxu0 0
        %1147 = vmatprep.subr.bf16.mxu0 0
        %1148 = vmatpush1.bf16.msra.mxu0 0
        %1149 = vmatprep.subr.bf16.mxu0 0
        %1150 = vmatpush1.bf16.msra.mxu0 0
        %1151 = vmatprep.subr.bf16.mxu0 0
        %1152 = vmatpush1.bf16.msra.mxu0 0
        %1153 = vmatprep.subr.bf16.mxu0 0
        %1154 = vmatpush1.bf16.msra.mxu0 0
        %1155 = vmatprep.subr.bf16.mxu0 0
        %1156 = vmatpush1.bf16.msra.mxu0 0
        %1157 = vmatprep.subr.bf16.mxu0 0
        %1158 = vmatpush1.bf16.msra.mxu0 0
        %1159 = vmatprep.subr.bf16.mxu0 0
        %1160 = vmatpush1.bf16.msra.mxu0 0
        %1161 = vmatprep.subr.bf16.mxu0 0
        %1162 = vmatpush1.bf16.msra.mxu0 0
        %1163 = vmatprep.mubr.bf16.mxu0 0
        %1164 = vmatmul.mubr.bf16.gmra.mrb[0].mxu0 %v1023
        %v1165 = vpop.f32.mrb[0].mxu0
        %v1166 = vadd.f32 0.0, %v1165
        %v1167 = vpop.f32.mrb[0].mxu0
        %v1168 = vadd.f32 0.0, %v1167
        %v1169 = vpop.f32.mrb[0].mxu0
        %v1170 = vpop.f32.mrb[0].mxu0
        %1171 = vdwg.mxu0
        %1172 = vmatprep.subr.bf16.mxu0 %v1047
        %1173 = vmatpush1.bf16.msra.mxu0 %v1044
        %1174 = vmatprep.subr.bf16.mxu0 0
        %1175 = vmatpush1.bf16.msra.mxu0 0
        %1176 = vmatprep.subr.bf16.mxu0 0
        %1177 = vmatpush1.bf16.msra.mxu0 0
        %1178 = vmatprep.subr.bf16.mxu0 0
        %1179 = vmatpush1.bf16.msra.mxu0 0
        %1180 = vmatprep.subr.bf16.mxu0 0
        %1181 = vmatpush1.bf16.msra.mxu0 0
        %1182 = vmatprep.subr.bf16.mxu0 0
        %1183 = vmatpush1.bf16.msra.mxu0 0
        %1184 = vmatprep.subr.bf16.mxu0 0
        %1185 = vmatpush1.bf16.msra.mxu0 0
        %1186 = vmatprep.subr.bf16.mxu0 0
        %1187 = vmatpush1.bf16.msra.mxu0 0
        %1188 = vmatprep.subr.bf16.mxu0 0
        %1189 = vmatpush1.bf16.msra.mxu0 0
        %1190 = vmatprep.subr.bf16.mxu0 0
        %1191 = vmatpush1.bf16.msra.mxu0 0
        %1192 = vmatprep.subr.bf16.mxu0 0
        %1193 = vmatpush1.bf16.msra.mxu0 0
        %1194 = vmatprep.subr.bf16.mxu0 0
        %1195 = vmatpush1.bf16.msra.mxu0 0
        %1196 = vmatprep.subr.bf16.mxu0 0
        %1197 = vmatpush1.bf16.msra.mxu0 0
        %1198 = vmatprep.subr.bf16.mxu0 0
        %1199 = vmatpush1.bf16.msra.mxu0 0
        %1200 = vmatprep.subr.bf16.mxu0 0
        %1201 = vmatpush1.bf16.msra.mxu0 0
        %1202 = vmatprep.subr.bf16.mxu0 0
        %1203 = vmatpush1.bf16.msra.mxu0 0
        %1204 = vmatprep.mubr.bf16.mxu0 0
        %1205 = vmatmul.mubr.bf16.gmra.mrb[0].mxu0 %v1023
        %v1206 = vpop.f32.mrb[0].mxu0
        %v1207 = vadd.f32 0.0, %v1206
        %v1208 = vpop.f32.mrb[0].mxu0
        %v1209 = vadd.f32 0.0, %v1208
        %v1210 = vpop.f32.mrb[0].mxu0
        %v1211 = vpop.f32.mrb[0].mxu0
        %1212 = vdwg.mxu0
        %v1213 = vadd.f32 %v808, %v1084
        %v1214 = vadd.f32 %v810, %v1086
        %v1215 = vadd.f32 %v849, %v1125
        %v1216 = vadd.f32 %v851, %v1127
        %v1217 = vadd.f32 %v890, %v1166
        %v1218 = vadd.f32 %v892, %v1168
        %v1219 = vadd.f32 %v931, %v1207
        %v1220 = vadd.f32 %v933, %v1209
        %1221 = vrot.lane.b32.xlu0 %v366, 1
        %v1222 = vpop.permute.xlu0 %1221
        %1223 = vrot.lane.b32.xlu0 %v367, 1
        %v1224 = vpop.permute.xlu0 %1223
        %1225 = vrot.lane.b32.xlu0 %v368, 1
        %v1226 = vpop.permute.xlu0 %1225
        %1227 = vrot.lane.b32.xlu0 %v369, 1
        %v1228 = vpop.permute.xlu0 %1227
        %1229 = vrot.lane.b32.xlu0 %v370, 1
        %v1230 = vpop.permute.xlu0 %1229
        %1231 = vrot.lane.b32.xlu0 %v371, 1
        %v1232 = vpop.permute.xlu0 %1231
        %1233 = vrot.lane.b32.xlu0 %v372, 1
        %v1234 = vpop.permute.xlu0 %1233
        %1235 = vrot.lane.b32.xlu0 %v373, 1
        %v1236 = vpop.permute.xlu0 %1235
        %vm1237 = vcmp.lt.s32.totalorder %v400, 1
        %v1238 = vsel %vm1237, %v1234, %v1236
        %v1239 = vsel %vm1237, %v1232, %v1234
        %v1240 = vsel %vm1237, %v1230, %v1232
        %v1241 = vsel %vm1237, %v1228, %v1230
        %v1242 = vsel %vm1237, %v1226, %v1228
        %v1243 = vsel %vm1237, %v1224, %v1226
        %v1244 = vsel %vm1237, %v1222, %v1224
        %v1245 = vsel %vm1237, %v1236, %v1222
        %v1247 = vlaneseq
        %v1248 = vshrl.u32 %v1247, 7
        %v1249 = vsub.s32 0, %v1248
        %v1250 = vrot.slane %v412, %v1249
        %v1251 = vlaneseq
        %v1252 = vshrl.u32 %v1251, 7
        %v1253 = vsub.s32 1, %v1252
        %v1254 = vrot.slane %v412, %v1253
        %v1255 = vlaneseq
        %v1256 = vshrl.u32 %v1255, 7
        %v1257 = vsub.s32 2, %v1256
        %v1258 = vrot.slane %v412, %v1257
        %v1259 = vlaneseq
        %v1260 = vshrl.u32 %v1259, 7
        %v1261 = vsub.s32 3, %v1260
        %v1262 = vrot.slane %v412, %v1261
        %v1263 = vlaneseq
        %v1264 = vshrl.u32 %v1263, 7
        %v1265 = vsub.s32 4, %v1264
        %v1266 = vrot.slane %v412, %v1265
        %v1267 = vlaneseq
        %v1268 = vshrl.u32 %v1267, 7
        %v1269 = vsub.s32 5, %v1268
        %v1270 = vrot.slane %v412, %v1269
        %v1271 = vlaneseq
        %v1272 = vshrl.u32 %v1271, 7
        %v1273 = vsub.s32 6, %v1272
        %v1274 = vrot.slane %v412, %v1273
        %v1275 = vlaneseq
        %v1276 = vshrl.u32 %v1275, 7
        %v1277 = vsub.s32 7, %v1276
        %v1278 = vrot.slane %v412, %v1277
        %v1287 = vmul.f32 %v1245, %v1250
        %v1288 = vmul.f32 %v1244, %v1254
        %v1289 = vmul.f32 %v1243, %v1258
        %v1290 = vmul.f32 %v1242, %v1262
        %v1291 = vmul.f32 %v1241, %v1266
        %v1292 = vmul.f32 %v1240, %v1270
        %v1293 = vmul.f32 %v1239, %v1274
        %v1294 = vmul.f32 %v1238, %v1278
        %v1295 = vpack.c.bf16 %v1287, %v1287
        %v1296 = vpack.c.bf16 %v1288, %v1288
        %v1297 = vpack.c.bf16 %v1289, %v1289
        %v1298 = vpack.c.bf16 %v1290, %v1290
        %v1299 = vpack.c.bf16 %v1291, %v1291
        %v1300 = vpack.c.bf16 %v1292, %v1292
        %v1301 = vpack.c.bf16 %v1293, %v1293
        %v1302 = vpack.c.bf16 %v1294, %v1294
        %v1304 = vsel %vm553, %v377, 0
        %v1307 = vsel %vm557, %v1295, 0
        %v1310 = vsel %vm557, %v1296, 0
        %v1313 = vsel %vm557, %v1297, 0
        %v1316 = vsel %vm557, %v1298, 0
        %v1319 = vsel %vm557, %v1299, 0
        %v1322 = vsel %vm557, %v1300, 0
        %v1325 = vsel %vm557, %v1301, 0
        %v1328 = vsel %vm557, %v1302, 0
        %1330 = vmatprep.subr.bf16.mxu0 %v1310
        %1331 = vmatpush1.bf16.msra.mxu0 %v1307
        %1332 = vmatprep.subr.bf16.mxu0 0
        %1333 = vmatpush1.bf16.msra.mxu0 0
        %1334 = vmatprep.subr.bf16.mxu0 0
        %1335 = vmatpush1.bf16.msra.mxu0 0
        %1336 = vmatprep.subr.bf16.mxu0 0
        %1337 = vmatpush1.bf16.msra.mxu0 0
        %1338 = vmatprep.subr.bf16.mxu0 0
        %1339 = vmatpush1.bf16.msra.mxu0 0
        %1340 = vmatprep.subr.bf16.mxu0 0
        %1341 = vmatpush1.bf16.msra.mxu0 0
        %1342 = vmatprep.subr.bf16.mxu0 0
        %1343 = vmatpush1.bf16.msra.mxu0 0
        %1344 = vmatprep.subr.bf16.mxu0 0
        %1345 = vmatpush1.bf16.msra.mxu0 0
        %1346 = vmatprep.subr.bf16.mxu0 0
        %1347 = vmatpush1.bf16.msra.mxu0 0
        %1348 = vmatprep.subr.bf16.mxu0 0
        %1349 = vmatpush1.bf16.msra.mxu0 0
        %1350 = vmatprep.subr.bf16.mxu0 0
        %1351 = vmatpush1.bf16.msra.mxu0 0
        %1352 = vmatprep.subr.bf16.mxu0 0
        %1353 = vmatpush1.bf16.msra.mxu0 0
        %1354 = vmatprep.subr.bf16.mxu0 0
        %1355 = vmatpush1.bf16.msra.mxu0 0
        %1356 = vmatprep.subr.bf16.mxu0 0
        %1357 = vmatpush1.bf16.msra.mxu0 0
        %1358 = vmatprep.subr.bf16.mxu0 0
        %1359 = vmatpush1.bf16.msra.mxu0 0
        %1360 = vmatprep.subr.bf16.mxu0 0
        %1361 = vmatpush1.bf16.msra.mxu0 0
        %1362 = vmatprep.mubr.bf16.mxu0 0
        %1363 = vmatmul.mubr.bf16.gmra.mrb[0].mxu0 %v1304
        %v1364 = vpop.f32.mrb[0].mxu0
        %v1365 = vadd.f32 0.0, %v1364
        %v1366 = vpop.f32.mrb[0].mxu0
        %v1367 = vadd.f32 0.0, %v1366
        %v1368 = vpop.f32.mrb[0].mxu0
        %v1369 = vpop.f32.mrb[0].mxu0
        %1370 = vdwg.mxu0
        %1371 = vmatprep.subr.bf16.mxu0 %v1316
        %1372 = vmatpush1.bf16.msra.mxu0 %v1313
        %1373 = vmatprep.subr.bf16.mxu0 0
        %1374 = vmatpush1.bf16.msra.mxu0 0
        %1375 = vmatprep.subr.bf16.mxu0 0
        %1376 = vmatpush1.bf16.msra.mxu0 0
        %1377 = vmatprep.subr.bf16.mxu0 0
        %1378 = vmatpush1.bf16.msra.mxu0 0
        %1379 = vmatprep.subr.bf16.mxu0 0
        %1380 = vmatpush1.bf16.msra.mxu0 0
        %1381 = vmatprep.subr.bf16.mxu0 0
        %1382 = vmatpush1.bf16.msra.mxu0 0
        %1383 = vmatprep.subr.bf16.mxu0 0
        %1384 = vmatpush1.bf16.msra.mxu0 0
        %1385 = vmatprep.subr.bf16.mxu0 0
        %1386 = vmatpush1.bf16.msra.mxu0 0
        %1387 = vmatprep.subr.bf16.mxu0 0
        %1388 = vmatpush1.bf16.msra.mxu0 0
        %1389 = vmatprep.subr.bf16.mxu0 0
        %1390 = vmatpush1.bf16.msra.mxu0 0
        %1391 = vmatprep.subr.bf16.mxu0 0
        %1392 = vmatpush1.bf16.msra.mxu0 0
        %1393 = vmatprep.subr.bf16.mxu0 0
        %1394 = vmatpush1.bf16.msra.mxu0 0
        %1395 = vmatprep.subr.bf16.mxu0 0
        %1396 = vmatpush1.bf16.msra.mxu0 0
        %1397 = vmatprep.subr.bf16.mxu0 0
        %1398 = vmatpush1.bf16.msra.mxu0 0
        %1399 = vmatprep.subr.bf16.mxu0 0
        %1400 = vmatpush1.bf16.msra.mxu0 0
        %1401 = vmatprep.subr.bf16.mxu0 0
        %1402 = vmatpush1.bf16.msra.mxu0 0
        %1403 = vmatprep.mubr.bf16.mxu0 0
        %1404 = vmatmul.mubr.bf16.gmra.mrb[0].mxu0 %v1304
        %v1405 = vpop.f32.mrb[0].mxu0
        %v1406 = vadd.f32 0.0, %v1405
        %v1407 = vpop.f32.mrb[0].mxu0
        %v1408 = vadd.f32 0.0, %v1407
        %v1409 = vpop.f32.mrb[0].mxu0
        %v1410 = vpop.f32.mrb[0].mxu0
        %1411 = vdwg.mxu0
        %1412 = vmatprep.subr.bf16.mxu0 %v1322
        %1413 = vmatpush1.bf16.msra.mxu0 %v1319
        %1414 = vmatprep.subr.bf16.mxu0 0
        %1415 = vmatpush1.bf16.msra.mxu0 0
        %1416 = vmatprep.subr.bf16.mxu0 0
        %1417 = vmatpush1.bf16.msra.mxu0 0
        %1418 = vmatprep.subr.bf16.mxu0 0
        %1419 = vmatpush1.bf16.msra.mxu0 0
        %1420 = vmatprep.subr.bf16.mxu0 0
        %1421 = vmatpush1.bf16.msra.mxu0 0
        %1422 = vmatprep.subr.bf16.mxu0 0
        %1423 = vmatpush1.bf16.msra.mxu0 0
        %1424 = vmatprep.subr.bf16.mxu0 0
        %1425 = vmatpush1.bf16.msra.mxu0 0
        %1426 = vmatprep.subr.bf16.mxu0 0
        %1427 = vmatpush1.bf16.msra.mxu0 0
        %1428 = vmatprep.subr.bf16.mxu0 0
        %1429 = vmatpush1.bf16.msra.mxu0 0
        %1430 = vmatprep.subr.bf16.mxu0 0
        %1431 = vmatpush1.bf16.msra.mxu0 0
        %1432 = vmatprep.subr.bf16.mxu0 0
        %1433 = vmatpush1.bf16.msra.mxu0 0
        %1434 = vmatprep.subr.bf16.mxu0 0
        %1435 = vmatpush1.bf16.msra.mxu0 0
        %1436 = vmatprep.subr.bf16.mxu0 0
        %1437 = vmatpush1.bf16.msra.mxu0 0
        %1438 = vmatprep.subr.bf16.mxu0 0
        %1439 = vmatpush1.bf16.msra.mxu0 0
        %1440 = vmatprep.subr.bf16.mxu0 0
        %1441 = vmatpush1.bf16.msra.mxu0 0
        %1442 = vmatprep.subr.bf16.mxu0 0
        %1443 = vmatpush1.bf16.msra.mxu0 0
        %1444 = vmatprep.mubr.bf16.mxu0 0
        %1445 = vmatmul.mubr.bf16.gmra.mrb[0].mxu0 %v1304
        %v1446 = vpop.f32.mrb[0].mxu0
        %v1447 = vadd.f32 0.0, %v1446
        %v1448 = vpop.f32.mrb[0].mxu0
        %v1449 = vadd.f32 0.0, %v1448
        %v1450 = vpop.f32.mrb[0].mxu0
        %v1451 = vpop.f32.mrb[0].mxu0
        %1452 = vdwg.mxu0
        %1453 = vmatprep.subr.bf16.mxu0 %v1328
        %1454 = vmatpush1.bf16.msra.mxu0 %v1325
        %1455 = vmatprep.subr.bf16.mxu0 0
        %1456 = vmatpush1.bf16.msra.mxu0 0
        %1457 = vmatprep.subr.bf16.mxu0 0
        %1458 = vmatpush1.bf16.msra.mxu0 0
        %1459 = vmatprep.subr.bf16.mxu0 0
        %1460 = vmatpush1.bf16.msra.mxu0 0
        %1461 = vmatprep.subr.bf16.mxu0 0
        %1462 = vmatpush1.bf16.msra.mxu0 0
        %1463 = vmatprep.subr.bf16.mxu0 0
        %1464 = vmatpush1.bf16.msra.mxu0 0
        %1465 = vmatprep.subr.bf16.mxu0 0
        %1466 = vmatpush1.bf16.msra.mxu0 0
        %1467 = vmatprep.subr.bf16.mxu0 0
        %1468 = vmatpush1.bf16.msra.mxu0 0
        %1469 = vmatprep.subr.bf16.mxu0 0
        %1470 = vmatpush1.bf16.msra.mxu0 0
        %1471 = vmatprep.subr.bf16.mxu0 0
        %1472 = vmatpush1.bf16.msra.mxu0 0
        %1473 = vmatprep.subr.bf16.mxu0 0
        %1474 = vmatpush1.bf16.msra.mxu0 0
        %1475 = vmatprep.subr.bf16.mxu0 0
        %1476 = vmatpush1.bf16.msra.mxu0 0
        %1477 = vmatprep.subr.bf16.mxu0 0
        %1478 = vmatpush1.bf16.msra.mxu0 0
        %1479 = vmatprep.subr.bf16.mxu0 0
        %1480 = vmatpush1.bf16.msra.mxu0 0
        %1481 = vmatprep.subr.bf16.mxu0 0
        %1482 = vmatpush1.bf16.msra.mxu0 0
        %1483 = vmatprep.subr.bf16.mxu0 0
        %1484 = vmatpush1.bf16.msra.mxu0 0
        %1485 = vmatprep.mubr.bf16.mxu0 0
        %1486 = vmatmul.mubr.bf16.gmra.mrb[0].mxu0 %v1304
        %v1487 = vpop.f32.mrb[0].mxu0
        %v1488 = vadd.f32 0.0, %v1487
        %v1489 = vpop.f32.mrb[0].mxu0
        %v1490 = vadd.f32 0.0, %v1489
        %v1491 = vpop.f32.mrb[0].mxu0
        %v1492 = vpop.f32.mrb[0].mxu0
        %1493 = vdwg.mxu0
        %v1494 = vadd.f32 %v1213, %v1365
        %v1495 = vadd.f32 %v1214, %v1367
        %v1496 = vadd.f32 %v1215, %v1406
        %v1497 = vadd.f32 %v1216, %v1408
        %v1498 = vadd.f32 %v1217, %v1447
        %v1499 = vadd.f32 %v1218, %v1449
        %v1500 = vadd.f32 %v1219, %v1488
        %v1501 = vadd.f32 %v1220, %v1490
        %v1502 = vpack.c.bf16 %v366, %v366
        %v1503 = vpack.c.bf16 %v367, %v367
        %v1504 = vpack.c.bf16 %v368, %v368
        %v1505 = vpack.c.bf16 %v369, %v369
        %v1506 = vpack.c.bf16 %v370, %v370
        %v1507 = vpack.c.bf16 %v371, %v371
        %v1508 = vpack.c.bf16 %v372, %v372
        %v1509 = vpack.c.bf16 %v373, %v373
        %v1511 = vsel %vm553, %v378, 0
        %v1514 = vsel %vm557, %v1502, 0
        %v1517 = vsel %vm557, %v1503, 0
        %v1520 = vsel %vm557, %v1504, 0
        %v1523 = vsel %vm557, %v1505, 0
        %v1526 = vsel %vm557, %v1506, 0
        %v1529 = vsel %vm557, %v1507, 0
        %v1532 = vsel %vm557, %v1508, 0
        %v1535 = vsel %vm557, %v1509, 0
        %1537 = vmatprep.subr.bf16.mxu0 %v1517
        %1538 = vmatpush1.bf16.msra.mxu0 %v1514
        %1539 = vmatprep.subr.bf16.mxu0 0
        %1540 = vmatpush1.bf16.msra.mxu0 0
        %1541 = vmatprep.subr.bf16.mxu0 0
        %1542 = vmatpush1.bf16.msra.mxu0 0
        %1543 = vmatprep.subr.bf16.mxu0 0
        %1544 = vmatpush1.bf16.msra.mxu0 0
        %1545 = vmatprep.subr.bf16.mxu0 0
        %1546 = vmatpush1.bf16.msra.mxu0 0
        %1547 = vmatprep.subr.bf16.mxu0 0
        %1548 = vmatpush1.bf16.msra.mxu0 0
        %1549 = vmatprep.subr.bf16.mxu0 0
        %1550 = vmatpush1.bf16.msra.mxu0 0
        %1551 = vmatprep.subr.bf16.mxu0 0
        %1552 = vmatpush1.bf16.msra.mxu0 0
        %1553 = vmatprep.subr.bf16.mxu0 0
        %1554 = vmatpush1.bf16.msra.mxu0 0
        %1555 = vmatprep.subr.bf16.mxu0 0
        %1556 = vmatpush1.bf16.msra.mxu0 0
        %1557 = vmatprep.subr.bf16.mxu0 0
        %1558 = vmatpush1.bf16.msra.mxu0 0
        %1559 = vmatprep.subr.bf16.mxu0 0
        %1560 = vmatpush1.bf16.msra.mxu0 0
        %1561 = vmatprep.subr.bf16.mxu0 0
        %1562 = vmatpush1.bf16.msra.mxu0 0
        %1563 = vmatprep.subr.bf16.mxu0 0
        %1564 = vmatpush1.bf16.msra.mxu0 0
        %1565 = vmatprep.subr.bf16.mxu0 0
        %1566 = vmatpush1.bf16.msra.mxu0 0
        %1567 = vmatprep.subr.bf16.mxu0 0
        %1568 = vmatpush1.bf16.msra.mxu0 0
        %1569 = vmatprep.mubr.bf16.mxu0 0
        %1570 = vmatmul.mubr.bf16.gmra.mrb[0].mxu0 %v1511
        %v1571 = vpop.f32.mrb[0].mxu0
        %v1572 = vadd.f32 0.0, %v1571
        %v1573 = vpop.f32.mrb[0].mxu0
        %v1574 = vadd.f32 0.0, %v1573
        %v1575 = vpop.f32.mrb[0].mxu0
        %v1576 = vpop.f32.mrb[0].mxu0
        %1577 = vdwg.mxu0
        %1578 = vmatprep.subr.bf16.mxu0 %v1523
        %1579 = vmatpush1.bf16.msra.mxu0 %v1520
        %1580 = vmatprep.subr.bf16.mxu0 0
        %1581 = vmatpush1.bf16.msra.mxu0 0
        %1582 = vmatprep.subr.bf16.mxu0 0
        %1583 = vmatpush1.bf16.msra.mxu0 0
        %1584 = vmatprep.subr.bf16.mxu0 0
        %1585 = vmatpush1.bf16.msra.mxu0 0
        %1586 = vmatprep.subr.bf16.mxu0 0
        %1587 = vmatpush1.bf16.msra.mxu0 0
        %1588 = vmatprep.subr.bf16.mxu0 0
        %1589 = vmatpush1.bf16.msra.mxu0 0
        %1590 = vmatprep.subr.bf16.mxu0 0
        %1591 = vmatpush1.bf16.msra.mxu0 0
        %1592 = vmatprep.subr.bf16.mxu0 0
        %1593 = vmatpush1.bf16.msra.mxu0 0
        %1594 = vmatprep.subr.bf16.mxu0 0
        %1595 = vmatpush1.bf16.msra.mxu0 0
        %1596 = vmatprep.subr.bf16.mxu0 0
        %1597 = vmatpush1.bf16.msra.mxu0 0
        %1598 = vmatprep.subr.bf16.mxu0 0
        %1599 = vmatpush1.bf16.msra.mxu0 0
        %1600 = vmatprep.subr.bf16.mxu0 0
        %1601 = vmatpush1.bf16.msra.mxu0 0
        %1602 = vmatprep.subr.bf16.mxu0 0
        %1603 = vmatpush1.bf16.msra.mxu0 0
        %1604 = vmatprep.subr.bf16.mxu0 0
        %1605 = vmatpush1.bf16.msra.mxu0 0
        %1606 = vmatprep.subr.bf16.mxu0 0
        %1607 = vmatpush1.bf16.msra.mxu0 0
        %1608 = vmatprep.subr.bf16.mxu0 0
        %1609 = vmatpush1.bf16.msra.mxu0 0
        %1610 = vmatprep.mubr.bf16.mxu0 0
        %1611 = vmatmul.mubr.bf16.gmra.mrb[0].mxu0 %v1511
        %v1612 = vpop.f32.mrb[0].mxu0
        %v1613 = vadd.f32 0.0, %v1612
        %v1614 = vpop.f32.mrb[0].mxu0
        %v1615 = vadd.f32 0.0, %v1614
        %v1616 = vpop.f32.mrb[0].mxu0
        %v1617 = vpop.f32.mrb[0].mxu0
        %1618 = vdwg.mxu0
        %1619 = vmatprep.subr.bf16.mxu0 %v1529
        %1620 = vmatpush1.bf16.msra.mxu0 %v1526
        %1621 = vmatprep.subr.bf16.mxu0 0
        %1622 = vmatpush1.bf16.msra.mxu0 0
        %1623 = vmatprep.subr.bf16.mxu0 0
        %1624 = vmatpush1.bf16.msra.mxu0 0
        %1625 = vmatprep.subr.bf16.mxu0 0
        %1626 = vmatpush1.bf16.msra.mxu0 0
        %1627 = vmatprep.subr.bf16.mxu0 0
        %1628 = vmatpush1.bf16.msra.mxu0 0
        %1629 = vmatprep.subr.bf16.mxu0 0
        %1630 = vmatpush1.bf16.msra.mxu0 0
        %1631 = vmatprep.subr.bf16.mxu0 0
        %1632 = vmatpush1.bf16.msra.mxu0 0
        %1633 = vmatprep.subr.bf16.mxu0 0
        %1634 = vmatpush1.bf16.msra.mxu0 0
        %1635 = vmatprep.subr.bf16.mxu0 0
        %1636 = vmatpush1.bf16.msra.mxu0 0
        %1637 = vmatprep.subr.bf16.mxu0 0
        %1638 = vmatpush1.bf16.msra.mxu0 0
        %1639 = vmatprep.subr.bf16.mxu0 0
        %1640 = vmatpush1.bf16.msra.mxu0 0
        %1641 = vmatprep.subr.bf16.mxu0 0
        %1642 = vmatpush1.bf16.msra.mxu0 0
        %1643 = vmatprep.subr.bf16.mxu0 0
        %1644 = vmatpush1.bf16.msra.mxu0 0
        %1645 = vmatprep.subr.bf16.mxu0 0
        %1646 = vmatpush1.bf16.msra.mxu0 0
        %1647 = vmatprep.subr.bf16.mxu0 0
        %1648 = vmatpush1.bf16.msra.mxu0 0
        %1649 = vmatprep.subr.bf16.mxu0 0
        %1650 = vmatpush1.bf16.msra.mxu0 0
        %1651 = vmatprep.mubr.bf16.mxu0 0
        %1652 = vmatmul.mubr.bf16.gmra.mrb[0].mxu0 %v1511
        %v1653 = vpop.f32.mrb[0].mxu0
        %v1654 = vadd.f32 0.0, %v1653
        %v1655 = vpop.f32.mrb[0].mxu0
        %v1656 = vadd.f32 0.0, %v1655
        %v1657 = vpop.f32.mrb[0].mxu0
        %v1658 = vpop.f32.mrb[0].mxu0
        %1659 = vdwg.mxu0
        %1660 = vmatprep.subr.bf16.mxu0 %v1535
        %1661 = vmatpush1.bf16.msra.mxu0 %v1532
        %1662 = vmatprep.subr.bf16.mxu0 0
        %1663 = vmatpush1.bf16.msra.mxu0 0
        %1664 = vmatprep.subr.bf16.mxu0 0
        %1665 = vmatpush1.bf16.msra.mxu0 0
        %1666 = vmatprep.subr.bf16.mxu0 0
        %1667 = vmatpush1.bf16.msra.mxu0 0
        %1668 = vmatprep.subr.bf16.mxu0 0
        %1669 = vmatpush1.bf16.msra.mxu0 0
        %1670 = vmatprep.subr.bf16.mxu0 0
        %1671 = vmatpush1.bf16.msra.mxu0 0
        %1672 = vmatprep.subr.bf16.mxu0 0
        %1673 = vmatpush1.bf16.msra.mxu0 0
        %1674 = vmatprep.subr.bf16.mxu0 0
        %1675 = vmatpush1.bf16.msra.mxu0 0
        %1676 = vmatprep.subr.bf16.mxu0 0
        %1677 = vmatpush1.bf16.msra.mxu0 0
        %1678 = vmatprep.subr.bf16.mxu0 0
        %1679 = vmatpush1.bf16.msra.mxu0 0
        %1680 = vmatprep.subr.bf16.mxu0 0
        %1681 = vmatpush1.bf16.msra.mxu0 0
        %1682 = vmatprep.subr.bf16.mxu0 0
        %1683 = vmatpush1.bf16.msra.mxu0 0
        %1684 = vmatprep.subr.bf16.mxu0 0
        %1685 = vmatpush1.bf16.msra.mxu0 0
        %1686 = vmatprep.subr.bf16.mxu0 0
        %1687 = vmatpush1.bf16.msra.mxu0 0
        %1688 = vmatprep.subr.bf16.mxu0 0
        %1689 = vmatpush1.bf16.msra.mxu0 0
        %1690 = vmatprep.subr.bf16.mxu0 0
        %1691 = vmatpush1.bf16.msra.mxu0 0
        %1692 = vmatprep.mubr.bf16.mxu0 0
        %1693 = vmatmul.mubr.bf16.gmra.mrb[0].mxu0 %v1511
        %v1694 = vpop.f32.mrb[0].mxu0
        %v1695 = vadd.f32 0.0, %v1694
        %v1696 = vpop.f32.mrb[0].mxu0
        %v1697 = vadd.f32 0.0, %v1696
        %v1698 = vpop.f32.mrb[0].mxu0
        %v1699 = vpop.f32.mrb[0].mxu0
        %1700 = vdwg.mxu0
        %v1701 = vadd.f32 %v1494, %v1572
        %v1702 = vadd.f32 %v1495, %v1574
        %v1703 = vadd.f32 %v1496, %v1613
        %v1704 = vadd.f32 %v1497, %v1615
        %v1705 = vadd.f32 %v1498, %v1654
        %v1706 = vadd.f32 %v1499, %v1656
        %v1707 = vadd.f32 %v1500, %v1695
        %v1708 = vadd.f32 %v1501, %v1697
        %1709 = vrot.lane.b32.xlu0 %v366, 127
        %v1710 = vpop.permute.xlu0 %1709
        %1711 = vrot.lane.b32.xlu0 %v367, 127
        %v1712 = vpop.permute.xlu0 %1711
        %1713 = vrot.lane.b32.xlu0 %v368, 127
        %v1714 = vpop.permute.xlu0 %1713
        %1715 = vrot.lane.b32.xlu0 %v369, 127
        %v1716 = vpop.permute.xlu0 %1715
        %1717 = vrot.lane.b32.xlu0 %v370, 127
        %v1718 = vpop.permute.xlu0 %1717
        %1719 = vrot.lane.b32.xlu0 %v371, 127
        %v1720 = vpop.permute.xlu0 %1719
        %1721 = vrot.lane.b32.xlu0 %v372, 127
        %v1722 = vpop.permute.xlu0 %1721
        %1723 = vrot.lane.b32.xlu0 %v373, 127
        %v1724 = vpop.permute.xlu0 %1723
        %vm1725 = vcmp.lt.s32.totalorder %v400, 127
        %v1726 = vsel %vm1725, %v1722, %v1724
        %v1727 = vsel %vm1725, %v1720, %v1722
        %v1728 = vsel %vm1725, %v1718, %v1720
        %v1729 = vsel %vm1725, %v1716, %v1718
        %v1730 = vsel %vm1725, %v1714, %v1716
        %v1731 = vsel %vm1725, %v1712, %v1714
        %v1732 = vsel %vm1725, %v1710, %v1712
        %v1733 = vsel %vm1725, %v1724, %v1710
        %v1735 = vlaneseq
        %v1736 = vshrl.u32 %v1735, 7
        %v1737 = vsub.s32 0, %v1736
        %v1738 = vrot.slane %v963, %v1737
        %v1739 = vlaneseq
        %v1740 = vshrl.u32 %v1739, 7
        %v1741 = vsub.s32 1, %v1740
        %v1742 = vrot.slane %v963, %v1741
        %v1743 = vlaneseq
        %v1744 = vshrl.u32 %v1743, 7
        %v1745 = vsub.s32 2, %v1744
        %v1746 = vrot.slane %v963, %v1745
        %v1747 = vlaneseq
        %v1748 = vshrl.u32 %v1747, 7
        %v1749 = vsub.s32 3, %v1748
        %v1750 = vrot.slane %v963, %v1749
        %v1751 = vlaneseq
        %v1752 = vshrl.u32 %v1751, 7
        %v1753 = vsub.s32 4, %v1752
        %v1754 = vrot.slane %v963, %v1753
        %v1755 = vlaneseq
        %v1756 = vshrl.u32 %v1755, 7
        %v1757 = vsub.s32 5, %v1756
        %v1758 = vrot.slane %v963, %v1757
        %v1759 = vlaneseq
        %v1760 = vshrl.u32 %v1759, 7
        %v1761 = vsub.s32 6, %v1760
        %v1762 = vrot.slane %v963, %v1761
        %v1763 = vlaneseq
        %v1764 = vshrl.u32 %v1763, 7
        %v1765 = vsub.s32 7, %v1764
        %v1766 = vrot.slane %v963, %v1765
        %v1775 = vmul.f32 %v1732, %v1738
        %v1776 = vmul.f32 %v1731, %v1742
        %v1777 = vmul.f32 %v1730, %v1746
        %v1778 = vmul.f32 %v1729, %v1750
        %v1779 = vmul.f32 %v1728, %v1754
        %v1780 = vmul.f32 %v1727, %v1758
        %v1781 = vmul.f32 %v1726, %v1762
        %v1782 = vmul.f32 %v1733, %v1766
        %v1783 = vpack.c.bf16 %v1775, %v1775
        %v1784 = vpack.c.bf16 %v1776, %v1776
        %v1785 = vpack.c.bf16 %v1777, %v1777
        %v1786 = vpack.c.bf16 %v1778, %v1778
        %v1787 = vpack.c.bf16 %v1779, %v1779
        %v1788 = vpack.c.bf16 %v1780, %v1780
        %v1789 = vpack.c.bf16 %v1781, %v1781
        %v1790 = vpack.c.bf16 %v1782, %v1782
        %v1792 = vsel %vm553, %v379, 0
        %v1795 = vsel %vm557, %v1783, 0
        %v1798 = vsel %vm557, %v1784, 0
        %v1801 = vsel %vm557, %v1785, 0
        %v1804 = vsel %vm557, %v1786, 0
        %v1807 = vsel %vm557, %v1787, 0
        %v1810 = vsel %vm557, %v1788, 0
        %v1813 = vsel %vm557, %v1789, 0
        %v1816 = vsel %vm557, %v1790, 0
        %1818 = vmatprep.subr.bf16.mxu0 %v1798
        %1819 = vmatpush1.bf16.msra.mxu0 %v1795
        %1820 = vmatprep.subr.bf16.mxu0 0
        %1821 = vmatpush1.bf16.msra.mxu0 0
        %1822 = vmatprep.subr.bf16.mxu0 0
        %1823 = vmatpush1.bf16.msra.mxu0 0
        %1824 = vmatprep.subr.bf16.mxu0 0
        %1825 = vmatpush1.bf16.msra.mxu0 0
        %1826 = vmatprep.subr.bf16.mxu0 0
        %1827 = vmatpush1.bf16.msra.mxu0 0
        %1828 = vmatprep.subr.bf16.mxu0 0
        %1829 = vmatpush1.bf16.msra.mxu0 0
        %1830 = vmatprep.subr.bf16.mxu0 0
        %1831 = vmatpush1.bf16.msra.mxu0 0
        %1832 = vmatprep.subr.bf16.mxu0 0
        %1833 = vmatpush1.bf16.msra.mxu0 0
        %1834 = vmatprep.subr.bf16.mxu0 0
        %1835 = vmatpush1.bf16.msra.mxu0 0
        %1836 = vmatprep.subr.bf16.mxu0 0
        %1837 = vmatpush1.bf16.msra.mxu0 0
        %1838 = vmatprep.subr.bf16.mxu0 0
        %1839 = vmatpush1.bf16.msra.mxu0 0
        %1840 = vmatprep.subr.bf16.mxu0 0
        %1841 = vmatpush1.bf16.msra.mxu0 0
        %1842 = vmatprep.subr.bf16.mxu0 0
        %1843 = vmatpush1.bf16.msra.mxu0 0
        %1844 = vmatprep.subr.bf16.mxu0 0
        %1845 = vmatpush1.bf16.msra.mxu0 0
        %1846 = vmatprep.subr.bf16.mxu0 0
        %1847 = vmatpush1.bf16.msra.mxu0 0
        %1848 = vmatprep.subr.bf16.mxu0 0
        %1849 = vmatpush1.bf16.msra.mxu0 0
        %1850 = vmatprep.mubr.bf16.mxu0 0
        %1851 = vmatmul.mubr.bf16.gmra.mrb[0].mxu0 %v1792
        %v1852 = vpop.f32.mrb[0].mxu0
        %v1853 = vadd.f32 0.0, %v1852
        %v1854 = vpop.f32.mrb[0].mxu0
        %v1855 = vadd.f32 0.0, %v1854
        %v1856 = vpop.f32.mrb[0].mxu0
        %v1857 = vpop.f32.mrb[0].mxu0
        %1858 = vdwg.mxu0
        %1859 = vmatprep.subr.bf16.mxu0 %v1804
        %1860 = vmatpush1.bf16.msra.mxu0 %v1801
        %1861 = vmatprep.subr.bf16.mxu0 0
        %1862 = vmatpush1.bf16.msra.mxu0 0
        %1863 = vmatprep.subr.bf16.mxu0 0
        %1864 = vmatpush1.bf16.msra.mxu0 0
        %1865 = vmatprep.subr.bf16.mxu0 0
        %1866 = vmatpush1.bf16.msra.mxu0 0
        %1867 = vmatprep.subr.bf16.mxu0 0
        %1868 = vmatpush1.bf16.msra.mxu0 0
        %1869 = vmatprep.subr.bf16.mxu0 0
        %1870 = vmatpush1.bf16.msra.mxu0 0
        %1871 = vmatprep.subr.bf16.mxu0 0
        %1872 = vmatpush1.bf16.msra.mxu0 0
        %1873 = vmatprep.subr.bf16.mxu0 0
        %1874 = vmatpush1.bf16.msra.mxu0 0
        %1875 = vmatprep.subr.bf16.mxu0 0
        %1876 = vmatpush1.bf16.msra.mxu0 0
        %1877 = vmatprep.subr.bf16.mxu0 0
        %1878 = vmatpush1.bf16.msra.mxu0 0
        %1879 = vmatprep.subr.bf16.mxu0 0
        %1880 = vmatpush1.bf16.msra.mxu0 0
        %1881 = vmatprep.subr.bf16.mxu0 0
        %1882 = vmatpush1.bf16.msra.mxu0 0
        %1883 = vmatprep.subr.bf16.mxu0 0
        %1884 = vmatpush1.bf16.msra.mxu0 0
        %1885 = vmatprep.subr.bf16.mxu0 0
        %1886 = vmatpush1.bf16.msra.mxu0 0
        %1887 = vmatprep.subr.bf16.mxu0 0
        %1888 = vmatpush1.bf16.msra.mxu0 0
        %1889 = vmatprep.subr.bf16.mxu0 0
        %1890 = vmatpush1.bf16.msra.mxu0 0
        %1891 = vmatprep.mubr.bf16.mxu0 0
        %1892 = vmatmul.mubr.bf16.gmra.mrb[0].mxu0 %v1792
        %v1893 = vpop.f32.mrb[0].mxu0
        %v1894 = vadd.f32 0.0, %v1893
        %v1895 = vpop.f32.mrb[0].mxu0
        %v1896 = vadd.f32 0.0, %v1895
        %v1897 = vpop.f32.mrb[0].mxu0
        %v1898 = vpop.f32.mrb[0].mxu0
        %1899 = vdwg.mxu0
        %1900 = vmatprep.subr.bf16.mxu0 %v1810
        %1901 = vmatpush1.bf16.msra.mxu0 %v1807
        %1902 = vmatprep.subr.bf16.mxu0 0
        %1903 = vmatpush1.bf16.msra.mxu0 0
        %1904 = vmatprep.subr.bf16.mxu0 0
        %1905 = vmatpush1.bf16.msra.mxu0 0
        %1906 = vmatprep.subr.bf16.mxu0 0
        %1907 = vmatpush1.bf16.msra.mxu0 0
        %1908 = vmatprep.subr.bf16.mxu0 0
        %1909 = vmatpush1.bf16.msra.mxu0 0
        %1910 = vmatprep.subr.bf16.mxu0 0
        %1911 = vmatpush1.bf16.msra.mxu0 0
        %1912 = vmatprep.subr.bf16.mxu0 0
        %1913 = vmatpush1.bf16.msra.mxu0 0
        %1914 = vmatprep.subr.bf16.mxu0 0
        %1915 = vmatpush1.bf16.msra.mxu0 0
        %1916 = vmatprep.subr.bf16.mxu0 0
        %1917 = vmatpush1.bf16.msra.mxu0 0
        %1918 = vmatprep.subr.bf16.mxu0 0
        %1919 = vmatpush1.bf16.msra.mxu0 0
        %1920 = vmatprep.subr.bf16.mxu0 0
        %1921 = vmatpush1.bf16.msra.mxu0 0
        %1922 = vmatprep.subr.bf16.mxu0 0
        %1923 = vmatpush1.bf16.msra.mxu0 0
        %1924 = vmatprep.subr.bf16.mxu0 0
        %1925 = vmatpush1.bf16.msra.mxu0 0
        %1926 = vmatprep.subr.bf16.mxu0 0
        %1927 = vmatpush1.bf16.msra.mxu0 0
        %1928 = vmatprep.subr.bf16.mxu0 0
        %1929 = vmatpush1.bf16.msra.mxu0 0
        %1930 = vmatprep.subr.bf16.mxu0 0
        %1931 = vmatpush1.bf16.msra.mxu0 0
        %1932 = vmatprep.mubr.bf16.mxu0 0
        %1933 = vmatmul.mubr.bf16.gmra.mrb[0].mxu0 %v1792
        %v1934 = vpop.f32.mrb[0].mxu0
        %v1935 = vadd.f32 0.0, %v1934
        %v1936 = vpop.f32.mrb[0].mxu0
        %v1937 = vadd.f32 0.0, %v1936
        %v1938 = vpop.f32.mrb[0].mxu0
        %v1939 = vpop.f32.mrb[0].mxu0
        %1940 = vdwg.mxu0
        %1941 = vmatprep.subr.bf16.mxu0 %v1816
        %1942 = vmatpush1.bf16.msra.mxu0 %v1813
        %1943 = vmatprep.subr.bf16.mxu0 0
        %1944 = vmatpush1.bf16.msra.mxu0 0
        %1945 = vmatprep.subr.bf16.mxu0 0
        %1946 = vmatpush1.bf16.msra.mxu0 0
        %1947 = vmatprep.subr.bf16.mxu0 0
        %1948 = vmatpush1.bf16.msra.mxu0 0
        %1949 = vmatprep.subr.bf16.mxu0 0
        %1950 = vmatpush1.bf16.msra.mxu0 0
        %1951 = vmatprep.subr.bf16.mxu0 0
        %1952 = vmatpush1.bf16.msra.mxu0 0
        %1953 = vmatprep.subr.bf16.mxu0 0
        %1954 = vmatpush1.bf16.msra.mxu0 0
        %1955 = vmatprep.subr.bf16.mxu0 0
        %1956 = vmatpush1.bf16.msra.mxu0 0
        %1957 = vmatprep.subr.bf16.mxu0 0
        %1958 = vmatpush1.bf16.msra.mxu0 0
        %1959 = vmatprep.subr.bf16.mxu0 0
        %1960 = vmatpush1.bf16.msra.mxu0 0
        %1961 = vmatprep.subr.bf16.mxu0 0
        %1962 = vmatpush1.bf16.msra.mxu0 0
        %1963 = vmatprep.subr.bf16.mxu0 0
        %1964 = vmatpush1.bf16.msra.mxu0 0
        %1965 = vmatprep.subr.bf16.mxu0 0
        %1966 = vmatpush1.bf16.msra.mxu0 0
        %1967 = vmatprep.subr.bf16.mxu0 0
        %1968 = vmatpush1.bf16.msra.mxu0 0
        %1969 = vmatprep.subr.bf16.mxu0 0
        %1970 = vmatpush1.bf16.msra.mxu0 0
        %1971 = vmatprep.subr.bf16.mxu0 0
        %1972 = vmatpush1.bf16.msra.mxu0 0
        %1973 = vmatprep.mubr.bf16.mxu0 0
        %1974 = vmatmul.mubr.bf16.gmra.mrb[0].mxu0 %v1792
        %v1975 = vpop.f32.mrb[0].mxu0
        %v1976 = vadd.f32 0.0, %v1975
        %v1977 = vpop.f32.mrb[0].mxu0
        %v1978 = vadd.f32 0.0, %v1977
        %v1979 = vpop.f32.mrb[0].mxu0
        %v1980 = vpop.f32.mrb[0].mxu0
        %1981 = vdwg.mxu0
        %v1982 = vadd.f32 %v1701, %v1853
        %v1983 = vadd.f32 %v1702, %v1855
        %v1984 = vadd.f32 %v1703, %v1894
        %v1985 = vadd.f32 %v1704, %v1896
        %v1986 = vadd.f32 %v1705, %v1935
        %v1987 = vadd.f32 %v1706, %v1937
        %v1988 = vadd.f32 %v1707, %v1976
        %v1989 = vadd.f32 %v1708, %v1978
        %1990 = vrot.lane.b32.xlu0 %v366, 97
        %v1991 = vpop.permute.xlu0 %1990
        %1992 = vrot.lane.b32.xlu0 %v367, 97
        %v1993 = vpop.permute.xlu0 %1992
        %1994 = vrot.lane.b32.xlu0 %v368, 97
        %v1995 = vpop.permute.xlu0 %1994
        %1996 = vrot.lane.b32.xlu0 %v369, 97
        %v1997 = vpop.permute.xlu0 %1996
        %1998 = vrot.lane.b32.xlu0 %v370, 97
        %v1999 = vpop.permute.xlu0 %1998
        %2000 = vrot.lane.b32.xlu0 %v371, 97
        %v2001 = vpop.permute.xlu0 %2000
        %2002 = vrot.lane.b32.xlu0 %v372, 97
        %v2003 = vpop.permute.xlu0 %2002
        %2004 = vrot.lane.b32.xlu0 %v373, 97
        %v2005 = vpop.permute.xlu0 %2004
        %vm2006 = vcmp.lt.s32.totalorder %v400, 97
        %v2007 = vsel %vm2006, %v2003, %v2005
        %v2008 = vsel %vm2006, %v2001, %v2003
        %v2009 = vsel %vm2006, %v1999, %v2001
        %v2010 = vsel %vm2006, %v1997, %v1999
        %v2011 = vsel %vm2006, %v1995, %v1997
        %v2012 = vsel %vm2006, %v1993, %v1995
        %v2013 = vsel %vm2006, %v1991, %v1993
        %v2014 = vsel %vm2006, %v2005, %v1991
        %s2015 = scalar_lea.vmem %s1, 8
        %v2016 = vld [vmem:[%s2015] sm:$0xff]
        %v2017 = vmul.f32 %v2016, %v412
        %v2019 = vlaneseq
        %v2020 = vshrl.u32 %v2019, 7
        %v2021 = vsub.s32 0, %v2020
        %v2022 = vrot.slane %v2017, %v2021
        %v2023 = vlaneseq
        %v2024 = vshrl.u32 %v2023, 7
        %v2025 = vsub.s32 1, %v2024
        %v2026 = vrot.slane %v2017, %v2025
        %v2027 = vlaneseq
        %v2028 = vshrl.u32 %v2027, 7
        %v2029 = vsub.s32 2, %v2028
        %v2030 = vrot.slane %v2017, %v2029
        %v2031 = vlaneseq
        %v2032 = vshrl.u32 %v2031, 7
        %v2033 = vsub.s32 3, %v2032
        %v2034 = vrot.slane %v2017, %v2033
        %v2035 = vlaneseq
        %v2036 = vshrl.u32 %v2035, 7
        %v2037 = vsub.s32 4, %v2036
        %v2038 = vrot.slane %v2017, %v2037
        %v2039 = vlaneseq
        %v2040 = vshrl.u32 %v2039, 7
        %v2041 = vsub.s32 5, %v2040
        %v2042 = vrot.slane %v2017, %v2041
        %v2043 = vlaneseq
        %v2044 = vshrl.u32 %v2043, 7
        %v2045 = vsub.s32 6, %v2044
        %v2046 = vrot.slane %v2017, %v2045
        %v2047 = vlaneseq
        %v2048 = vshrl.u32 %v2047, 7
        %v2049 = vsub.s32 7, %v2048
        %v2050 = vrot.slane %v2017, %v2049
        %v2059 = vmul.f32 %v2013, %v2022
        %v2060 = vmul.f32 %v2012, %v2026
        %v2061 = vmul.f32 %v2011, %v2030
        %v2062 = vmul.f32 %v2010, %v2034
        %v2063 = vmul.f32 %v2009, %v2038
        %v2064 = vmul.f32 %v2008, %v2042
        %v2065 = vmul.f32 %v2007, %v2046
        %v2066 = vmul.f32 %v2014, %v2050
        %v2067 = vpack.c.bf16 %v2059, %v2059
        %v2068 = vpack.c.bf16 %v2060, %v2060
        %v2069 = vpack.c.bf16 %v2061, %v2061
        %v2070 = vpack.c.bf16 %v2062, %v2062
        %v2071 = vpack.c.bf16 %v2063, %v2063
        %v2072 = vpack.c.bf16 %v2064, %v2064
        %v2073 = vpack.c.bf16 %v2065, %v2065
        %v2074 = vpack.c.bf16 %v2066, %v2066
        %v2076 = vsel %vm553, %v380, 0
        %v2079 = vsel %vm557, %v2067, 0
        %v2082 = vsel %vm557, %v2068, 0
        %v2085 = vsel %vm557, %v2069, 0
        %v2088 = vsel %vm557, %v2070, 0
        %v2091 = vsel %vm557, %v2071, 0
        %v2094 = vsel %vm557, %v2072, 0
        %v2097 = vsel %vm557, %v2073, 0
        %v2100 = vsel %vm557, %v2074, 0
        %2102 = vmatprep.subr.bf16.mxu0 %v2082
        %2103 = vmatpush1.bf16.msra.mxu0 %v2079
        %2104 = vmatprep.subr.bf16.mxu0 0
        %2105 = vmatpush1.bf16.msra.mxu0 0
        %2106 = vmatprep.subr.bf16.mxu0 0
        %2107 = vmatpush1.bf16.msra.mxu0 0
        %2108 = vmatprep.subr.bf16.mxu0 0
        %2109 = vmatpush1.bf16.msra.mxu0 0
        %2110 = vmatprep.subr.bf16.mxu0 0
        %2111 = vmatpush1.bf16.msra.mxu0 0
        %2112 = vmatprep.subr.bf16.mxu0 0
        %2113 = vmatpush1.bf16.msra.mxu0 0
        %2114 = vmatprep.subr.bf16.mxu0 0
        %2115 = vmatpush1.bf16.msra.mxu0 0
        %2116 = vmatprep.subr.bf16.mxu0 0
        %2117 = vmatpush1.bf16.msra.mxu0 0
        %2118 = vmatprep.subr.bf16.mxu0 0
        %2119 = vmatpush1.bf16.msra.mxu0 0
        %2120 = vmatprep.subr.bf16.mxu0 0
        %2121 = vmatpush1.bf16.msra.mxu0 0
        %2122 = vmatprep.subr.bf16.mxu0 0
        %2123 = vmatpush1.bf16.msra.mxu0 0
        %2124 = vmatprep.subr.bf16.mxu0 0
        %2125 = vmatpush1.bf16.msra.mxu0 0
        %2126 = vmatprep.subr.bf16.mxu0 0
        %2127 = vmatpush1.bf16.msra.mxu0 0
        %2128 = vmatprep.subr.bf16.mxu0 0
        %2129 = vmatpush1.bf16.msra.mxu0 0
        %2130 = vmatprep.subr.bf16.mxu0 0
        %2131 = vmatpush1.bf16.msra.mxu0 0
        %2132 = vmatprep.subr.bf16.mxu0 0
        %2133 = vmatpush1.bf16.msra.mxu0 0
        %2134 = vmatprep.mubr.bf16.mxu0 0
        %2135 = vmatmul.mubr.bf16.gmra.mrb[0].mxu0 %v2076
        %v2136 = vpop.f32.mrb[0].mxu0
        %v2137 = vadd.f32 0.0, %v2136
        %v2138 = vpop.f32.mrb[0].mxu0
        %v2139 = vadd.f32 0.0, %v2138
        %v2140 = vpop.f32.mrb[0].mxu0
        %v2141 = vpop.f32.mrb[0].mxu0
        %2142 = vdwg.mxu0
        %2143 = vmatprep.subr.bf16.mxu0 %v2088
        %2144 = vmatpush1.bf16.msra.mxu0 %v2085
        %2145 = vmatprep.subr.bf16.mxu0 0
        %2146 = vmatpush1.bf16.msra.mxu0 0
        %2147 = vmatprep.subr.bf16.mxu0 0
        %2148 = vmatpush1.bf16.msra.mxu0 0
        %2149 = vmatprep.subr.bf16.mxu0 0
        %2150 = vmatpush1.bf16.msra.mxu0 0
        %2151 = vmatprep.subr.bf16.mxu0 0
        %2152 = vmatpush1.bf16.msra.mxu0 0
        %2153 = vmatprep.subr.bf16.mxu0 0
        %2154 = vmatpush1.bf16.msra.mxu0 0
        %2155 = vmatprep.subr.bf16.mxu0 0
        %2156 = vmatpush1.bf16.msra.mxu0 0
        %2157 = vmatprep.subr.bf16.mxu0 0
        %2158 = vmatpush1.bf16.msra.mxu0 0
        %2159 = vmatprep.subr.bf16.mxu0 0
        %2160 = vmatpush1.bf16.msra.mxu0 0
        %2161 = vmatprep.subr.bf16.mxu0 0
        %2162 = vmatpush1.bf16.msra.mxu0 0
        %2163 = vmatprep.subr.bf16.mxu0 0
        %2164 = vmatpush1.bf16.msra.mxu0 0
        %2165 = vmatprep.subr.bf16.mxu0 0
        %2166 = vmatpush1.bf16.msra.mxu0 0
        %2167 = vmatprep.subr.bf16.mxu0 0
        %2168 = vmatpush1.bf16.msra.mxu0 0
        %2169 = vmatprep.subr.bf16.mxu0 0
        %2170 = vmatpush1.bf16.msra.mxu0 0
        %2171 = vmatprep.subr.bf16.mxu0 0
        %2172 = vmatpush1.bf16.msra.mxu0 0
        %2173 = vmatprep.subr.bf16.mxu0 0
        %2174 = vmatpush1.bf16.msra.mxu0 0
        %2175 = vmatprep.mubr.bf16.mxu0 0
        %2176 = vmatmul.mubr.bf16.gmra.mrb[0].mxu0 %v2076
        %v2177 = vpop.f32.mrb[0].mxu0
        %v2178 = vadd.f32 0.0, %v2177
        %v2179 = vpop.f32.mrb[0].mxu0
        %v2180 = vadd.f32 0.0, %v2179
        %v2181 = vpop.f32.mrb[0].mxu0
        %v2182 = vpop.f32.mrb[0].mxu0
        %2183 = vdwg.mxu0
        %2184 = vmatprep.subr.bf16.mxu0 %v2094
        %2185 = vmatpush1.bf16.msra.mxu0 %v2091
        %2186 = vmatprep.subr.bf16.mxu0 0
        %2187 = vmatpush1.bf16.msra.mxu0 0
        %2188 = vmatprep.subr.bf16.mxu0 0
        %2189 = vmatpush1.bf16.msra.mxu0 0
        %2190 = vmatprep.subr.bf16.mxu0 0
        %2191 = vmatpush1.bf16.msra.mxu0 0
        %2192 = vmatprep.subr.bf16.mxu0 0
        %2193 = vmatpush1.bf16.msra.mxu0 0
        %2194 = vmatprep.subr.bf16.mxu0 0
        %2195 = vmatpush1.bf16.msra.mxu0 0
        %2196 = vmatprep.subr.bf16.mxu0 0
        %2197 = vmatpush1.bf16.msra.mxu0 0
        %2198 = vmatprep.subr.bf16.mxu0 0
        %2199 = vmatpush1.bf16.msra.mxu0 0
        %2200 = vmatprep.subr.bf16.mxu0 0
        %2201 = vmatpush1.bf16.msra.mxu0 0
        %2202 = vmatprep.subr.bf16.mxu0 0
        %2203 = vmatpush1.bf16.msra.mxu0 0
        %2204 = vmatprep.subr.bf16.mxu0 0
        %2205 = vmatpush1.bf16.msra.mxu0 0
        %2206 = vmatprep.subr.bf16.mxu0 0
        %2207 = vmatpush1.bf16.msra.mxu0 0
        %2208 = vmatprep.subr.bf16.mxu0 0
        %2209 = vmatpush1.bf16.msra.mxu0 0
        %2210 = vmatprep.subr.bf16.mxu0 0
        %2211 = vmatpush1.bf16.msra.mxu0 0
        %2212 = vmatprep.subr.bf16.mxu0 0
        %2213 = vmatpush1.bf16.msra.mxu0 0
        %2214 = vmatprep.subr.bf16.mxu0 0
        %2215 = vmatpush1.bf16.msra.mxu0 0
        %2216 = vmatprep.mubr.bf16.mxu0 0
        %2217 = vmatmul.mubr.bf16.gmra.mrb[0].mxu0 %v2076
        %v2218 = vpop.f32.mrb[0].mxu0
        %v2219 = vadd.f32 0.0, %v2218
        %v2220 = vpop.f32.mrb[0].mxu0
        %v2221 = vadd.f32 0.0, %v2220
        %v2222 = vpop.f32.mrb[0].mxu0
        %v2223 = vpop.f32.mrb[0].mxu0
        %2224 = vdwg.mxu0
        %2225 = vmatprep.subr.bf16.mxu0 %v2100
        %2226 = vmatpush1.bf16.msra.mxu0 %v2097
        %2227 = vmatprep.subr.bf16.mxu0 0
        %2228 = vmatpush1.bf16.msra.mxu0 0
        %2229 = vmatprep.subr.bf16.mxu0 0
        %2230 = vmatpush1.bf16.msra.mxu0 0
        %2231 = vmatprep.subr.bf16.mxu0 0
        %2232 = vmatpush1.bf16.msra.mxu0 0
        %2233 = vmatprep.subr.bf16.mxu0 0
        %2234 = vmatpush1.bf16.msra.mxu0 0
        %2235 = vmatprep.subr.bf16.mxu0 0
        %2236 = vmatpush1.bf16.msra.mxu0 0
        %2237 = vmatprep.subr.bf16.mxu0 0
        %2238 = vmatpush1.bf16.msra.mxu0 0
        %2239 = vmatprep.subr.bf16.mxu0 0
        %2240 = vmatpush1.bf16.msra.mxu0 0
        %2241 = vmatprep.subr.bf16.mxu0 0
        %2242 = vmatpush1.bf16.msra.mxu0 0
        %2243 = vmatprep.subr.bf16.mxu0 0
        %2244 = vmatpush1.bf16.msra.mxu0 0
        %2245 = vmatprep.subr.bf16.mxu0 0
        %2246 = vmatpush1.bf16.msra.mxu0 0
        %2247 = vmatprep.subr.bf16.mxu0 0
        %2248 = vmatpush1.bf16.msra.mxu0 0
        %2249 = vmatprep.subr.bf16.mxu0 0
        %2250 = vmatpush1.bf16.msra.mxu0 0
        %2251 = vmatprep.subr.bf16.mxu0 0
        %2252 = vmatpush1.bf16.msra.mxu0 0
        %2253 = vmatprep.subr.bf16.mxu0 0
        %2254 = vmatpush1.bf16.msra.mxu0 0
        %2255 = vmatprep.subr.bf16.mxu0 0
        %2256 = vmatpush1.bf16.msra.mxu0 0
        %2257 = vmatprep.mubr.bf16.mxu0 0
        %2258 = vmatmul.mubr.bf16.gmra.mrb[0].mxu0 %v2076
        %v2259 = vpop.f32.mrb[0].mxu0
        %v2260 = vadd.f32 0.0, %v2259
        %v2261 = vpop.f32.mrb[0].mxu0
        %v2262 = vadd.f32 0.0, %v2261
        %v2263 = vpop.f32.mrb[0].mxu0
        %v2264 = vpop.f32.mrb[0].mxu0
        %2265 = vdwg.mxu0
        %v2266 = vadd.f32 %v1982, %v2137
        %v2267 = vadd.f32 %v1983, %v2139
        %v2268 = vadd.f32 %v1984, %v2178
        %v2269 = vadd.f32 %v1985, %v2180
        %v2270 = vadd.f32 %v1986, %v2219
        %v2271 = vadd.f32 %v1987, %v2221
        %v2272 = vadd.f32 %v1988, %v2260
        %v2273 = vadd.f32 %v1989, %v2262
        %2274 = vrot.lane.b32.xlu0 %v366, 96
        %v2275 = vpop.permute.xlu0 %2274
        %2276 = vrot.lane.b32.xlu0 %v367, 96
        %v2277 = vpop.permute.xlu0 %2276
        %2278 = vrot.lane.b32.xlu0 %v368, 96
        %v2279 = vpop.permute.xlu0 %2278
        %2280 = vrot.lane.b32.xlu0 %v369, 96
        %v2281 = vpop.permute.xlu0 %2280
        %2282 = vrot.lane.b32.xlu0 %v370, 96
        %v2283 = vpop.permute.xlu0 %2282
        %2284 = vrot.lane.b32.xlu0 %v371, 96
        %v2285 = vpop.permute.xlu0 %2284
        %2286 = vrot.lane.b32.xlu0 %v372, 96
        %v2287 = vpop.permute.xlu0 %2286
        %2288 = vrot.lane.b32.xlu0 %v373, 96
        %v2289 = vpop.permute.xlu0 %2288
        %vm2290 = vcmp.lt.s32.totalorder %v400, 96
        %v2291 = vsel %vm2290, %v2287, %v2289
        %v2292 = vsel %vm2290, %v2285, %v2287
        %v2293 = vsel %vm2290, %v2283, %v2285
        %v2294 = vsel %vm2290, %v2281, %v2283
        %v2295 = vsel %vm2290, %v2279, %v2281
        %v2296 = vsel %vm2290, %v2277, %v2279
        %v2297 = vsel %vm2290, %v2275, %v2277
        %v2298 = vsel %vm2290, %v2289, %v2275
        %v2300 = vlaneseq
        %v2301 = vshrl.u32 %v2300, 7
        %v2302 = vsub.s32 0, %v2301
        %v2303 = vrot.slane %v2016, %v2302
        %v2304 = vlaneseq
        %v2305 = vshrl.u32 %v2304, 7
        %v2306 = vsub.s32 1, %v2305
        %v2307 = vrot.slane %v2016, %v2306
        %v2308 = vlaneseq
        %v2309 = vshrl.u32 %v2308, 7
        %v2310 = vsub.s32 2, %v2309
        %v2311 = vrot.slane %v2016, %v2310
        %v2312 = vlaneseq
        %v2313 = vshrl.u32 %v2312, 7
        %v2314 = vsub.s32 3, %v2313
        %v2315 = vrot.slane %v2016, %v2314
        %v2316 = vlaneseq
        %v2317 = vshrl.u32 %v2316, 7
        %v2318 = vsub.s32 4, %v2317
        %v2319 = vrot.slane %v2016, %v2318
        %v2320 = vlaneseq
        %v2321 = vshrl.u32 %v2320, 7
        %v2322 = vsub.s32 5, %v2321
        %v2323 = vrot.slane %v2016, %v2322
        %v2324 = vlaneseq
        %v2325 = vshrl.u32 %v2324, 7
        %v2326 = vsub.s32 6, %v2325
        %v2327 = vrot.slane %v2016, %v2326
        %v2328 = vlaneseq
        %v2329 = vshrl.u32 %v2328, 7
        %v2330 = vsub.s32 7, %v2329
        %v2331 = vrot.slane %v2016, %v2330
        %v2340 = vmul.f32 %v2297, %v2303
        %v2341 = vmul.f32 %v2296, %v2307
        %v2342 = vmul.f32 %v2295, %v2311
        %v2343 = vmul.f32 %v2294, %v2315
        %v2344 = vmul.f32 %v2293, %v2319
        %v2345 = vmul.f32 %v2292, %v2323
        %v2346 = vmul.f32 %v2291, %v2327
        %v2347 = vmul.f32 %v2298, %v2331
        %v2348 = vpack.c.bf16 %v2340, %v2340
        %v2349 = vpack.c.bf16 %v2341, %v2341
        %v2350 = vpack.c.bf16 %v2342, %v2342
        %v2351 = vpack.c.bf16 %v2343, %v2343
        %v2352 = vpack.c.bf16 %v2344, %v2344
        %v2353 = vpack.c.bf16 %v2345, %v2345
        %v2354 = vpack.c.bf16 %v2346, %v2346
        %v2355 = vpack.c.bf16 %v2347, %v2347
        %v2357 = vsel %vm553, %v381, 0
        %v2360 = vsel %vm557, %v2348, 0
        %v2363 = vsel %vm557, %v2349, 0
        %v2366 = vsel %vm557, %v2350, 0
        %v2369 = vsel %vm557, %v2351, 0
        %v2372 = vsel %vm557, %v2352, 0
        %v2375 = vsel %vm557, %v2353, 0
        %v2378 = vsel %vm557, %v2354, 0
        %v2381 = vsel %vm557, %v2355, 0
        %2383 = vmatprep.subr.bf16.mxu0 %v2363
        %2384 = vmatpush1.bf16.msra.mxu0 %v2360
        %2385 = vmatprep.subr.bf16.mxu0 0
        %2386 = vmatpush1.bf16.msra.mxu0 0
        %2387 = vmatprep.subr.bf16.mxu0 0
        %2388 = vmatpush1.bf16.msra.mxu0 0
        %2389 = vmatprep.subr.bf16.mxu0 0
        %2390 = vmatpush1.bf16.msra.mxu0 0
        %2391 = vmatprep.subr.bf16.mxu0 0
        %2392 = vmatpush1.bf16.msra.mxu0 0
        %2393 = vmatprep.subr.bf16.mxu0 0
        %2394 = vmatpush1.bf16.msra.mxu0 0
        %2395 = vmatprep.subr.bf16.mxu0 0
        %2396 = vmatpush1.bf16.msra.mxu0 0
        %2397 = vmatprep.subr.bf16.mxu0 0
        %2398 = vmatpush1.bf16.msra.mxu0 0
        %2399 = vmatprep.subr.bf16.mxu0 0
        %2400 = vmatpush1.bf16.msra.mxu0 0
        %2401 = vmatprep.subr.bf16.mxu0 0
        %2402 = vmatpush1.bf16.msra.mxu0 0
        %2403 = vmatprep.subr.bf16.mxu0 0
        %2404 = vmatpush1.bf16.msra.mxu0 0
        %2405 = vmatprep.subr.bf16.mxu0 0
        %2406 = vmatpush1.bf16.msra.mxu0 0
        %2407 = vmatprep.subr.bf16.mxu0 0
        %2408 = vmatpush1.bf16.msra.mxu0 0
        %2409 = vmatprep.subr.bf16.mxu0 0
        %2410 = vmatpush1.bf16.msra.mxu0 0
        %2411 = vmatprep.subr.bf16.mxu0 0
        %2412 = vmatpush1.bf16.msra.mxu0 0
        %2413 = vmatprep.subr.bf16.mxu0 0
        %2414 = vmatpush1.bf16.msra.mxu0 0
        %2415 = vmatprep.mubr.bf16.mxu0 0
        %2416 = vmatmul.mubr.bf16.gmra.mrb[0].mxu0 %v2357
        %v2417 = vpop.f32.mrb[0].mxu0
        %v2418 = vadd.f32 0.0, %v2417
        %v2419 = vpop.f32.mrb[0].mxu0
        %v2420 = vadd.f32 0.0, %v2419
        %v2421 = vpop.f32.mrb[0].mxu0
        %v2422 = vpop.f32.mrb[0].mxu0
        %2423 = vdwg.mxu0
        %2424 = vmatprep.subr.bf16.mxu0 %v2369
        %2425 = vmatpush1.bf16.msra.mxu0 %v2366
        %2426 = vmatprep.subr.bf16.mxu0 0
        %2427 = vmatpush1.bf16.msra.mxu0 0
        %2428 = vmatprep.subr.bf16.mxu0 0
        %2429 = vmatpush1.bf16.msra.mxu0 0
        %2430 = vmatprep.subr.bf16.mxu0 0
        %2431 = vmatpush1.bf16.msra.mxu0 0
        %2432 = vmatprep.subr.bf16.mxu0 0
        %2433 = vmatpush1.bf16.msra.mxu0 0
        %2434 = vmatprep.subr.bf16.mxu0 0
        %2435 = vmatpush1.bf16.msra.mxu0 0
        %2436 = vmatprep.subr.bf16.mxu0 0
        %2437 = vmatpush1.bf16.msra.mxu0 0
        %2438 = vmatprep.subr.bf16.mxu0 0
        %2439 = vmatpush1.bf16.msra.mxu0 0
        %2440 = vmatprep.subr.bf16.mxu0 0
        %2441 = vmatpush1.bf16.msra.mxu0 0
        %2442 = vmatprep.subr.bf16.mxu0 0
        %2443 = vmatpush1.bf16.msra.mxu0 0
        %2444 = vmatprep.subr.bf16.mxu0 0
        %2445 = vmatpush1.bf16.msra.mxu0 0
        %2446 = vmatprep.subr.bf16.mxu0 0
        %2447 = vmatpush1.bf16.msra.mxu0 0
        %2448 = vmatprep.subr.bf16.mxu0 0
        %2449 = vmatpush1.bf16.msra.mxu0 0
        %2450 = vmatprep.subr.bf16.mxu0 0
        %2451 = vmatpush1.bf16.msra.mxu0 0
        %2452 = vmatprep.subr.bf16.mxu0 0
        %2453 = vmatpush1.bf16.msra.mxu0 0
        %2454 = vmatprep.subr.bf16.mxu0 0
        %2455 = vmatpush1.bf16.msra.mxu0 0
        %2456 = vmatprep.mubr.bf16.mxu0 0
        %2457 = vmatmul.mubr.bf16.gmra.mrb[0].mxu0 %v2357
        %v2458 = vpop.f32.mrb[0].mxu0
        %v2459 = vadd.f32 0.0, %v2458
        %v2460 = vpop.f32.mrb[0].mxu0
        %v2461 = vadd.f32 0.0, %v2460
        %v2462 = vpop.f32.mrb[0].mxu0
        %v2463 = vpop.f32.mrb[0].mxu0
        %2464 = vdwg.mxu0
        %2465 = vmatprep.subr.bf16.mxu0 %v2375
        %2466 = vmatpush1.bf16.msra.mxu0 %v2372
        %2467 = vmatprep.subr.bf16.mxu0 0
        %2468 = vmatpush1.bf16.msra.mxu0 0
        %2469 = vmatprep.subr.bf16.mxu0 0
        %2470 = vmatpush1.bf16.msra.mxu0 0
        %2471 = vmatprep.subr.bf16.mxu0 0
        %2472 = vmatpush1.bf16.msra.mxu0 0
        %2473 = vmatprep.subr.bf16.mxu0 0
        %2474 = vmatpush1.bf16.msra.mxu0 0
        %2475 = vmatprep.subr.bf16.mxu0 0
        %2476 = vmatpush1.bf16.msra.mxu0 0
        %2477 = vmatprep.subr.bf16.mxu0 0
        %2478 = vmatpush1.bf16.msra.mxu0 0
        %2479 = vmatprep.subr.bf16.mxu0 0
        %2480 = vmatpush1.bf16.msra.mxu0 0
        %2481 = vmatprep.subr.bf16.mxu0 0
        %2482 = vmatpush1.bf16.msra.mxu0 0
        %2483 = vmatprep.subr.bf16.mxu0 0
        %2484 = vmatpush1.bf16.msra.mxu0 0
        %2485 = vmatprep.subr.bf16.mxu0 0
        %2486 = vmatpush1.bf16.msra.mxu0 0
        %2487 = vmatprep.subr.bf16.mxu0 0
        %2488 = vmatpush1.bf16.msra.mxu0 0
        %2489 = vmatprep.subr.bf16.mxu0 0
        %2490 = vmatpush1.bf16.msra.mxu0 0
        %2491 = vmatprep.subr.bf16.mxu0 0
        %2492 = vmatpush1.bf16.msra.mxu0 0
        %2493 = vmatprep.subr.bf16.mxu0 0
        %2494 = vmatpush1.bf16.msra.mxu0 0
        %2495 = vmatprep.subr.bf16.mxu0 0
        %2496 = vmatpush1.bf16.msra.mxu0 0
        %2497 = vmatprep.mubr.bf16.mxu0 0
        %2498 = vmatmul.mubr.bf16.gmra.mrb[0].mxu0 %v2357
        %v2499 = vpop.f32.mrb[0].mxu0
        %v2500 = vadd.f32 0.0, %v2499
        %v2501 = vpop.f32.mrb[0].mxu0
        %v2502 = vadd.f32 0.0, %v2501
        %v2503 = vpop.f32.mrb[0].mxu0
        %v2504 = vpop.f32.mrb[0].mxu0
        %2505 = vdwg.mxu0
        %2506 = vmatprep.subr.bf16.mxu0 %v2381
        %2507 = vmatpush1.bf16.msra.mxu0 %v2378
        %2508 = vmatprep.subr.bf16.mxu0 0
        %2509 = vmatpush1.bf16.msra.mxu0 0
        %2510 = vmatprep.subr.bf16.mxu0 0
        %2511 = vmatpush1.bf16.msra.mxu0 0
        %2512 = vmatprep.subr.bf16.mxu0 0
        %2513 = vmatpush1.bf16.msra.mxu0 0
        %2514 = vmatprep.subr.bf16.mxu0 0
        %2515 = vmatpush1.bf16.msra.mxu0 0
        %2516 = vmatprep.subr.bf16.mxu0 0
        %2517 = vmatpush1.bf16.msra.mxu0 0
        %2518 = vmatprep.subr.bf16.mxu0 0
        %2519 = vmatpush1.bf16.msra.mxu0 0
        %2520 = vmatprep.subr.bf16.mxu0 0
        %2521 = vmatpush1.bf16.msra.mxu0 0
        %2522 = vmatprep.subr.bf16.mxu0 0
        %2523 = vmatpush1.bf16.msra.mxu0 0
        %2524 = vmatprep.subr.bf16.mxu0 0
        %2525 = vmatpush1.bf16.msra.mxu0 0
        %2526 = vmatprep.subr.bf16.mxu0 0
        %2527 = vmatpush1.bf16.msra.mxu0 0
        %2528 = vmatprep.subr.bf16.mxu0 0
        %2529 = vmatpush1.bf16.msra.mxu0 0
        %2530 = vmatprep.subr.bf16.mxu0 0
        %2531 = vmatpush1.bf16.msra.mxu0 0
        %2532 = vmatprep.subr.bf16.mxu0 0
        %2533 = vmatpush1.bf16.msra.mxu0 0
        %2534 = vmatprep.subr.bf16.mxu0 0
        %2535 = vmatpush1.bf16.msra.mxu0 0
        %2536 = vmatprep.subr.bf16.mxu0 0
        %2537 = vmatpush1.bf16.msra.mxu0 0
        %2538 = vmatprep.mubr.bf16.mxu0 0
        %2539 = vmatmul.mubr.bf16.gmra.mrb[0].mxu0 %v2357
        %v2540 = vpop.f32.mrb[0].mxu0
        %v2541 = vadd.f32 0.0, %v2540
        %v2542 = vpop.f32.mrb[0].mxu0
        %v2543 = vadd.f32 0.0, %v2542
        %v2544 = vpop.f32.mrb[0].mxu0
        %v2545 = vpop.f32.mrb[0].mxu0
        %2546 = vdwg.mxu0
        %v2547 = vadd.f32 %v2266, %v2418
        %v2548 = vadd.f32 %v2267, %v2420
        %v2549 = vadd.f32 %v2268, %v2459
        %v2550 = vadd.f32 %v2269, %v2461
        %v2551 = vadd.f32 %v2270, %v2500
        %v2552 = vadd.f32 %v2271, %v2502
        %v2553 = vadd.f32 %v2272, %v2541
        %v2554 = vadd.f32 %v2273, %v2543
        %2555 = vrot.lane.b32.xlu0 %v366, 95
        %v2556 = vpop.permute.xlu0 %2555
        %2557 = vrot.lane.b32.xlu0 %v367, 95
        %v2558 = vpop.permute.xlu0 %2557
        %2559 = vrot.lane.b32.xlu0 %v368, 95
        %v2560 = vpop.permute.xlu0 %2559
        %2561 = vrot.lane.b32.xlu0 %v369, 95
        %v2562 = vpop.permute.xlu0 %2561
        %2563 = vrot.lane.b32.xlu0 %v370, 95
        %v2564 = vpop.permute.xlu0 %2563
        %2565 = vrot.lane.b32.xlu0 %v371, 95
        %v2566 = vpop.permute.xlu0 %2565
        %2567 = vrot.lane.b32.xlu0 %v372, 95
        %v2568 = vpop.permute.xlu0 %2567
        %2569 = vrot.lane.b32.xlu0 %v373, 95
        %v2570 = vpop.permute.xlu0 %2569
        %vm2571 = vcmp.lt.s32.totalorder %v400, 95
        %v2572 = vsel %vm2571, %v2568, %v2570
        %v2573 = vsel %vm2571, %v2566, %v2568
        %v2574 = vsel %vm2571, %v2564, %v2566
        %v2575 = vsel %vm2571, %v2562, %v2564
        %v2576 = vsel %vm2571, %v2560, %v2562
        %v2577 = vsel %vm2571, %v2558, %v2560
        %v2578 = vsel %vm2571, %v2556, %v2558
        %v2579 = vsel %vm2571, %v2570, %v2556
        %v2580 = vmul.f32 %v2016, %v963
        %v2582 = vlaneseq
        %v2583 = vshrl.u32 %v2582, 7
        %v2584 = vsub.s32 0, %v2583
        %v2585 = vrot.slane %v2580, %v2584
        %v2586 = vlaneseq
        %v2587 = vshrl.u32 %v2586, 7
        %v2588 = vsub.s32 1, %v2587
        %v2589 = vrot.slane %v2580, %v2588
        %v2590 = vlaneseq
        %v2591 = vshrl.u32 %v2590, 7
        %v2592 = vsub.s32 2, %v2591
        %v2593 = vrot.slane %v2580, %v2592
        %v2594 = vlaneseq
        %v2595 = vshrl.u32 %v2594, 7
        %v2596 = vsub.s32 3, %v2595
        %v2597 = vrot.slane %v2580, %v2596
        %v2598 = vlaneseq
        %v2599 = vshrl.u32 %v2598, 7
        %v2600 = vsub.s32 4, %v2599
        %v2601 = vrot.slane %v2580, %v2600
        %v2602 = vlaneseq
        %v2603 = vshrl.u32 %v2602, 7
        %v2604 = vsub.s32 5, %v2603
        %v2605 = vrot.slane %v2580, %v2604
        %v2606 = vlaneseq
        %v2607 = vshrl.u32 %v2606, 7
        %v2608 = vsub.s32 6, %v2607
        %v2609 = vrot.slane %v2580, %v2608
        %v2610 = vlaneseq
        %v2611 = vshrl.u32 %v2610, 7
        %v2612 = vsub.s32 7, %v2611
        %v2613 = vrot.slane %v2580, %v2612
        %v2622 = vmul.f32 %v2578, %v2585
        %v2623 = vmul.f32 %v2577, %v2589
        %v2624 = vmul.f32 %v2576, %v2593
        %v2625 = vmul.f32 %v2575, %v2597
        %v2626 = vmul.f32 %v2574, %v2601
        %v2627 = vmul.f32 %v2573, %v2605
        %v2628 = vmul.f32 %v2572, %v2609
        %v2629 = vmul.f32 %v2579, %v2613
        %v2630 = vpack.c.bf16 %v2622, %v2622
        %v2631 = vpack.c.bf16 %v2623, %v2623
        %v2632 = vpack.c.bf16 %v2624, %v2624
        %v2633 = vpack.c.bf16 %v2625, %v2625
        %v2634 = vpack.c.bf16 %v2626, %v2626
        %v2635 = vpack.c.bf16 %v2627, %v2627
        %v2636 = vpack.c.bf16 %v2628, %v2628
        %v2637 = vpack.c.bf16 %v2629, %v2629
        %v2639 = vsel %vm553, %v382, 0
        %v2642 = vsel %vm557, %v2630, 0
        %v2645 = vsel %vm557, %v2631, 0
        %v2648 = vsel %vm557, %v2632, 0
        %v2651 = vsel %vm557, %v2633, 0
        %v2654 = vsel %vm557, %v2634, 0
        %v2657 = vsel %vm557, %v2635, 0
        %v2660 = vsel %vm557, %v2636, 0
        %v2663 = vsel %vm557, %v2637, 0
        %2665 = vmatprep.subr.bf16.mxu0 %v2645
        %2666 = vmatpush1.bf16.msra.mxu0 %v2642
        %2667 = vmatprep.subr.bf16.mxu0 0
        %2668 = vmatpush1.bf16.msra.mxu0 0
        %2669 = vmatprep.subr.bf16.mxu0 0
        %2670 = vmatpush1.bf16.msra.mxu0 0
        %2671 = vmatprep.subr.bf16.mxu0 0
        %2672 = vmatpush1.bf16.msra.mxu0 0
        %2673 = vmatprep.subr.bf16.mxu0 0
        %2674 = vmatpush1.bf16.msra.mxu0 0
        %2675 = vmatprep.subr.bf16.mxu0 0
        %2676 = vmatpush1.bf16.msra.mxu0 0
        %2677 = vmatprep.subr.bf16.mxu0 0
        %2678 = vmatpush1.bf16.msra.mxu0 0
        %2679 = vmatprep.subr.bf16.mxu0 0
        %2680 = vmatpush1.bf16.msra.mxu0 0
        %2681 = vmatprep.subr.bf16.mxu0 0
        %2682 = vmatpush1.bf16.msra.mxu0 0
        %2683 = vmatprep.subr.bf16.mxu0 0
        %2684 = vmatpush1.bf16.msra.mxu0 0
        %2685 = vmatprep.subr.bf16.mxu0 0
        %2686 = vmatpush1.bf16.msra.mxu0 0
        %2687 = vmatprep.subr.bf16.mxu0 0
        %2688 = vmatpush1.bf16.msra.mxu0 0
        %2689 = vmatprep.subr.bf16.mxu0 0
        %2690 = vmatpush1.bf16.msra.mxu0 0
        %2691 = vmatprep.subr.bf16.mxu0 0
        %2692 = vmatpush1.bf16.msra.mxu0 0
        %2693 = vmatprep.subr.bf16.mxu0 0
        %2694 = vmatpush1.bf16.msra.mxu0 0
        %2695 = vmatprep.subr.bf16.mxu0 0
        %2696 = vmatpush1.bf16.msra.mxu0 0
        %2697 = vmatprep.mubr.bf16.mxu0 0
        %2698 = vmatmul.mubr.bf16.gmra.mrb[0].mxu0 %v2639
        %v2699 = vpop.f32.mrb[0].mxu0
        %v2700 = vadd.f32 0.0, %v2699
        %v2701 = vpop.f32.mrb[0].mxu0
        %v2702 = vadd.f32 0.0, %v2701
        %v2703 = vpop.f32.mrb[0].mxu0
        %v2704 = vpop.f32.mrb[0].mxu0
        %2705 = vdwg.mxu0
        %2706 = vmatprep.subr.bf16.mxu0 %v2651
        %2707 = vmatpush1.bf16.msra.mxu0 %v2648
        %2708 = vmatprep.subr.bf16.mxu0 0
        %2709 = vmatpush1.bf16.msra.mxu0 0
        %2710 = vmatprep.subr.bf16.mxu0 0
        %2711 = vmatpush1.bf16.msra.mxu0 0
        %2712 = vmatprep.subr.bf16.mxu0 0
        %2713 = vmatpush1.bf16.msra.mxu0 0
        %2714 = vmatprep.subr.bf16.mxu0 0
        %2715 = vmatpush1.bf16.msra.mxu0 0
        %2716 = vmatprep.subr.bf16.mxu0 0
        %2717 = vmatpush1.bf16.msra.mxu0 0
        %2718 = vmatprep.subr.bf16.mxu0 0
        %2719 = vmatpush1.bf16.msra.mxu0 0
        %2720 = vmatprep.subr.bf16.mxu0 0
        %2721 = vmatpush1.bf16.msra.mxu0 0
        %2722 = vmatprep.subr.bf16.mxu0 0
        %2723 = vmatpush1.bf16.msra.mxu0 0
        %2724 = vmatprep.subr.bf16.mxu0 0
        %2725 = vmatpush1.bf16.msra.mxu0 0
        %2726 = vmatprep.subr.bf16.mxu0 0
        %2727 = vmatpush1.bf16.msra.mxu0 0
        %2728 = vmatprep.subr.bf16.mxu0 0
        %2729 = vmatpush1.bf16.msra.mxu0 0
        %2730 = vmatprep.subr.bf16.mxu0 0
        %2731 = vmatpush1.bf16.msra.mxu0 0
        %2732 = vmatprep.subr.bf16.mxu0 0
        %2733 = vmatpush1.bf16.msra.mxu0 0
        %2734 = vmatprep.subr.bf16.mxu0 0
        %2735 = vmatpush1.bf16.msra.mxu0 0
        %2736 = vmatprep.subr.bf16.mxu0 0
        %2737 = vmatpush1.bf16.msra.mxu0 0
        %2738 = vmatprep.mubr.bf16.mxu0 0
        %2739 = vmatmul.mubr.bf16.gmra.mrb[0].mxu0 %v2639
        %v2740 = vpop.f32.mrb[0].mxu0
        %v2741 = vadd.f32 0.0, %v2740
        %v2742 = vpop.f32.mrb[0].mxu0
        %v2743 = vadd.f32 0.0, %v2742
        %v2744 = vpop.f32.mrb[0].mxu0
        %v2745 = vpop.f32.mrb[0].mxu0
        %2746 = vdwg.mxu0
        %2747 = vmatprep.subr.bf16.mxu0 %v2657
        %2748 = vmatpush1.bf16.msra.mxu0 %v2654
        %2749 = vmatprep.subr.bf16.mxu0 0
        %2750 = vmatpush1.bf16.msra.mxu0 0
        %2751 = vmatprep.subr.bf16.mxu0 0
        %2752 = vmatpush1.bf16.msra.mxu0 0
        %2753 = vmatprep.subr.bf16.mxu0 0
        %2754 = vmatpush1.bf16.msra.mxu0 0
        %2755 = vmatprep.subr.bf16.mxu0 0
        %2756 = vmatpush1.bf16.msra.mxu0 0
        %2757 = vmatprep.subr.bf16.mxu0 0
        %2758 = vmatpush1.bf16.msra.mxu0 0
        %2759 = vmatprep.subr.bf16.mxu0 0
        %2760 = vmatpush1.bf16.msra.mxu0 0
        %2761 = vmatprep.subr.bf16.mxu0 0
        %2762 = vmatpush1.bf16.msra.mxu0 0
        %2763 = vmatprep.subr.bf16.mxu0 0
        %2764 = vmatpush1.bf16.msra.mxu0 0
        %2765 = vmatprep.subr.bf16.mxu0 0
        %2766 = vmatpush1.bf16.msra.mxu0 0
        %2767 = vmatprep.subr.bf16.mxu0 0
        %2768 = vmatpush1.bf16.msra.mxu0 0
        %2769 = vmatprep.subr.bf16.mxu0 0
        %2770 = vmatpush1.bf16.msra.mxu0 0
        %2771 = vmatprep.subr.bf16.mxu0 0
        %2772 = vmatpush1.bf16.msra.mxu0 0
        %2773 = vmatprep.subr.bf16.mxu0 0
        %2774 = vmatpush1.bf16.msra.mxu0 0
        %2775 = vmatprep.subr.bf16.mxu0 0
        %2776 = vmatpush1.bf16.msra.mxu0 0
        %2777 = vmatprep.subr.bf16.mxu0 0
        %2778 = vmatpush1.bf16.msra.mxu0 0
        %2779 = vmatprep.mubr.bf16.mxu0 0
        %2780 = vmatmul.mubr.bf16.gmra.mrb[0].mxu0 %v2639
        %v2781 = vpop.f32.mrb[0].mxu0
        %v2782 = vadd.f32 0.0, %v2781
        %v2783 = vpop.f32.mrb[0].mxu0
        %v2784 = vadd.f32 0.0, %v2783
        %v2785 = vpop.f32.mrb[0].mxu0
        %v2786 = vpop.f32.mrb[0].mxu0
        %2787 = vdwg.mxu0
        %2788 = vmatprep.subr.bf16.mxu0 %v2663
        %2789 = vmatpush1.bf16.msra.mxu0 %v2660
        %2790 = vmatprep.subr.bf16.mxu0 0
        %2791 = vmatpush1.bf16.msra.mxu0 0
        %2792 = vmatprep.subr.bf16.mxu0 0
        %2793 = vmatpush1.bf16.msra.mxu0 0
        %2794 = vmatprep.subr.bf16.mxu0 0
        %2795 = vmatpush1.bf16.msra.mxu0 0
        %2796 = vmatprep.subr.bf16.mxu0 0
        %2797 = vmatpush1.bf16.msra.mxu0 0
        %2798 = vmatprep.subr.bf16.mxu0 0
        %2799 = vmatpush1.bf16.msra.mxu0 0
        %2800 = vmatprep.subr.bf16.mxu0 0
        %2801 = vmatpush1.bf16.msra.mxu0 0
        %2802 = vmatprep.subr.bf16.mxu0 0
        %2803 = vmatpush1.bf16.msra.mxu0 0
        %2804 = vmatprep.subr.bf16.mxu0 0
        %2805 = vmatpush1.bf16.msra.mxu0 0
        %2806 = vmatprep.subr.bf16.mxu0 0
        %2807 = vmatpush1.bf16.msra.mxu0 0
        %2808 = vmatprep.subr.bf16.mxu0 0
        %2809 = vmatpush1.bf16.msra.mxu0 0
        %2810 = vmatprep.subr.bf16.mxu0 0
        %2811 = vmatpush1.bf16.msra.mxu0 0
        %2812 = vmatprep.subr.bf16.mxu0 0
        %2813 = vmatpush1.bf16.msra.mxu0 0
        %2814 = vmatprep.subr.bf16.mxu0 0
        %2815 = vmatpush1.bf16.msra.mxu0 0
        %2816 = vmatprep.subr.bf16.mxu0 0
        %2817 = vmatpush1.bf16.msra.mxu0 0
        %2818 = vmatprep.subr.bf16.mxu0 0
        %2819 = vmatpush1.bf16.msra.mxu0 0
        %2820 = vmatprep.mubr.bf16.mxu0 0
        %2821 = vmatmul.mubr.bf16.gmra.mrb[0].mxu0 %v2639
        %v2822 = vpop.f32.mrb[0].mxu0
        %v2823 = vadd.f32 0.0, %v2822
        %v2824 = vpop.f32.mrb[0].mxu0
        %v2825 = vadd.f32 0.0, %v2824
        %v2826 = vpop.f32.mrb[0].mxu0
        %v2827 = vpop.f32.mrb[0].mxu0
        %2828 = vdwg.mxu0
        %v2829 = vadd.f32 %v2547, %v2700
        %v2830 = vadd.f32 %v2548, %v2702
        %v2831 = vadd.f32 %v2549, %v2741
        %v2832 = vadd.f32 %v2550, %v2743
        %v2833 = vadd.f32 %v2551, %v2782
        %v2834 = vadd.f32 %v2552, %v2784
        %v2835 = vadd.f32 %v2553, %v2823
        %v2836 = vadd.f32 %v2554, %v2825
        %v2837 = vld [vmem:[%s5] sm:$0xff]
        %2839 = vset.pattern.permute.xlu0 0
        %2840 = vperm.xlu0 %2839, %v2837
        %v2841 = vpop.permute.xlu0 %2840
        %v2843 = vadd.f32 %v2829, %v2841
        %v2844 = vadd.f32 %v2830, %v2841
        %v2845 = vadd.f32 %v2831, %v2841
        %v2846 = vadd.f32 %v2832, %v2841
        %v2847 = vadd.f32 %v2833, %v2841
        %v2848 = vadd.f32 %v2834, %v2841
        %v2849 = vadd.f32 %v2835, %v2841
        %v2850 = vadd.f32 %v2836, %v2841
        %v2851 = vadd.f32 %v2843, %v2844
        %v2852 = vadd.f32 %v2851, %v2845
        %v2853 = vadd.f32 %v2852, %v2846
        %v2854 = vadd.f32 %v2853, %v2847
        %v2855 = vadd.f32 %v2854, %v2848
        %v2856 = vadd.f32 %v2855, %v2849
        %v2857 = vadd.f32 %v2856, %v2850
        %2858 = vadd.xlane.f32.xlu0 %v2857
        %v2859 = vpop.xlane.xlu0 %2858
        %vm2860 = vcmask 7168
        %2861 = vst.msk [vmem:[%s320] sm:$0xff] %vm2860, %v2859
        %v2862 = vmul.f32 %v2843, %v2843
        %v2863 = vmul.f32 %v2844, %v2844
        %v2864 = vmul.f32 %v2845, %v2845
        %v2865 = vmul.f32 %v2846, %v2846
        %v2866 = vmul.f32 %v2847, %v2847
        %v2867 = vmul.f32 %v2848, %v2848
        %v2868 = vmul.f32 %v2849, %v2849
        %v2869 = vmul.f32 %v2850, %v2850
        %v2870 = vadd.f32 %v2862, %v2863
        %v2871 = vadd.f32 %v2870, %v2864
        %v2872 = vadd.f32 %v2871, %v2865
        %v2873 = vadd.f32 %v2872, %v2866
        %v2874 = vadd.f32 %v2873, %v2867
        %v2875 = vadd.f32 %v2874, %v2868
        %v2876 = vadd.f32 %v2875, %v2869
        %2877 = vadd.xlane.f32.xlu0 %v2876
        %v2878 = vpop.xlane.xlu0 %2877
        %2879 = vst.msk [vmem:[%s324] sm:$0xff] %vm2860, %v2878
        %v2880 = vpack.c.bf16 %v2843, %v2843
        %v2881 = vpack.c.bf16 %v2844, %v2844
        %v2882 = vpack.c.bf16 %v2845, %v2845
        %v2883 = vpack.c.bf16 %v2846, %v2846
        %v2884 = vpack.c.bf16 %v2847, %v2847
        %v2885 = vpack.c.bf16 %v2848, %v2848
        %v2886 = vpack.c.bf16 %v2849, %v2849
        %v2887 = vpack.c.bf16 %v2850, %v2850
        %v2896 = vunpack.c.l.b16 %v2880
        %v2897 = vunpack.c.l.b16 %v2881
        %v2898 = vunpack.c.l.b16 %v2882
        %v2899 = vunpack.c.l.b16 %v2883
        %v2900 = vunpack.c.l.b16 %v2884
        %v2901 = vunpack.c.l.b16 %v2885
        %v2902 = vunpack.c.l.b16 %v2886
        %v2903 = vunpack.c.l.b16 %v2887
        %v2904 = vpack.c.b16 %v2897, %v2896
        %v2905 = vpack.c.b16 %v2899, %v2898
        %v2906 = vpack.c.b16 %v2901, %v2900
        %v2907 = vpack.c.b16 %v2903, %v2902
        %2912 = vst [vmem:[%s299] sm:$0xff] %v2904
        %2913 = vst [vmem:[%s299 + $0x8] sm:$0xff] %v2905
        %2914 = vst [vmem:[%s299 + $0x10] sm:$0xff] %v2906
        %2915 = vst [vmem:[%s299 + $0x18] sm:$0xff] %v2907
        %s2916 = sand.u32 %s162, 1
        %s2917 = scalar_lea.sflag [#allocation3], %s2916
        %s2918 = sand.u32 %s162, 1
        %s2919 = smul.addr %s2918, 32
        %s2920 = scalar_lea.vmem [#allocation2], %s2919
        %p2921 = scmp.lt.s32.totalorder %s23, 1
        %s2922 = scalar_select %p2921, %s23, 1
        %s2923 = smul.addr %s2922, 8
        %s2924 = scalar_lea.vmem %s7, %s2923
        %p2925 = scmp.lt.s32.totalorder %s23, 1
        %s2926 = scalar_select %p2925, %s23, 1
        %s2927 = smul.addr %s2926, 8
        %s2928 = scalar_lea.vmem %s8, %s2927
        // Predicated region
        $region45: #{tpu_custom_call.1} parent=43 // pred_check
          %p2929 = pneg %p172
        $region46: #{tpu_custom_call.1} parent=43 // pred_check_branch
          %2931 = sbr.rel (%p2929) target = $region48
        $region47: #{tpu_custom_call.1} parent=43 // pred_region
          %s2933 = ssub.s32 512, 512
          %2934 = vsyncadd %s2917, %s2933
          %s2935 = smul.addr %s23, 8
          %s2936 = smul.addr %s2935, 64
          %s2937 = scalar_lea.hbm %s6, %s2936
          %s2939 = sshll.u32 %s2920, 4
          %s2940 = int_to_ptr.vmem [resolvable:$true] %s2939
          %2942 = dma.vmem_to_hbm [thread:$0]  %s2940, 512, %s2937, %s2917
        $region48: #{tpu_custom_call.1} parent=43 // pred_fallthru
          _
        // Predicated region
        $region49: #{tpu_custom_call.1} parent=43 // pred_check
          %p2943 = pneg %p198
        $region50: #{tpu_custom_call.1} parent=43 // pred_check_branch
          %2945 = sbr.rel (%p2943) target = $region52
        $region51: #{tpu_custom_call.1} parent=43 // pred_region
          _
        $region52: #{tpu_custom_call.1} parent=43 // pred_fallthru
          _
        // Predicated region
        $region53: #{tpu_custom_call.1} parent=43 // pred_check
          %p2946 = pneg %p224
        $region54: #{tpu_custom_call.1} parent=43 // pred_check_branch
          %2948 = sbr.rel (%p2946) target = $region56
        $region55: #{tpu_custom_call.1} parent=43 // pred_region
          _
        $region56: #{tpu_custom_call.1} parent=43 // pred_fallthru
          _
      $region44: #{tpu_custom_call.1} parent=5 // pred_fallthru
        _
      %p2949 = scmp.le.s32.totalorder 2, %s18
      // Predicated region
      $region57: #{tpu_custom_call.1} parent=5 // pred_check
        %p2950 = pneg %p2949
      $region58: #{tpu_custom_call.1} parent=5 // pred_check_branch
        %2952 = sbr.rel (%p2950) target = $region60
      $region59: #{tpu_custom_call.1} parent=5 // pred_region
        %s2953 = ssub.s32 %s18, 2
        // Predicated region
        $region61: #{tpu_custom_call.1} parent=59 // pred_check
          %p2954 = pneg %p178
        $region62: #{tpu_custom_call.1} parent=59 // pred_check_branch
          %2956 = sbr.rel (%p2954) target = $region64
        $region63: #{tpu_custom_call.1} parent=59 // pred_region
          %s2957 = sand.u32 %s163, 1
          %s2958 = scalar_lea.sflag [#allocation3], %s2957
          %s2959 = sand.u32 %s163, 1
          %s2960 = smul.addr %s2959, 32
          %s2961 = scalar_lea.vmem [#allocation2], %s2960
          %2962 = dma.done %s2958, 512
        $region64: #{tpu_custom_call.1} parent=59 // pred_fallthru
          _
        // Predicated region
        $region65: #{tpu_custom_call.1} parent=59 // pred_check
          %p2963 = pneg %p204
        $region66: #{tpu_custom_call.1} parent=59 // pred_check_branch
          %2965 = sbr.rel (%p2963) target = $region68
        $region67: #{tpu_custom_call.1} parent=59 // pred_region
          %p2966 = scmp.lt.s32.totalorder %s24, 1
          %s2967 = scalar_select %p2966, %s24, 1
          %s2968 = smul.addr %s2967, 8
          %s2969 = scalar_lea.vmem %s7, %s2968
        $region68: #{tpu_custom_call.1} parent=59 // pred_fallthru
          _
        // Predicated region
        $region69: #{tpu_custom_call.1} parent=59 // pred_check
          %p2970 = pneg %p230
        $region70: #{tpu_custom_call.1} parent=59 // pred_check_branch
          %2972 = sbr.rel (%p2970) target = $region72
        $region71: #{tpu_custom_call.1} parent=59 // pred_region
          %p2973 = scmp.lt.s32.totalorder %s24, 1
          %s2974 = scalar_select %p2973, %s24, 1
          %s2975 = smul.addr %s2974, 8
          %s2976 = scalar_lea.vmem %s8, %s2975
        $region72: #{tpu_custom_call.1} parent=59 // pred_fallthru
          _
      $region60: #{tpu_custom_call.1} parent=5 // pred_fallthru
        _
    $region6: #{tpu_custom_call.1} parent=1 // loop_footer
      %s22 = sadd.s32 1, %s18
    $region7: #{tpu_custom_call.1} parent=1 // loop_footer_branch
      %17 = sbr.rel target = $region3
    $region8: #{tpu_custom_call.1} parent=1 // loop_exit
      _
    %2977 = vsyncpa [#allocation3], 1
    %s2978 = scalar_lea.sflag [#allocation3], 1
    %2979 = vsyncpa %s2978, 1

</llo_original>
